<compile_context>
chip_gen: v7x
topology: tpu7x:2x2x1
jax: 0.10.0
libtpu: 0.0.40
codegen_flags: <defaults>
</compile_context>

<pallas_src>
import functools
import numpy as np
import jax
import jax.numpy as jnp
from jax.experimental import pallas as pl
from jax.experimental.pallas import tpu as pltpu

# ---- scaled-down sizes (real defaults: HIDDEN=300, PROT_IN=1280) -------------
B = 2          # batch (number of protein-ligand pairs)
A = 8          # atoms per molecule (padded)
R = 16         # residues per protein (padded)
PROT_IN = 128  # per-residue input feature dim (ESM dim 1280 in the real model)
HIDDEN = 32    # args.hidden_size (== CMPNN atom hidden == cross-attn embed dim)
NUM_HEADS = 4  # args.num_heads
FFN_H = 32     # ffn hidden size
OUT = 1        # single regression/classification task

# ---- TPU lane-dense padded sizes ----------------------------------------------
HP = 128                   # padded hidden (plain layout: real features in cols [:HIDDEN])
HD = HIDDEN // NUM_HEADS   # true per-head dim (attention scale uses this)
HDP = 128                  # per-head dim padded to a full lane tile (128)
HPH = NUM_HEADS * HDP      # head-major padded q/k/v width
FFN_HP = 128               # padded FFN hidden
OUT_P = 128                # padded output lane dim (sliced back to OUT=1 in wrapper)


def _full_spec(shape):
    nd = len(shape)
    return pl.BlockSpec(shape, lambda i, _nd=nd: (0,) * _nd)


# ----------------------------- fused kernel -----------------------------------
def ggap_fused_kernel(prot_x_ref, atom_ref, mol_ref,
                      pw_ref, pb_ref,
                      wq_ref, bq_ref, wk_ref, bk_ref, wv_ref, bv_ref,
                      wo_ref, bo_ref,
                      w1m_ref, w1g_ref, w1c_ref, b1_ref, w2_ref, b2_ref,
                      out_ref, graph_ref, cmb_ref,
                      *, num_heads, head_dim):
    Bb, Rr, Dp = prot_x_ref.shape
    _, Aa, HPi = atom_ref.shape
    HPh = wq_ref.shape[1]
    hdp = HPh // num_heads

    # --- 1) protein encoder: single flattened MXU matmul + mean pool ----------
    px = prot_x_ref[...].reshape(Bb * Rr, Dp)
    node = jnp.dot(px, pw_ref[...], preferred_element_type=jnp.float32) + pb_ref[...]
    graph = jnp.sum(node.reshape(Bb, Rr, HPi), axis=1) * (1.0 / Rr)
    graph_ref[...] = graph

    # --- 2) multi-head cross attention (atoms attend to residues) + mean pool -
    atomf = atom_ref[...].reshape(Bb * Aa, HPi)
    q = (jnp.dot(atomf, wq_ref[...], preferred_element_type=jnp.float32)
         + bq_ref[...]).reshape(Bb, Aa, HPh)
    k = (jnp.dot(node, wk_ref[...], preferred_element_type=jnp.float32)
         + bk_ref[...]).reshape(Bb, Rr, HPh)
    v = (jnp.dot(node, wv_ref[...], preferred_element_type=jnp.float32)
         + bv_ref[...]).reshape(Bb, Rr, HPh)

    scale = 1.0 / float(np.sqrt(head_dim))      # scale uses the true per-head dim
    acc = jnp.zeros((Bb * Aa, HPi), jnp.float32)
    for h in range(num_heads):                  # static unrolled loop, 128-aligned slices
        lo = h * hdp
        qh = q[:, :, lo:lo + hdp]               # [B, A, 128]
        kh = k[:, :, lo:lo + hdp]               # [B, R, 128]
        vh = v[:, :, lo:lo + hdp]               # [B, R, 128]
        s = jnp.einsum('bad,brd->bar', qh, kh,
                       preferred_element_type=jnp.float32) * scale
        s = s - jnp.max(s, axis=-1, keepdims=True)
        p = jnp.exp(s)                          # EUP
        p = p * pl.reciprocal(jnp.sum(p, axis=-1, keepdims=True), approx=True)
        ch = jnp.einsum('bar,brd->bad', p, vh,
                        preferred_element_type=jnp.float32)
        # fold the output projection per head (MXU K-accumulation; no lane concat)
        acc = acc + jnp.dot(ch.reshape(Bb * Aa, hdp), wo_ref[pl.ds(lo, hdp), :],
                            preferred_element_type=jnp.float32)
    cmb = jnp.sum(acc.reshape(Bb, Aa, HPi), axis=1) * (1.0 / Aa) + bo_ref[...]
    cmb_ref[...] = cmb

    # --- 3) FFN with the [mol, graph, cmb] concat fused into split w1 chunks ---
    h1 = (jnp.dot(mol_ref[...], w1m_ref[...], preferred_element_type=jnp.float32)
          + jnp.dot(graph, w1g_ref[...], preferred_element_type=jnp.float32)
          + jnp.dot(cmb, w1c_ref[...], preferred_element_type=jnp.float32)
          + b1_ref[...])
    h1 = jnp.maximum(h1, 0.0)
    out_ref[...] = (jnp.dot(h1, w2_ref[...], preferred_element_type=jnp.float32)
                    + b2_ref[...])


# ----------------------------- padding helpers --------------------------------
def _pad2(w, rows, cols):
    return jnp.pad(w, ((0, rows - w.shape[0]), (0, cols - w.shape[1])))


def _pad_row_vec(b, cols):
    b = b.reshape(1, -1)
    return jnp.pad(b, ((0, 0), (0, cols - b.shape[1])))


def _pad_qkv_weight(w, nh, hd, hdp, rows_p):
    # [Din, nh*hd] -> [rows_p, nh*hdp]: head-major padded output columns (zeros).
    din = w.shape[0]
    w = w.reshape(din, nh, hd)
    w = jnp.pad(w, ((0, rows_p - din), (0, 0), (0, hdp - hd)))
    return w.reshape(rows_p, nh * hdp)


def _pad_qkv_bias(b, nh, hd, hdp):
    b = b.reshape(nh, hd)
    b = jnp.pad(b, ((0, 0), (0, hdp - hd)))
    return b.reshape(1, nh * hdp)


def _pad_out_weight(w, nh, hd, hdp, cols_p):
    # [nh*hd, Dout] -> [nh*hdp, cols_p]: head-major padded input rows (zeros).
    dout = w.shape[1]
    w = w.reshape(nh, hd, dout)
    w = jnp.pad(w, ((0, 0), (0, hdp - hd), (0, cols_p - dout)))
    return w.reshape(nh * hdp, cols_p)


def _pad_params(params):
    h = HIDDEN
    p = {}
    p['pw'] = _pad2(params['prot_w'], PROT_IN, HP)
    p['pb'] = _pad_row_vec(params['prot_b'], HP)
    p['wq'] = _pad_qkv_weight(params['wq'], NUM_HEADS, HD, HDP, HP)
    p['bq'] = _pad_qkv_bias(params['bq'], NUM_HEADS, HD, HDP)
    p['wk'] = _pad_qkv_weight(params['wk'], NUM_HEADS, HD, HDP, HP)
    p['bk'] = _pad_qkv_bias(params['bk'], NUM_HEADS, HD, HDP)
    p['wv'] = _pad_qkv_weight(params['wv'], NUM_HEADS, HD, HDP, HP)
    p['bv'] = _pad_qkv_bias(params['bv'], NUM_HEADS, HD, HDP)
    p['wo'] = _pad_out_weight(params['wo'], NUM_HEADS, HD, HDP, HP)
    p['bo'] = _pad_row_vec(params['bo'], HP)
    w1 = params['ffn_w1']
    p['w1m'] = _pad2(w1[0:h], HP, FFN_HP)
    p['w1g'] = _pad2(w1[h:2 * h], HP, FFN_HP)
    p['w1c'] = _pad2(w1[2 * h:3 * h], HP, FFN_HP)
    p['b1'] = _pad_row_vec(params['ffn_b1'], FFN_HP)
    p['w2'] = _pad2(params['ffn_w2'], FFN_HP, OUT_P)
    p['b2'] = _pad_row_vec(params['ffn_b2'], OUT_P)
    return p


# ----------------------------- wrapper -----------------------------------------
@jax.jit
def ggap_cpi_ablation_forward(params, mol_feat, atom_feat, prot_x):
    """Pallas version of GGAP_CPI_ablation.forward (ablation='GCN', eval mode)."""
    pp = _pad_params(params)
    Bb = prot_x.shape[0]
    mol_p = _pad2(mol_feat, Bb, HP)
    atom_p = jnp.pad(atom_feat, ((0, 0), (0, 0), (0, HP - atom_feat.shape[-1])))

    kern = functools.partial(ggap_fused_kernel, num_heads=NUM_HEADS, head_dim=HD)
    in_arrays = (prot_x, atom_p, mol_p,
                 pp['pw'], pp['pb'],
                 pp['wq'], pp['bq'], pp['wk'], pp['bk'], pp['wv'], pp['bv'],
                 pp['wo'], pp['bo'],
                 pp['w1m'], pp['w1g'], pp['w1c'], pp['b1'], pp['w2'], pp['b2'])

    out_p, graph_p, cmb_p = pl.pallas_call(
        kern,
        grid=(1,),
        in_specs=[_full_spec(a.shape) for a in in_arrays],
        out_specs=(_full_spec((Bb, OUT_P)),
                   _full_spec((Bb, HP)),
                   _full_spec((Bb, HP))),
        out_shape=(jax.ShapeDtypeStruct((Bb, OUT_P), jnp.float32),
                   jax.ShapeDtypeStruct((Bb, HP), jnp.float32),
                   jax.ShapeDtypeStruct((Bb, HP), jnp.float32)),
        compiler_params=pltpu.CompilerParams(dimension_semantics=("arbitrary",)),
    )(*in_arrays)

    output = out_p[:, :OUT]
    prot_graph_feat = graph_p[:, :HIDDEN]
    cmb_feat = cmb_p[:, :HIDDEN]
    mol_cat = jnp.concatenate([mol_feat, prot_graph_feat, cmb_feat], axis=1)
    # mirror the PyTorch return structure
    return ([output, None, None, None], [mol_cat, None], prot_graph_feat, [None, None])


# ----------------------------- reference (plain JAX) --------------------------
def _reference_forward(params, mol_feat, atom_feat, prot_x):
    node = jnp.einsum('brd,dh->brh', prot_x, params['prot_w']) + params['prot_b']
    graph = jnp.mean(node, axis=1)
    q = jnp.einsum('bae,ef->baf', atom_feat, params['wq']) + params['bq']
    k = jnp.einsum('bre,ef->brf', node, params['wk']) + params['bk']
    v = jnp.einsum('bre,ef->brf', node, params['wv']) + params['bv']
    hd = HIDDEN // NUM_HEADS
    ctxs = []
    for h in range(NUM_HEADS):
        qh, kh, vh = (t[:, :, h * hd:(h + 1) * hd] for t in (q, k, v))
        s = jnp.einsum('bad,brd->bar', qh, kh) / jnp.sqrt(jnp.float32(hd))
        p = jax.nn.softmax(s, axis=-1)
        ctxs.append(jnp.einsum('bar,brd->bad', p, vh))
    ctx = jnp.concatenate(ctxs, axis=-1)
    out = jnp.einsum('bae,ef->baf', ctx, params['wo']) + params['bo']
    cmb = jnp.mean(out, axis=1)
    mol_cat = jnp.concatenate([mol_feat, graph, cmb], axis=1)
    hdn = jax.nn.relu(mol_cat @ params['ffn_w1'] + params['ffn_b1'])
    return hdn @ params['ffn_w2'] + params['ffn_b2'], mol_cat, graph


# ----------------------------- main -------------------------------------------
if __name__ == "__main__":
    key = jax.random.PRNGKey(0)
    ks = jax.random.split(key, 16)

    def init(k, shape, scale=0.1):
        return (scale * jax.random.normal(k, shape)).astype(jnp.float32)

    params = {
        'prot_w': init(ks[0], (PROT_IN, HIDDEN)),
        'prot_b': init(ks[1], (HIDDEN,)),
        'wq': init(ks[2], (HIDDEN, HIDDEN)), 'bq': init(ks[3], (HIDDEN,)),
        'wk': init(ks[4], (HIDDEN, HIDDEN)), 'bk': init(ks[5], (HIDDEN,)),
        'wv': init(ks[6], (HIDDEN, HIDDEN)), 'bv': init(ks[7], (HIDDEN,)),
        'wo': init(ks[8], (HIDDEN, HIDDEN)), 'bo': init(ks[9], (HIDDEN,)),
        'ffn_w1': init(ks[10], (3 * HIDDEN, FFN_H)), 'ffn_b1': init(ks[11], (FFN_H,)),
        'ffn_w2': init(ks[12], (FFN_H, OUT)), 'ffn_b2': init(ks[13], (OUT,)),
    }

    # synthetic inputs standing in for the CMPNN molecule encoder outputs and
    # the ESM per-residue protein features (batch_prot.x)
    mol_feat = init(ks[14], (B, HIDDEN), scale=1.0)      # molecule graph feature
    atom_feat = init(ks[15], (B, A, HIDDEN), scale=1.0)  # per-atom features
    prot_x = init(jax.random.PRNGKey(42), (B, R, PROT_IN), scale=1.0)

    (outs, mols, prot_graph_feat, _) = ggap_cpi_ablation_forward(
        params, mol_feat, atom_feat, prot_x)
    output = jax.block_until_ready(outs[0])
    mol_cat = jax.block_until_ready(mols[0])
    prot_graph_feat = jax.block_until_ready(prot_graph_feat)

    ref_out, ref_cat, ref_graph = _reference_forward(params, mol_feat, atom_feat, prot_x)
    # tolerance slightly looser than pure-f32: softmax denom uses EUP approx reciprocal
    assert np.allclose(np.asarray(output), np.asarray(ref_out), atol=5e-3, rtol=5e-3)
    assert np.allclose(np.asarray(mol_cat), np.asarray(ref_cat), atol=5e-3, rtol=5e-3)
    assert np.allclose(np.asarray(prot_graph_feat), np.asarray(ref_graph), atol=5e-3, rtol=5e-3)
    assert output.shape == (B, OUT) and mol_cat.shape == (B, 3 * HIDDEN)

    print("KERNEL_OK")
</pallas_src>

<mosaic_0001>
module attributes {stable_mosaic.version = 11 : i64} {
  func.func @ggap_fused_kernel(%arg0: i32, %arg1: memref<2x16x128xf32, #tpu.memory_space<vmem>>, %arg2: memref<2x8x128xf32, #tpu.memory_space<vmem>>, %arg3: memref<2x128xf32, #tpu.memory_space<vmem>>, %arg4: memref<128x128xf32, #tpu.memory_space<vmem>>, %arg5: memref<1x128xf32, #tpu.memory_space<vmem>>, %arg6: memref<128x512xf32, #tpu.memory_space<vmem>>, %arg7: memref<1x512xf32, #tpu.memory_space<vmem>>, %arg8: memref<128x512xf32, #tpu.memory_space<vmem>>, %arg9: memref<1x512xf32, #tpu.memory_space<vmem>>, %arg10: memref<128x512xf32, #tpu.memory_space<vmem>>, %arg11: memref<1x512xf32, #tpu.memory_space<vmem>>, %arg12: memref<512x128xf32, #tpu.memory_space<vmem>>, %arg13: memref<1x128xf32, #tpu.memory_space<vmem>>, %arg14: memref<128x128xf32, #tpu.memory_space<vmem>>, %arg15: memref<128x128xf32, #tpu.memory_space<vmem>>, %arg16: memref<128x128xf32, #tpu.memory_space<vmem>>, %arg17: memref<1x128xf32, #tpu.memory_space<vmem>>, %arg18: memref<128x128xf32, #tpu.memory_space<vmem>>, %arg19: memref<1x128xf32, #tpu.memory_space<vmem>>, %arg20: memref<2x128xf32, #tpu.memory_space<vmem>>, %arg21: memref<2x128xf32, #tpu.memory_space<vmem>>, %arg22: memref<2x128xf32, #tpu.memory_space<vmem>>) attributes {dimension_semantics = [#tpu.dimension_semantics<arbitrary>], iteration_bounds = array<i64: 1>, scalar_prefetch = 0 : i64, scratch_operands = 0 : i64, tpu.core_type = #tpu.core_type<tc>, window_params = [{pipeline_mode = #tpu.pipeline_mode<synchronous>, transform_indices = @transform_0, window_bounds = array<i64: 2, 16, 128>}, {pipeline_mode = #tpu.pipeline_mode<synchronous>, transform_indices = @transform_1, window_bounds = array<i64: 2, 8, 128>}, {pipeline_mode = #tpu.pipeline_mode<synchronous>, transform_indices = @transform_2, window_bounds = array<i64: 2, 128>}, {pipeline_mode = #tpu.pipeline_mode<synchronous>, transform_indices = @transform_3, window_bounds = array<i64: 128, 128>}, {pipeline_mode = #tpu.pipeline_mode<synchronous>, transform_indices = @transform_4, window_bounds = array<i64: 1, 128>}, {pipeline_mode = #tpu.pipeline_mode<synchronous>, transform_indices = @transform_5, window_bounds = array<i64: 128, 512>}, {pipeline_mode = #tpu.pipeline_mode<synchronous>, transform_indices = @transform_6, window_bounds = array<i64: 1, 512>}, {pipeline_mode = #tpu.pipeline_mode<synchronous>, transform_indices = @transform_7, window_bounds = array<i64: 128, 512>}, {pipeline_mode = #tpu.pipeline_mode<synchronous>, transform_indices = @transform_8, window_bounds = array<i64: 1, 512>}, {pipeline_mode = #tpu.pipeline_mode<synchronous>, transform_indices = @transform_9, window_bounds = array<i64: 128, 512>}, {pipeline_mode = #tpu.pipeline_mode<synchronous>, transform_indices = @transform_10, window_bounds = array<i64: 1, 512>}, {pipeline_mode = #tpu.pipeline_mode<synchronous>, transform_indices = @transform_11, window_bounds = array<i64: 512, 128>}, {pipeline_mode = #tpu.pipeline_mode<synchronous>, transform_indices = @transform_12, window_bounds = array<i64: 1, 128>}, {pipeline_mode = #tpu.pipeline_mode<synchronous>, transform_indices = @transform_13, window_bounds = array<i64: 128, 128>}, {pipeline_mode = #tpu.pipeline_mode<synchronous>, transform_indices = @transform_14, window_bounds = array<i64: 128, 128>}, {pipeline_mode = #tpu.pipeline_mode<synchronous>, transform_indices = @transform_15, window_bounds = array<i64: 128, 128>}, {pipeline_mode = #tpu.pipeline_mode<synchronous>, transform_indices = @transform_16, window_bounds = array<i64: 1, 128>}, {pipeline_mode = #tpu.pipeline_mode<synchronous>, transform_indices = @transform_17, window_bounds = array<i64: 128, 128>}, {pipeline_mode = #tpu.pipeline_mode<synchronous>, transform_indices = @transform_18, window_bounds = array<i64: 1, 128>}, {pipeline_mode = #tpu.pipeline_mode<synchronous>, transform_indices = @transform_19, window_bounds = array<i64: 2, 128>}, {pipeline_mode = #tpu.pipeline_mode<synchronous>, transform_indices = @transform_20, window_bounds = array<i64: 2, 128>}, {pipeline_mode = #tpu.pipeline_mode<synchronous>, transform_indices = @transform_21, window_bounds = array<i64: 2, 128>}]} {
    %c0 = arith.constant 0 : index
    %c0_0 = arith.constant 0 : index
    %c0_1 = arith.constant 0 : index
    %0 = vector.load %arg1[%c0, %c0_0, %c0_1] : memref<2x16x128xf32, #tpu.memory_space<vmem>>, vector<2x16x128xf32>
    %1 = vector.shape_cast %0 : vector<2x16x128xf32> to vector<32x128xf32>
    %c0_2 = arith.constant 0 : index
    %c0_3 = arith.constant 0 : index
    %2 = vector.load %arg4[%c0_2, %c0_3] : memref<128x128xf32, #tpu.memory_space<vmem>>, vector<128x128xf32>
    %cst = arith.constant dense<0.000000e+00> : vector<32x128xf32>
    %3 = tpu.matmul %1, %2, %cst {dimension_numbers = #tpu.dot_dimension_numbers<[1], [0], [0], [1], [0, 0, 1, 1], [], []>} : vector<32x128xf32>, vector<128x128xf32>, vector<32x128xf32> -> vector<32x128xf32>
    %c0_4 = arith.constant 0 : index
    %c0_5 = arith.constant 0 : index
    %4 = vector.load %arg5[%c0_4, %c0_5] : memref<1x128xf32, #tpu.memory_space<vmem>>, vector<1x128xf32>
    %5 = vector.broadcast %4 : vector<1x128xf32> to vector<32x128xf32>
    %6 = arith.addf %3, %5 : vector<32x128xf32>
    %7 = vector.shape_cast %6 : vector<32x128xf32> to vector<2x16x128xf32>
    %cst_6 = arith.constant dense<0.000000e+00> : vector<2x128xf32>
    %8 = vector.multi_reduction <add>, %7, %cst_6 [1] : vector<2x16x128xf32> to vector<2x128xf32>
    %cst_7 = arith.constant 6.250000e-02 : f32
    %9 = vector.broadcast %cst_7 : f32 to vector<2x128xf32>
    %10 = arith.mulf %8, %9 : vector<2x128xf32>
    %c0_8 = arith.constant 0 : index
    %c0_9 = arith.constant 0 : index
    %11 = vector.load %arg21[%c0_8, %c0_9] : memref<2x128xf32, #tpu.memory_space<vmem>>, vector<2x128xf32>
    tpu.vector_store %arg21[%c0_8, %c0_9], %10 {strides = array<i32>} : memref<2x128xf32, #tpu.memory_space<vmem>>, vector<2x128xf32>,
    %c0_10 = arith.constant 0 : index
    %c0_11 = arith.constant 0 : index
    %c0_12 = arith.constant 0 : index
    %12 = vector.load %arg2[%c0_10, %c0_11, %c0_12] : memref<2x8x128xf32, #tpu.memory_space<vmem>>, vector<2x8x128xf32>
    %13 = vector.shape_cast %12 : vector<2x8x128xf32> to vector<16x128xf32>
    %c0_13 = arith.constant 0 : index
    %c0_14 = arith.constant 0 : index
    %14 = vector.load %arg6[%c0_13, %c0_14] : memref<128x512xf32, #tpu.memory_space<vmem>>, vector<128x512xf32>
    %cst_15 = arith.constant dense<0.000000e+00> : vector<16x512xf32>
    %15 = tpu.matmul %13, %14, %cst_15 {dimension_numbers = #tpu.dot_dimension_numbers<[1], [0], [0], [1], [0, 0, 1, 1], [], []>} : vector<16x128xf32>, vector<128x512xf32>, vector<16x512xf32> -> vector<16x512xf32>
    %c0_16 = arith.constant 0 : index
    %c0_17 = arith.constant 0 : index
    %16 = vector.load %arg7[%c0_16, %c0_17] : memref<1x512xf32, #tpu.memory_space<vmem>>, vector<1x512xf32>
    %17 = vector.broadcast %16 : vector<1x512xf32> to vector<16x512xf32>
    %18 = arith.addf %15, %17 : vector<16x512xf32>
    %19 = vector.shape_cast %18 : vector<16x512xf32> to vector<2x8x512xf32>
    %c0_18 = arith.constant 0 : index
    %c0_19 = arith.constant 0 : index
    %20 = vector.load %arg8[%c0_18, %c0_19] : memref<128x512xf32, #tpu.memory_space<vmem>>, vector<128x512xf32>
    %cst_20 = arith.constant dense<0.000000e+00> : vector<32x512xf32>
    %21 = tpu.matmul %6, %20, %cst_20 {dimension_numbers = #tpu.dot_dimension_numbers<[1], [0], [0], [1], [0, 0, 1, 1], [], []>} : vector<32x128xf32>, vector<128x512xf32>, vector<32x512xf32> -> vector<32x512xf32>
    %c0_21 = arith.constant 0 : index
    %c0_22 = arith.constant 0 : index
    %22 = vector.load %arg9[%c0_21, %c0_22] : memref<1x512xf32, #tpu.memory_space<vmem>>, vector<1x512xf32>
    %23 = vector.broadcast %22 : vector<1x512xf32> to vector<32x512xf32>
    %24 = arith.addf %21, %23 : vector<32x512xf32>
    %25 = vector.shape_cast %24 : vector<32x512xf32> to vector<2x16x512xf32>
    %c0_23 = arith.constant 0 : index
    %c0_24 = arith.constant 0 : index
    %26 = vector.load %arg10[%c0_23, %c0_24] : memref<128x512xf32, #tpu.memory_space<vmem>>, vector<128x512xf32>
    %cst_25 = arith.constant dense<0.000000e+00> : vector<32x512xf32>
    %27 = tpu.matmul %6, %26, %cst_25 {dimension_numbers = #tpu.dot_dimension_numbers<[1], [0], [0], [1], [0, 0, 1, 1], [], []>} : vector<32x128xf32>, vector<128x512xf32>, vector<32x512xf32> -> vector<32x512xf32>
    %c0_26 = arith.constant 0 : index
    %c0_27 = arith.constant 0 : index
    %28 = vector.load %arg11[%c0_26, %c0_27] : memref<1x512xf32, #tpu.memory_space<vmem>>, vector<1x512xf32>
    %29 = vector.broadcast %28 : vector<1x512xf32> to vector<32x512xf32>
    %30 = arith.addf %27, %29 : vector<32x512xf32>
    %31 = vector.shape_cast %30 : vector<32x512xf32> to vector<2x16x512xf32>
    %cst_28 = arith.constant 0.000000e+00 : f32
    %32 = vector.broadcast %cst_28 : f32 to vector<16x128xf32>
    %33 = vector.extract_strided_slice %19 {offsets = [0, 0, 0], sizes = [2, 8, 128], strides = [1, 1, 1]} : vector<2x8x512xf32> to vector<2x8x128xf32>
    %34 = vector.extract_strided_slice %25 {offsets = [0, 0, 0], sizes = [2, 16, 128], strides = [1, 1, 1]} : vector<2x16x512xf32> to vector<2x16x128xf32>
    %35 = vector.extract_strided_slice %31 {offsets = [0, 0, 0], sizes = [2, 16, 128], strides = [1, 1, 1]} : vector<2x16x512xf32> to vector<2x16x128xf32>
    "tpu.trace_start"() <{level = 10 : i32, message = "bad,brd->bar"}> : () -> ()
    %cst_29 = arith.constant dense<0.000000e+00> : vector<2x8x16xf32>
    %36 = tpu.matmul %33, %34, %cst_29 {dimension_numbers = #tpu.dot_dimension_numbers<[2], [2], [1], [1], [0, 0, 0, 1, 1, 1], [0], [0]>} : vector<2x8x128xf32>, vector<2x16x128xf32>, vector<2x8x16xf32> -> vector<2x8x16xf32>
    "tpu.trace_stop"() : () -> ()
    %cst_30 = arith.constant 0.353553385 : f32
    %37 = vector.broadcast %cst_30 : f32 to vector<2x8x16xf32>
    %38 = arith.mulf %36, %37 : vector<2x8x16xf32>
    %cst_31 = arith.constant dense<0xFF800000> : vector<2x8xf32>
    %39 = vector.multi_reduction <maximumf>, %38, %cst_31 [2] : vector<2x8x16xf32> to vector<2x8xf32>
    %40 = vector.shape_cast %39 : vector<2x8xf32> to vector<2x8x1xf32>
    %41 = vector.broadcast %40 : vector<2x8x1xf32> to vector<2x8x16xf32>
    %42 = arith.subf %38, %41 : vector<2x8x16xf32>
    %43 = math.exp %42 : vector<2x8x16xf32>
    %cst_32 = arith.constant dense<0.000000e+00> : vector<2x8xf32>
    %44 = vector.multi_reduction <add>, %43, %cst_32 [2] : vector<2x8x16xf32> to vector<2x8xf32>
    %45 = vector.shape_cast %44 : vector<2x8xf32> to vector<2x8x1xf32>
    %46 = tpu.reciprocal %45 {approx = true} : vector<2x8x1xf32> -> vector<2x8x1xf32>
    %47 = vector.broadcast %46 : vector<2x8x1xf32> to vector<2x8x16xf32>
    %48 = arith.mulf %43, %47 : vector<2x8x16xf32>
    "tpu.trace_start"() <{level = 10 : i32, message = "bar,brd->bad"}> : () -> ()
    %cst_33 = arith.constant dense<0.000000e+00> : vector<2x8x128xf32>
    %49 = tpu.matmul %48, %35, %cst_33 {dimension_numbers = #tpu.dot_dimension_numbers<[2], [1], [1], [2], [0, 0, 0, 1, 1, 2], [0], [0]>} : vector<2x8x16xf32>, vector<2x16x128xf32>, vector<2x8x128xf32> -> vector<2x8x128xf32>
    "tpu.trace_stop"() : () -> ()
    %50 = vector.shape_cast %49 : vector<2x8x128xf32> to vector<16x128xf32>
    %c0_34 = arith.constant 0 : index
    %c0_35 = arith.constant 0 : index
    %51 = vector.load %arg12[%c0_34, %c0_35] : memref<512x128xf32, #tpu.memory_space<vmem>>, vector<128x128xf32>
    %cst_36 = arith.constant dense<0.000000e+00> : vector<16x128xf32>
    %52 = tpu.matmul %50, %51, %cst_36 {dimension_numbers = #tpu.dot_dimension_numbers<[1], [0], [0], [1], [0, 0, 1, 1], [], []>} : vector<16x128xf32>, vector<128x128xf32>, vector<16x128xf32> -> vector<16x128xf32>
    %53 = arith.addf %32, %52 : vector<16x128xf32>
    %54 = vector.extract_strided_slice %19 {offsets = [0, 0, 128], sizes = [2, 8, 128], strides = [1, 1, 1]} : vector<2x8x512xf32> to vector<2x8x128xf32>
    %55 = vector.extract_strided_slice %25 {offsets = [0, 0, 128], sizes = [2, 16, 128], strides = [1, 1, 1]} : vector<2x16x512xf32> to vector<2x16x128xf32>
    %56 = vector.extract_strided_slice %31 {offsets = [0, 0, 128], sizes = [2, 16, 128], strides = [1, 1, 1]} : vector<2x16x512xf32> to vector<2x16x128xf32>
    "tpu.trace_start"() <{level = 10 : i32, message = "bad,brd->bar"}> : () -> ()
    %cst_37 = arith.constant dense<0.000000e+00> : vector<2x8x16xf32>
    %57 = tpu.matmul %54, %55, %cst_37 {dimension_numbers = #tpu.dot_dimension_numbers<[2], [2], [1], [1], [0, 0, 0, 1, 1, 1], [0], [0]>} : vector<2x8x128xf32>, vector<2x16x128xf32>, vector<2x8x16xf32> -> vector<2x8x16xf32>
    "tpu.trace_stop"() : () -> ()
    %cst_38 = arith.constant 0.353553385 : f32
    %58 = vector.broadcast %cst_38 : f32 to vector<2x8x16xf32>
    %59 = arith.mulf %57, %58 : vector<2x8x16xf32>
    %cst_39 = arith.constant dense<0xFF800000> : vector<2x8xf32>
    %60 = vector.multi_reduction <maximumf>, %59, %cst_39 [2] : vector<2x8x16xf32> to vector<2x8xf32>
    %61 = vector.shape_cast %60 : vector<2x8xf32> to vector<2x8x1xf32>
    %62 = vector.broadcast %61 : vector<2x8x1xf32> to vector<2x8x16xf32>
    %63 = arith.subf %59, %62 : vector<2x8x16xf32>
    %64 = math.exp %63 : vector<2x8x16xf32>
    %cst_40 = arith.constant dense<0.000000e+00> : vector<2x8xf32>
    %65 = vector.multi_reduction <add>, %64, %cst_40 [2] : vector<2x8x16xf32> to vector<2x8xf32>
    %66 = vector.shape_cast %65 : vector<2x8xf32> to vector<2x8x1xf32>
    %67 = tpu.reciprocal %66 {approx = true} : vector<2x8x1xf32> -> vector<2x8x1xf32>
    %68 = vector.broadcast %67 : vector<2x8x1xf32> to vector<2x8x16xf32>
    %69 = arith.mulf %64, %68 : vector<2x8x16xf32>
    "tpu.trace_start"() <{level = 10 : i32, message = "bar,brd->bad"}> : () -> ()
    %cst_41 = arith.constant dense<0.000000e+00> : vector<2x8x128xf32>
    %70 = tpu.matmul %69, %56, %cst_41 {dimension_numbers = #tpu.dot_dimension_numbers<[2], [1], [1], [2], [0, 0, 0, 1, 1, 2], [0], [0]>} : vector<2x8x16xf32>, vector<2x16x128xf32>, vector<2x8x128xf32> -> vector<2x8x128xf32>
    "tpu.trace_stop"() : () -> ()
    %71 = vector.shape_cast %70 : vector<2x8x128xf32> to vector<16x128xf32>
    %c128 = arith.constant 128 : index
    %c0_42 = arith.constant 0 : index
    %72 = vector.load %arg12[%c128, %c0_42] : memref<512x128xf32, #tpu.memory_space<vmem>>, vector<128x128xf32>
    %cst_43 = arith.constant dense<0.000000e+00> : vector<16x128xf32>
    %73 = tpu.matmul %71, %72, %cst_43 {dimension_numbers = #tpu.dot_dimension_numbers<[1], [0], [0], [1], [0, 0, 1, 1], [], []>} : vector<16x128xf32>, vector<128x128xf32>, vector<16x128xf32> -> vector<16x128xf32>
    %74 = arith.addf %53, %73 : vector<16x128xf32>
    %75 = vector.extract_strided_slice %19 {offsets = [0, 0, 256], sizes = [2, 8, 128], strides = [1, 1, 1]} : vector<2x8x512xf32> to vector<2x8x128xf32>
    %76 = vector.extract_strided_slice %25 {offsets = [0, 0, 256], sizes = [2, 16, 128], strides = [1, 1, 1]} : vector<2x16x512xf32> to vector<2x16x128xf32>
    %77 = vector.extract_strided_slice %31 {offsets = [0, 0, 256], sizes = [2, 16, 128], strides = [1, 1, 1]} : vector<2x16x512xf32> to vector<2x16x128xf32>
    "tpu.trace_start"() <{level = 10 : i32, message = "bad,brd->bar"}> : () -> ()
    %cst_44 = arith.constant dense<0.000000e+00> : vector<2x8x16xf32>
    %78 = tpu.matmul %75, %76, %cst_44 {dimension_numbers = #tpu.dot_dimension_numbers<[2], [2], [1], [1], [0, 0, 0, 1, 1, 1], [0], [0]>} : vector<2x8x128xf32>, vector<2x16x128xf32>, vector<2x8x16xf32> -> vector<2x8x16xf32>
    "tpu.trace_stop"() : () -> ()
    %cst_45 = arith.constant 0.353553385 : f32
    %79 = vector.broadcast %cst_45 : f32 to vector<2x8x16xf32>
    %80 = arith.mulf %78, %79 : vector<2x8x16xf32>
    %cst_46 = arith.constant dense<0xFF800000> : vector<2x8xf32>
    %81 = vector.multi_reduction <maximumf>, %80, %cst_46 [2] : vector<2x8x16xf32> to vector<2x8xf32>
    %82 = vector.shape_cast %81 : vector<2x8xf32> to vector<2x8x1xf32>
    %83 = vector.broadcast %82 : vector<2x8x1xf32> to vector<2x8x16xf32>
    %84 = arith.subf %80, %83 : vector<2x8x16xf32>
    %85 = math.exp %84 : vector<2x8x16xf32>
    %cst_47 = arith.constant dense<0.000000e+00> : vector<2x8xf32>
    %86 = vector.multi_reduction <add>, %85, %cst_47 [2] : vector<2x8x16xf32> to vector<2x8xf32>
    %87 = vector.shape_cast %86 : vector<2x8xf32> to vector<2x8x1xf32>
    %88 = tpu.reciprocal %87 {approx = true} : vector<2x8x1xf32> -> vector<2x8x1xf32>
    %89 = vector.broadcast %88 : vector<2x8x1xf32> to vector<2x8x16xf32>
    %90 = arith.mulf %85, %89 : vector<2x8x16xf32>
    "tpu.trace_start"() <{level = 10 : i32, message = "bar,brd->bad"}> : () -> ()
    %cst_48 = arith.constant dense<0.000000e+00> : vector<2x8x128xf32>
    %91 = tpu.matmul %90, %77, %cst_48 {dimension_numbers = #tpu.dot_dimension_numbers<[2], [1], [1], [2], [0, 0, 0, 1, 1, 2], [0], [0]>} : vector<2x8x16xf32>, vector<2x16x128xf32>, vector<2x8x128xf32> -> vector<2x8x128xf32>
    "tpu.trace_stop"() : () -> ()
    %92 = vector.shape_cast %91 : vector<2x8x128xf32> to vector<16x128xf32>
    %c256 = arith.constant 256 : index
    %c0_49 = arith.constant 0 : index
    %93 = vector.load %arg12[%c256, %c0_49] : memref<512x128xf32, #tpu.memory_space<vmem>>, vector<128x128xf32>
    %cst_50 = arith.constant dense<0.000000e+00> : vector<16x128xf32>
    %94 = tpu.matmul %92, %93, %cst_50 {dimension_numbers = #tpu.dot_dimension_numbers<[1], [0], [0], [1], [0, 0, 1, 1], [], []>} : vector<16x128xf32>, vector<128x128xf32>, vector<16x128xf32> -> vector<16x128xf32>
    %95 = arith.addf %74, %94 : vector<16x128xf32>
    %96 = vector.extract_strided_slice %19 {offsets = [0, 0, 384], sizes = [2, 8, 128], strides = [1, 1, 1]} : vector<2x8x512xf32> to vector<2x8x128xf32>
    %97 = vector.extract_strided_slice %25 {offsets = [0, 0, 384], sizes = [2, 16, 128], strides = [1, 1, 1]} : vector<2x16x512xf32> to vector<2x16x128xf32>
    %98 = vector.extract_strided_slice %31 {offsets = [0, 0, 384], sizes = [2, 16, 128], strides = [1, 1, 1]} : vector<2x16x512xf32> to vector<2x16x128xf32>
    "tpu.trace_start"() <{level = 10 : i32, message = "bad,brd->bar"}> : () -> ()
    %cst_51 = arith.constant dense<0.000000e+00> : vector<2x8x16xf32>
    %99 = tpu.matmul %96, %97, %cst_51 {dimension_numbers = #tpu.dot_dimension_numbers<[2], [2], [1], [1], [0, 0, 0, 1, 1, 1], [0], [0]>} : vector<2x8x128xf32>, vector<2x16x128xf32>, vector<2x8x16xf32> -> vector<2x8x16xf32>
    "tpu.trace_stop"() : () -> ()
    %cst_52 = arith.constant 0.353553385 : f32
    %100 = vector.broadcast %cst_52 : f32 to vector<2x8x16xf32>
    %101 = arith.mulf %99, %100 : vector<2x8x16xf32>
    %cst_53 = arith.constant dense<0xFF800000> : vector<2x8xf32>
    %102 = vector.multi_reduction <maximumf>, %101, %cst_53 [2] : vector<2x8x16xf32> to vector<2x8xf32>
    %103 = vector.shape_cast %102 : vector<2x8xf32> to vector<2x8x1xf32>
    %104 = vector.broadcast %103 : vector<2x8x1xf32> to vector<2x8x16xf32>
    %105 = arith.subf %101, %104 : vector<2x8x16xf32>
    %106 = math.exp %105 : vector<2x8x16xf32>
    %cst_54 = arith.constant dense<0.000000e+00> : vector<2x8xf32>
    %107 = vector.multi_reduction <add>, %106, %cst_54 [2] : vector<2x8x16xf32> to vector<2x8xf32>
    %108 = vector.shape_cast %107 : vector<2x8xf32> to vector<2x8x1xf32>
    %109 = tpu.reciprocal %108 {approx = true} : vector<2x8x1xf32> -> vector<2x8x1xf32>
    %110 = vector.broadcast %109 : vector<2x8x1xf32> to vector<2x8x16xf32>
    %111 = arith.mulf %106, %110 : vector<2x8x16xf32>
    "tpu.trace_start"() <{level = 10 : i32, message = "bar,brd->bad"}> : () -> ()
    %cst_55 = arith.constant dense<0.000000e+00> : vector<2x8x128xf32>
    %112 = tpu.matmul %111, %98, %cst_55 {dimension_numbers = #tpu.dot_dimension_numbers<[2], [1], [1], [2], [0, 0, 0, 1, 1, 2], [0], [0]>} : vector<2x8x16xf32>, vector<2x16x128xf32>, vector<2x8x128xf32> -> vector<2x8x128xf32>
    "tpu.trace_stop"() : () -> ()
    %113 = vector.shape_cast %112 : vector<2x8x128xf32> to vector<16x128xf32>
    %c384 = arith.constant 384 : index
    %c0_56 = arith.constant 0 : index
    %114 = vector.load %arg12[%c384, %c0_56] : memref<512x128xf32, #tpu.memory_space<vmem>>, vector<128x128xf32>
    %cst_57 = arith.constant dense<0.000000e+00> : vector<16x128xf32>
    %115 = tpu.matmul %113, %114, %cst_57 {dimension_numbers = #tpu.dot_dimension_numbers<[1], [0], [0], [1], [0, 0, 1, 1], [], []>} : vector<16x128xf32>, vector<128x128xf32>, vector<16x128xf32> -> vector<16x128xf32>
    %116 = arith.addf %95, %115 : vector<16x128xf32>
    %117 = vector.shape_cast %116 : vector<16x128xf32> to vector<2x8x128xf32>
    %cst_58 = arith.constant dense<0.000000e+00> : vector<2x128xf32>
    %118 = vector.multi_reduction <add>, %117, %cst_58 [1] : vector<2x8x128xf32> to vector<2x128xf32>
    %cst_59 = arith.constant 1.250000e-01 : f32
    %119 = vector.broadcast %cst_59 : f32 to vector<2x128xf32>
    %120 = arith.mulf %118, %119 : vector<2x128xf32>
    %c0_60 = arith.constant 0 : index
    %c0_61 = arith.constant 0 : index
    %121 = vector.load %arg13[%c0_60, %c0_61] : memref<1x128xf32, #tpu.memory_space<vmem>>, vector<1x128xf32>
    %122 = vector.broadcast %121 : vector<1x128xf32> to vector<2x128xf32>
    %123 = arith.addf %120, %122 : vector<2x128xf32>
    %c0_62 = arith.constant 0 : index
    %c0_63 = arith.constant 0 : index
    %124 = vector.load %arg22[%c0_62, %c0_63] : memref<2x128xf32, #tpu.memory_space<vmem>>, vector<2x128xf32>
    tpu.vector_store %arg22[%c0_62, %c0_63], %123 {strides = array<i32>} : memref<2x128xf32, #tpu.memory_space<vmem>>, vector<2x128xf32>,
    %c0_64 = arith.constant 0 : index
    %c0_65 = arith.constant 0 : index
    %125 = vector.load %arg3[%c0_64, %c0_65] : memref<2x128xf32, #tpu.memory_space<vmem>>, vector<2x128xf32>
    %c0_66 = arith.constant 0 : index
    %c0_67 = arith.constant 0 : index
    %126 = vector.load %arg14[%c0_66, %c0_67] : memref<128x128xf32, #tpu.memory_space<vmem>>, vector<128x128xf32>
    %cst_68 = arith.constant dense<0.000000e+00> : vector<2x128xf32>
    %127 = tpu.matmul %125, %126, %cst_68 {dimension_numbers = #tpu.dot_dimension_numbers<[1], [0], [0], [1], [0, 0, 1, 1], [], []>} : vector<2x128xf32>, vector<128x128xf32>, vector<2x128xf32> -> vector<2x128xf32>
    %c0_69 = arith.constant 0 : index
    %c0_70 = arith.constant 0 : index
    %128 = vector.load %arg15[%c0_69, %c0_70] : memref<128x128xf32, #tpu.memory_space<vmem>>, vector<128x128xf32>
    %cst_71 = arith.constant dense<0.000000e+00> : vector<2x128xf32>
    %129 = tpu.matmul %10, %128, %cst_71 {dimension_numbers = #tpu.dot_dimension_numbers<[1], [0], [0], [1], [0, 0, 1, 1], [], []>} : vector<2x128xf32>, vector<128x128xf32>, vector<2x128xf32> -> vector<2x128xf32>
    %130 = arith.addf %127, %129 : vector<2x128xf32>
    %c0_72 = arith.constant 0 : index
    %c0_73 = arith.constant 0 : index
    %131 = vector.load %arg16[%c0_72, %c0_73] : memref<128x128xf32, #tpu.memory_space<vmem>>, vector<128x128xf32>
    %cst_74 = arith.constant dense<0.000000e+00> : vector<2x128xf32>
    %132 = tpu.matmul %123, %131, %cst_74 {dimension_numbers = #tpu.dot_dimension_numbers<[1], [0], [0], [1], [0, 0, 1, 1], [], []>} : vector<2x128xf32>, vector<128x128xf32>, vector<2x128xf32> -> vector<2x128xf32>
    %133 = arith.addf %130, %132 : vector<2x128xf32>
    %c0_75 = arith.constant 0 : index
    %c0_76 = arith.constant 0 : index
    %134 = vector.load %arg17[%c0_75, %c0_76] : memref<1x128xf32, #tpu.memory_space<vmem>>, vector<1x128xf32>
    %135 = vector.broadcast %134 : vector<1x128xf32> to vector<2x128xf32>
    %136 = arith.addf %133, %135 : vector<2x128xf32>
    %cst_77 = arith.constant 0.000000e+00 : f32
    %137 = vector.broadcast %cst_77 : f32 to vector<2x128xf32>
    %138 = arith.maximumf %136, %137 : vector<2x128xf32>
    %c0_78 = arith.constant 0 : index
    %c0_79 = arith.constant 0 : index
    %139 = vector.load %arg18[%c0_78, %c0_79] : memref<128x128xf32, #tpu.memory_space<vmem>>, vector<128x128xf32>
    %cst_80 = arith.constant dense<0.000000e+00> : vector<2x128xf32>
    %140 = tpu.matmul %138, %139, %cst_80 {dimension_numbers = #tpu.dot_dimension_numbers<[1], [0], [0], [1], [0, 0, 1, 1], [], []>} : vector<2x128xf32>, vector<128x128xf32>, vector<2x128xf32> -> vector<2x128xf32>
    %c0_81 = arith.constant 0 : index
    %c0_82 = arith.constant 0 : index
    %141 = vector.load %arg19[%c0_81, %c0_82] : memref<1x128xf32, #tpu.memory_space<vmem>>, vector<1x128xf32>
    %142 = vector.broadcast %141 : vector<1x128xf32> to vector<2x128xf32>
    %143 = arith.addf %140, %142 : vector<2x128xf32>
    %c0_83 = arith.constant 0 : index
    %c0_84 = arith.constant 0 : index
    %144 = vector.load %arg20[%c0_83, %c0_84] : memref<2x128xf32, #tpu.memory_space<vmem>>, vector<2x128xf32>
    tpu.vector_store %arg20[%c0_83, %c0_84], %143 {strides = array<i32>} : memref<2x128xf32, #tpu.memory_space<vmem>>, vector<2x128xf32>,
    return
  }
  func.func @transform_0(%arg0: i32) -> (i32, i32, i32) {
    %c0_i32 = arith.constant 0 : i32
    %c0_i32_0 = arith.constant 0 : i32
    %c0_i32_1 = arith.constant 0 : i32
    %c0_i32_2 = arith.constant 0 : i32
    return %c0_i32, %c0_i32_0, %c0_i32_1 : i32, i32, i32
  }
  func.func @transform_1(%arg0: i32) -> (i32, i32, i32) {
    %c0_i32 = arith.constant 0 : i32
    %c0_i32_0 = arith.constant 0 : i32
    %c0_i32_1 = arith.constant 0 : i32
    %c0_i32_2 = arith.constant 0 : i32
    return %c0_i32, %c0_i32_0, %c0_i32_1 : i32, i32, i32
  }
  func.func @transform_2(%arg0: i32) -> (i32, i32) {
    %c0_i32 = arith.constant 0 : i32
    %c0_i32_0 = arith.constant 0 : i32
    %c0_i32_1 = arith.constant 0 : i32
    return %c0_i32, %c0_i32_0 : i32, i32
  }
  func.func @transform_3(%arg0: i32) -> (i32, i32) {
    %c0_i32 = arith.constant 0 : i32
    %c0_i32_0 = arith.constant 0 : i32
    %c0_i32_1 = arith.constant 0 : i32
    return %c0_i32, %c0_i32_0 : i32, i32
  }
  func.func @transform_4(%arg0: i32) -> (i32, i32) {
    %c0_i32 = arith.constant 0 : i32
    %c0_i32_0 = arith.constant 0 : i32
    %c0_i32_1 = arith.constant 0 : i32
    return %c0_i32, %c0_i32_0 : i32, i32
  }
  func.func @transform_5(%arg0: i32) -> (i32, i32) {
    %c0_i32 = arith.constant 0 : i32
    %c0_i32_0 = arith.constant 0 : i32
    %c0_i32_1 = arith.constant 0 : i32
    return %c0_i32, %c0_i32_0 : i32, i32
  }
  func.func @transform_6(%arg0: i32) -> (i32, i32) {
    %c0_i32 = arith.constant 0 : i32
    %c0_i32_0 = arith.constant 0 : i32
    %c0_i32_1 = arith.constant 0 : i32
    return %c0_i32, %c0_i32_0 : i32, i32
  }
  func.func @transform_7(%arg0: i32) -> (i32, i32) {
    %c0_i32 = arith.constant 0 : i32
    %c0_i32_0 = arith.constant 0 : i32
    %c0_i32_1 = arith.constant 0 : i32
    return %c0_i32, %c0_i32_0 : i32, i32
  }
  func.func @transform_8(%arg0: i32) -> (i32, i32) {
    %c0_i32 = arith.constant 0 : i32
    %c0_i32_0 = arith.constant 0 : i32
    %c0_i32_1 = arith.constant 0 : i32
    return %c0_i32, %c0_i32_0 : i32, i32
  }
  func.func @transform_9(%arg0: i32) -> (i32, i32) {
    %c0_i32 = arith.constant 0 : i32
    %c0_i32_0 = arith.constant 0 : i32
    %c0_i32_1 = arith.constant 0 : i32
    return %c0_i32, %c0_i32_0 : i32, i32
  }
  func.func @transform_10(%arg0: i32) -> (i32, i32) {
    %c0_i32 = arith.constant 0 : i32
    %c0_i32_0 = arith.constant 0 : i32
    %c0_i32_1 = arith.constant 0 : i32
    return %c0_i32, %c0_i32_0 : i32, i32
  }
  func.func @transform_11(%arg0: i32) -> (i32, i32) {
    %c0_i32 = arith.constant 0 : i32
    %c0_i32_0 = arith.constant 0 : i32
    %c0_i32_1 = arith.constant 0 : i32
    return %c0_i32, %c0_i32_0 : i32, i32
  }
  func.func @transform_12(%arg0: i32) -> (i32, i32) {
    %c0_i32 = arith.constant 0 : i32
    %c0_i32_0 = arith.constant 0 : i32
    %c0_i32_1 = arith.constant 0 : i32
    return %c0_i32, %c0_i32_0 : i32, i32
  }
  func.func @transform_13(%arg0: i32) -> (i32, i32) {
    %c0_i32 = arith.constant 0 : i32
    %c0_i32_0 = arith.constant 0 : i32
    %c0_i32_1 = arith.constant 0 : i32
    return %c0_i32, %c0_i32_0 : i32, i32
  }
  func.func @transform_14(%arg0: i32) -> (i32, i32) {
    %c0_i32 = arith.constant 0 : i32
    %c0_i32_0 = arith.constant 0 : i32
    %c0_i32_1 = arith.constant 0 : i32
    return %c0_i32, %c0_i32_0 : i32, i32
  }
  func.func @transform_15(%arg0: i32) -> (i32, i32) {
    %c0_i32 = arith.constant 0 : i32
    %c0_i32_0 = arith.constant 0 : i32
    %c0_i32_1 = arith.constant 0 : i32
    return %c0_i32, %c0_i32_0 : i32, i32
  }
  func.func @transform_16(%arg0: i32) -> (i32, i32) {
    %c0_i32 = arith.constant 0 : i32
    %c0_i32_0 = arith.constant 0 : i32
    %c0_i32_1 = arith.constant 0 : i32
    return %c0_i32, %c0_i32_0 : i32, i32
  }
  func.func @transform_17(%arg0: i32) -> (i32, i32) {
    %c0_i32 = arith.constant 0 : i32
    %c0_i32_0 = arith.constant 0 : i32
    %c0_i32_1 = arith.constant 0 : i32
    return %c0_i32, %c0_i32_0 : i32, i32
  }
  func.func @transform_18(%arg0: i32) -> (i32, i32) {
    %c0_i32 = arith.constant 0 : i32
    %c0_i32_0 = arith.constant 0 : i32
    %c0_i32_1 = arith.constant 0 : i32
    return %c0_i32, %c0_i32_0 : i32, i32
  }
  func.func @transform_19(%arg0: i32) -> (i32, i32) {
    %c0_i32 = arith.constant 0 : i32
    %c0_i32_0 = arith.constant 0 : i32
    %c0_i32_1 = arith.constant 0 : i32
    return %c0_i32, %c0_i32_0 : i32, i32
  }
  func.func @transform_20(%arg0: i32) -> (i32, i32) {
    %c0_i32 = arith.constant 0 : i32
    %c0_i32_0 = arith.constant 0 : i32
    %c0_i32_1 = arith.constant 0 : i32
    return %c0_i32, %c0_i32_0 : i32, i32
  }
  func.func @transform_21(%arg0: i32) -> (i32, i32) {
    %c0_i32 = arith.constant 0 : i32
    %c0_i32_0 = arith.constant 0 : i32
    %c0_i32_1 = arith.constant 0 : i32
    return %c0_i32, %c0_i32_0 : i32, i32
  }
}

</mosaic_0001>

<llo_original>
// kernel: ggap_cpi_ablation_forward.1
$region0: #{ggap_cpi_ablation_forward.1}
  #allocation0 [shape = 'u32[]', space=smem, size = 0x4, offset = 0x4, fixed_abs, tag = 'smem constant byte address 0x4 - core index']
  #allocation1 [shape = 'u32[144,128]{1,0:T(1,128)}', space=vmem, size = 0x12000, scoped, tag = 'internal scratch']
  %s0 = inlined_call_operand.vmem [shape: f32[2,16,128], index: 0, kind: input, shape index: {}]
  %s1 = inlined_call_operand.vmem [shape: f32[2,8,128], index: 1, kind: input, shape index: {}]
  %s2 = inlined_call_operand.vmem [shape: f32[2,128], index: 2, kind: input, shape index: {}]
  %s3 = inlined_call_operand.vmem [shape: f32[128,128], index: 3, kind: input, shape index: {}]
  %s4 = inlined_call_operand.vmem [shape: f32[1,128], index: 4, kind: input, shape index: {}]
  %s5 = inlined_call_operand.vmem [shape: f32[128,512], index: 5, kind: input, shape index: {}]
  %s6 = inlined_call_operand.vmem [shape: f32[1,512], index: 6, kind: input, shape index: {}]
  %s7 = inlined_call_operand.vmem [shape: f32[128,512], index: 7, kind: input, shape index: {}]
  %s8 = inlined_call_operand.vmem [shape: f32[1,512], index: 8, kind: input, shape index: {}]
  %s9 = inlined_call_operand.vmem [shape: f32[128,512], index: 9, kind: input, shape index: {}]
  %s10 = inlined_call_operand.vmem [shape: f32[1,512], index: 10, kind: input, shape index: {}]
  %s11 = inlined_call_operand.vmem [shape: f32[512,128], index: 11, kind: input, shape index: {}]
  %s12 = inlined_call_operand.vmem [shape: f32[1,128], index: 12, kind: input, shape index: {}]
  %s13 = inlined_call_operand.vmem [shape: f32[128,128], index: 13, kind: input, shape index: {}]
  %s14 = inlined_call_operand.vmem [shape: f32[128,128], index: 14, kind: input, shape index: {}]
  %s15 = inlined_call_operand.vmem [shape: f32[128,128], index: 15, kind: input, shape index: {}]
  %s16 = inlined_call_operand.vmem [shape: f32[1,128], index: 16, kind: input, shape index: {}]
  %s17 = inlined_call_operand.vmem [shape: f32[128,128], index: 17, kind: input, shape index: {}]
  %s18 = inlined_call_operand.vmem [shape: f32[1,128], index: 18, kind: input, shape index: {}]
  %s19 = inlined_call_operand.vmem [shape: f32[2,128], index: 19, kind: output, shape index: {0}]
  %s20 = inlined_call_operand.vmem [shape: f32[2,128], index: 20, kind: output, shape index: {1}]
  %s21 = inlined_call_operand.vmem [shape: f32[2,128], index: 21, kind: output, shape index: {2}]
  %22 = xla_tuple %s19, %s20, %s21
  %s23 = sld [smem:[#allocation0]]
  $region102: #{ggap_cpi_ablation_forward.1} parent=0
    _
  %s25 = ssub.s32 1, %s23
  %s26 = scalar_select 0, %s25, %s23
  // Predicated region
  $region2: #{ggap_cpi_ablation_forward.1} parent=0 // pred_check
    _
  $region3: #{ggap_cpi_ablation_forward.1} parent=0 // pred_check_branch
    %28 = sbr.rel (0) target = $region5
  $region4: #{ggap_cpi_ablation_forward.1} parent=0 // pred_region
    _
  $region5: #{ggap_cpi_ablation_forward.1} parent=0 // pred_fallthru
    _
  // Predicated region
  $region6: #{ggap_cpi_ablation_forward.1} parent=0 // pred_check
    _
  $region7: #{ggap_cpi_ablation_forward.1} parent=0 // pred_check_branch
    %30 = sbr.rel (0) target = $region9
  $region8: #{ggap_cpi_ablation_forward.1} parent=0 // pred_region
    _
  $region9: #{ggap_cpi_ablation_forward.1} parent=0 // pred_fallthru
    _
  // Predicated region
  $region10: #{ggap_cpi_ablation_forward.1} parent=0 // pred_check
    _
  $region11: #{ggap_cpi_ablation_forward.1} parent=0 // pred_check_branch
    %32 = sbr.rel (0) target = $region13
  $region12: #{ggap_cpi_ablation_forward.1} parent=0 // pred_region
    _
  $region13: #{ggap_cpi_ablation_forward.1} parent=0 // pred_fallthru
    _
  // Predicated region
  $region14: #{ggap_cpi_ablation_forward.1} parent=0 // pred_check
    _
  $region15: #{ggap_cpi_ablation_forward.1} parent=0 // pred_check_branch
    %34 = sbr.rel (0) target = $region17
  $region16: #{ggap_cpi_ablation_forward.1} parent=0 // pred_region
    _
  $region17: #{ggap_cpi_ablation_forward.1} parent=0 // pred_fallthru
    _
  // Predicated region
  $region18: #{ggap_cpi_ablation_forward.1} parent=0 // pred_check
    _
  $region19: #{ggap_cpi_ablation_forward.1} parent=0 // pred_check_branch
    %36 = sbr.rel (0) target = $region21
  $region20: #{ggap_cpi_ablation_forward.1} parent=0 // pred_region
    _
  $region21: #{ggap_cpi_ablation_forward.1} parent=0 // pred_fallthru
    _
  // Predicated region
  $region22: #{ggap_cpi_ablation_forward.1} parent=0 // pred_check
    _
  $region23: #{ggap_cpi_ablation_forward.1} parent=0 // pred_check_branch
    %38 = sbr.rel (0) target = $region25
  $region24: #{ggap_cpi_ablation_forward.1} parent=0 // pred_region
    _
  $region25: #{ggap_cpi_ablation_forward.1} parent=0 // pred_fallthru
    _
  // Predicated region
  $region26: #{ggap_cpi_ablation_forward.1} parent=0 // pred_check
    _
  $region27: #{ggap_cpi_ablation_forward.1} parent=0 // pred_check_branch
    %40 = sbr.rel (0) target = $region29
  $region28: #{ggap_cpi_ablation_forward.1} parent=0 // pred_region
    _
  $region29: #{ggap_cpi_ablation_forward.1} parent=0 // pred_fallthru
    _
  // Predicated region
  $region30: #{ggap_cpi_ablation_forward.1} parent=0 // pred_check
    _
  $region31: #{ggap_cpi_ablation_forward.1} parent=0 // pred_check_branch
    %42 = sbr.rel (0) target = $region33
  $region32: #{ggap_cpi_ablation_forward.1} parent=0 // pred_region
    _
  $region33: #{ggap_cpi_ablation_forward.1} parent=0 // pred_fallthru
    _
  // Predicated region
  $region34: #{ggap_cpi_ablation_forward.1} parent=0 // pred_check
    _
  $region35: #{ggap_cpi_ablation_forward.1} parent=0 // pred_check_branch
    %44 = sbr.rel (0) target = $region37
  $region36: #{ggap_cpi_ablation_forward.1} parent=0 // pred_region
    _
  $region37: #{ggap_cpi_ablation_forward.1} parent=0 // pred_fallthru
    _
  // Predicated region
  $region38: #{ggap_cpi_ablation_forward.1} parent=0 // pred_check
    _
  $region39: #{ggap_cpi_ablation_forward.1} parent=0 // pred_check_branch
    %46 = sbr.rel (0) target = $region41
  $region40: #{ggap_cpi_ablation_forward.1} parent=0 // pred_region
    _
  $region41: #{ggap_cpi_ablation_forward.1} parent=0 // pred_fallthru
    _
  // Predicated region
  $region42: #{ggap_cpi_ablation_forward.1} parent=0 // pred_check
    _
  $region43: #{ggap_cpi_ablation_forward.1} parent=0 // pred_check_branch
    %48 = sbr.rel (0) target = $region45
  $region44: #{ggap_cpi_ablation_forward.1} parent=0 // pred_region
    _
  $region45: #{ggap_cpi_ablation_forward.1} parent=0 // pred_fallthru
    _
  // Predicated region
  $region46: #{ggap_cpi_ablation_forward.1} parent=0 // pred_check
    _
  $region47: #{ggap_cpi_ablation_forward.1} parent=0 // pred_check_branch
    %50 = sbr.rel (0) target = $region49
  $region48: #{ggap_cpi_ablation_forward.1} parent=0 // pred_region
    _
  $region49: #{ggap_cpi_ablation_forward.1} parent=0 // pred_fallthru
    _
  // Predicated region
  $region50: #{ggap_cpi_ablation_forward.1} parent=0 // pred_check
    _
  $region51: #{ggap_cpi_ablation_forward.1} parent=0 // pred_check_branch
    %52 = sbr.rel (0) target = $region53
  $region52: #{ggap_cpi_ablation_forward.1} parent=0 // pred_region
    _
  $region53: #{ggap_cpi_ablation_forward.1} parent=0 // pred_fallthru
    _
  // Predicated region
  $region54: #{ggap_cpi_ablation_forward.1} parent=0 // pred_check
    _
  $region55: #{ggap_cpi_ablation_forward.1} parent=0 // pred_check_branch
    %54 = sbr.rel (0) target = $region57
  $region56: #{ggap_cpi_ablation_forward.1} parent=0 // pred_region
    _
  $region57: #{ggap_cpi_ablation_forward.1} parent=0 // pred_fallthru
    _
  // Predicated region
  $region58: #{ggap_cpi_ablation_forward.1} parent=0 // pred_check
    _
  $region59: #{ggap_cpi_ablation_forward.1} parent=0 // pred_check_branch
    %56 = sbr.rel (0) target = $region61
  $region60: #{ggap_cpi_ablation_forward.1} parent=0 // pred_region
    _
  $region61: #{ggap_cpi_ablation_forward.1} parent=0 // pred_fallthru
    _
  // Predicated region
  $region62: #{ggap_cpi_ablation_forward.1} parent=0 // pred_check
    _
  $region63: #{ggap_cpi_ablation_forward.1} parent=0 // pred_check_branch
    %58 = sbr.rel (0) target = $region65
  $region64: #{ggap_cpi_ablation_forward.1} parent=0 // pred_region
    _
  $region65: #{ggap_cpi_ablation_forward.1} parent=0 // pred_fallthru
    _
  // Predicated region
  $region66: #{ggap_cpi_ablation_forward.1} parent=0 // pred_check
    _
  $region67: #{ggap_cpi_ablation_forward.1} parent=0 // pred_check_branch
    %60 = sbr.rel (0) target = $region69
  $region68: #{ggap_cpi_ablation_forward.1} parent=0 // pred_region
    _
  $region69: #{ggap_cpi_ablation_forward.1} parent=0 // pred_fallthru
    _
  // Predicated region
  $region70: #{ggap_cpi_ablation_forward.1} parent=0 // pred_check
    _
  $region71: #{ggap_cpi_ablation_forward.1} parent=0 // pred_check_branch
    %62 = sbr.rel (0) target = $region73
  $region72: #{ggap_cpi_ablation_forward.1} parent=0 // pred_region
    _
  $region73: #{ggap_cpi_ablation_forward.1} parent=0 // pred_fallthru
    _
  // Predicated region
  $region74: #{ggap_cpi_ablation_forward.1} parent=0 // pred_check
    _
  $region75: #{ggap_cpi_ablation_forward.1} parent=0 // pred_check_branch
    %64 = sbr.rel (0) target = $region77
  $region76: #{ggap_cpi_ablation_forward.1} parent=0 // pred_region
    _
  $region77: #{ggap_cpi_ablation_forward.1} parent=0 // pred_fallthru
    _
  %v65 = vld [vmem:[%s0] sm:$0xff]
  %v66 = vld [vmem:[%s0 + $0x8] sm:$0xff]
  %v67 = vld [vmem:[%s0 + $0x10] sm:$0xff]
  %v68 = vld [vmem:[%s0 + $0x18] sm:$0xff]
  %v69 = vld [vmem:[%s3] sm:$0xff]
  %v70 = vld [vmem:[%s3 + $0x8] sm:$0xff]
  %v71 = vld [vmem:[%s3 + $0x10] sm:$0xff]
  %v72 = vld [vmem:[%s3 + $0x18] sm:$0xff]
  %v73 = vld [vmem:[%s3 + $0x20] sm:$0xff]
  %v74 = vld [vmem:[%s3 + $0x28] sm:$0xff]
  %v75 = vld [vmem:[%s3 + $0x30] sm:$0xff]
  %v76 = vld [vmem:[%s3 + $0x38] sm:$0xff]
  %v77 = vld [vmem:[%s3 + $0x40] sm:$0xff]
  %v78 = vld [vmem:[%s3 + $0x48] sm:$0xff]
  %v79 = vld [vmem:[%s3 + $0x50] sm:$0xff]
  %v80 = vld [vmem:[%s3 + $0x58] sm:$0xff]
  %v81 = vld [vmem:[%s3 + $0x60] sm:$0xff]
  %v82 = vld [vmem:[%s3 + $0x68] sm:$0xff]
  %v83 = vld [vmem:[%s3 + $0x70] sm:$0xff]
  %v84 = vld [vmem:[%s3 + $0x78] sm:$0xff]
  %v85 = vld [vmem:[%s4] sm:$0x1]
  %v87 = vlaneseq
  %v88 = vshrl.u32 %v87, 7
  %v89 = vsub.s32 0, %v88
  %v90 = vrot.slane %v85, %v89
  %92 = vmatprep.subr.mxu0 0.0
  %93 = vmatpush1.msra.mxu0 %v69
  %94 = vmatprep.subr.mxu0 0.0
  %95 = vmatpush1.msra.mxu0 %v70
  %96 = vmatprep.subr.mxu0 0.0
  %97 = vmatpush1.msra.mxu0 %v71
  %98 = vmatprep.subr.mxu0 0.0
  %99 = vmatpush1.msra.mxu0 %v72
  %100 = vmatprep.subr.mxu0 0.0
  %101 = vmatpush1.msra.mxu0 %v73
  %102 = vmatprep.subr.mxu0 0.0
  %103 = vmatpush1.msra.mxu0 %v74
  %104 = vmatprep.subr.mxu0 0.0
  %105 = vmatpush1.msra.mxu0 %v75
  %106 = vmatprep.subr.mxu0 0.0
  %107 = vmatpush1.msra.mxu0 %v76
  %108 = vmatprep.subr.mxu0 0.0
  %109 = vmatpush1.msra.mxu0 %v77
  %110 = vmatprep.subr.mxu0 0.0
  %111 = vmatpush1.msra.mxu0 %v78
  %112 = vmatprep.subr.mxu0 0.0
  %113 = vmatpush1.msra.mxu0 %v79
  %114 = vmatprep.subr.mxu0 0.0
  %115 = vmatpush1.msra.mxu0 %v80
  %116 = vmatprep.subr.mxu0 0.0
  %117 = vmatpush1.msra.mxu0 %v81
  %118 = vmatprep.subr.mxu0 0.0
  %119 = vmatpush1.msra.mxu0 %v82
  %120 = vmatprep.subr.mxu0 0.0
  %121 = vmatpush1.msra.mxu0 %v83
  %122 = vmatprep.subr.mxu0 0.0
  %123 = vmatpush1.msra.mxu0 %v84
  %124 = vmatprep.subr.mxu0 0.0
  %125 = vmatpush1.msra.mxu0 0.0
  %126 = vmatprep.subr.mxu0 0.0
  %127 = vmatpush1.msra.mxu0 0.0
  %128 = vmatprep.subr.mxu0 0.0
  %129 = vmatpush1.msra.mxu0 0.0
  %130 = vmatprep.subr.mxu0 0.0
  %131 = vmatpush1.msra.mxu0 0.0
  %132 = vmatprep.subr.mxu0 0.0
  %133 = vmatpush1.msra.mxu0 0.0
  %134 = vmatprep.subr.mxu0 0.0
  %135 = vmatpush1.msra.mxu0 0.0
  %136 = vmatprep.subr.mxu0 0.0
  %137 = vmatpush1.msra.mxu0 0.0
  %138 = vmatprep.subr.mxu0 0.0
  %139 = vmatpush1.msra.mxu0 0.0
  %140 = vmatprep.subr.mxu0 0.0
  %141 = vmatpush1.msra.mxu0 0.0
  %142 = vmatprep.subr.mxu0 0.0
  %143 = vmatpush1.msra.mxu0 0.0
  %144 = vmatprep.subr.mxu0 0.0
  %145 = vmatpush1.msra.mxu0 0.0
  %146 = vmatprep.subr.mxu0 0.0
  %147 = vmatpush1.msra.mxu0 0.0
  %148 = vmatprep.subr.mxu0 0.0
  %149 = vmatpush1.msra.mxu0 0.0
  %150 = vmatprep.subr.mxu0 0.0
  %151 = vmatpush1.msra.mxu0 0.0
  %152 = vmatprep.subr.mxu0 0.0
  %153 = vmatpush1.msra.mxu0 0.0
  %154 = vmatprep.subr.mxu0 0.0
  %155 = vmatpush1.msra.mxu0 0.0
  %156 = vmatprep.mubr.f32.mxu0 0.0
  %157 = vmatmul.mubr.f32.gmra.mrb[0].mxu0 %v65
  %v158 = vpop.f32.mrb[0].mxu0
  %v159 = vadd.f32 %v90, %v158
  %v160 = vpop.f32.mrb[0].mxu0
  %161 = vmatprep.mubr.f32.mxu0 0.0
  %162 = vmatmul.mubr.f32.gmra.mrb[0].mxu0 %v66
  %v163 = vpop.f32.mrb[0].mxu0
  %v164 = vadd.f32 %v90, %v163
  %v165 = vpop.f32.mrb[0].mxu0
  %166 = vmatprep.mubr.f32.mxu0 0.0
  %167 = vmatmul.mubr.f32.gmra.mrb[0].mxu0 %v67
  %v168 = vpop.f32.mrb[0].mxu0
  %v169 = vadd.f32 %v90, %v168
  %v170 = vpop.f32.mrb[0].mxu0
  %171 = vmatprep.mubr.f32.mxu0 0.0
  %172 = vmatmul.mubr.f32.gmra.mrb[0].mxu0 %v68
  %v173 = vpop.f32.mrb[0].mxu0
  %v174 = vadd.f32 %v90, %v173
  %v175 = vpop.f32.mrb[0].mxu0
  %176 = vdwg.mxu0
  %v177 = vadd.f32 %v159, %v164
  %v178 = vrot.slane %v177, 4
  %v179 = vadd.f32 %v177, %v178
  %v180 = vrot.slane %v179, 2
  %v181 = vadd.f32 %v179, %v180
  %v182 = vrot.slane %v181, 1
  %v183 = vadd.f32 %v181, %v182
  %v184 = vadd.f32 %v169, %v174
  %v185 = vrot.slane %v184, 4
  %v186 = vadd.f32 %v184, %v185
  %v187 = vrot.slane %v186, 2
  %v188 = vadd.f32 %v186, %v187
  %v189 = vrot.slane %v188, 1
  %v190 = vadd.f32 %v188, %v189
  %v191 = vmul.f32 %v183, 0.0625
  %v192 = vmul.f32 %v190, 0.0625
  %vm195 = vcmask 1041409
  %v196 = vsel %vm195, %v192, %v191
  %198 = vst [vmem:[%s20] sm:$0x3] %v196
  %v199 = vld [vmem:[%s1] sm:$0xff]
  %v200 = vld [vmem:[%s1 + $0x8] sm:$0xff]
  %v201 = vld [vmem:[%s5] sm:$0xff]
  %v202 = vld [vmem:[%s5 + $0x8] sm:$0xff]
  %v203 = vld [vmem:[%s5 + $0x10] sm:$0xff]
  %v204 = vld [vmem:[%s5 + $0x18] sm:$0xff]
  %v205 = vld [vmem:[%s5 + $0x20] sm:$0xff]
  %v206 = vld [vmem:[%s5 + $0x28] sm:$0xff]
  %v207 = vld [vmem:[%s5 + $0x30] sm:$0xff]
  %v208 = vld [vmem:[%s5 + $0x38] sm:$0xff]
  %v209 = vld [vmem:[%s5 + $0x40] sm:$0xff]
  %v210 = vld [vmem:[%s5 + $0x48] sm:$0xff]
  %v211 = vld [vmem:[%s5 + $0x50] sm:$0xff]
  %v212 = vld [vmem:[%s5 + $0x58] sm:$0xff]
  %v213 = vld [vmem:[%s5 + $0x60] sm:$0xff]
  %v214 = vld [vmem:[%s5 + $0x68] sm:$0xff]
  %v215 = vld [vmem:[%s5 + $0x70] sm:$0xff]
  %v216 = vld [vmem:[%s5 + $0x78] sm:$0xff]
  %v217 = vld [vmem:[%s5 + $0x80] sm:$0xff]
  %v218 = vld [vmem:[%s5 + $0x88] sm:$0xff]
  %v219 = vld [vmem:[%s5 + $0x90] sm:$0xff]
  %v220 = vld [vmem:[%s5 + $0x98] sm:$0xff]
  %v221 = vld [vmem:[%s5 + $0xa0] sm:$0xff]
  %v222 = vld [vmem:[%s5 + $0xa8] sm:$0xff]
  %v223 = vld [vmem:[%s5 + $0xb0] sm:$0xff]
  %v224 = vld [vmem:[%s5 + $0xb8] sm:$0xff]
  %v225 = vld [vmem:[%s5 + $0xc0] sm:$0xff]
  %v226 = vld [vmem:[%s5 + $0xc8] sm:$0xff]
  %v227 = vld [vmem:[%s5 + $0xd0] sm:$0xff]
  %v228 = vld [vmem:[%s5 + $0xd8] sm:$0xff]
  %v229 = vld [vmem:[%s5 + $0xe0] sm:$0xff]
  %v230 = vld [vmem:[%s5 + $0xe8] sm:$0xff]
  %v231 = vld [vmem:[%s5 + $0xf0] sm:$0xff]
  %v232 = vld [vmem:[%s5 + $0xf8] sm:$0xff]
  %v233 = vld [vmem:[%s5 + $0x100] sm:$0xff]
  %v234 = vld [vmem:[%s5 + $0x108] sm:$0xff]
  %v235 = vld [vmem:[%s5 + $0x110] sm:$0xff]
  %v236 = vld [vmem:[%s5 + $0x118] sm:$0xff]
  %v237 = vld [vmem:[%s5 + $0x120] sm:$0xff]
  %v238 = vld [vmem:[%s5 + $0x128] sm:$0xff]
  %v239 = vld [vmem:[%s5 + $0x130] sm:$0xff]
  %v240 = vld [vmem:[%s5 + $0x138] sm:$0xff]
  %v241 = vld [vmem:[%s5 + $0x140] sm:$0xff]
  %v242 = vld [vmem:[%s5 + $0x148] sm:$0xff]
  %v243 = vld [vmem:[%s5 + $0x150] sm:$0xff]
  %v244 = vld [vmem:[%s5 + $0x158] sm:$0xff]
  %v245 = vld [vmem:[%s5 + $0x160] sm:$0xff]
  %v246 = vld [vmem:[%s5 + $0x168] sm:$0xff]
  %v247 = vld [vmem:[%s5 + $0x170] sm:$0xff]
  %v248 = vld [vmem:[%s5 + $0x178] sm:$0xff]
  %v249 = vld [vmem:[%s5 + $0x180] sm:$0xff]
  %v250 = vld [vmem:[%s5 + $0x188] sm:$0xff]
  %v251 = vld [vmem:[%s5 + $0x190] sm:$0xff]
  %v252 = vld [vmem:[%s5 + $0x198] sm:$0xff]
  %v253 = vld [vmem:[%s5 + $0x1a0] sm:$0xff]
  %v254 = vld [vmem:[%s5 + $0x1a8] sm:$0xff]
  %v255 = vld [vmem:[%s5 + $0x1b0] sm:$0xff]
  %v256 = vld [vmem:[%s5 + $0x1b8] sm:$0xff]
  %v257 = vld [vmem:[%s5 + $0x1c0] sm:$0xff]
  %v258 = vld [vmem:[%s5 + $0x1c8] sm:$0xff]
  %v259 = vld [vmem:[%s5 + $0x1d0] sm:$0xff]
  %v260 = vld [vmem:[%s5 + $0x1d8] sm:$0xff]
  %v261 = vld [vmem:[%s5 + $0x1e0] sm:$0xff]
  %v262 = vld [vmem:[%s5 + $0x1e8] sm:$0xff]
  %v263 = vld [vmem:[%s5 + $0x1f0] sm:$0xff]
  %v264 = vld [vmem:[%s5 + $0x1f8] sm:$0xff]
  %v265 = vld [vmem:[%s6] sm:$0xf]
  %v267 = vlaneseq
  %v268 = vshrl.u32 %v267, 7
  %v269 = vsub.s32 0, %v268
  %v270 = vrot.slane %v265, %v269
  %v271 = vlaneseq
  %v272 = vshrl.u32 %v271, 7
  %v273 = vsub.s32 1, %v272
  %v274 = vrot.slane %v265, %v273
  %v275 = vlaneseq
  %v276 = vshrl.u32 %v275, 7
  %v277 = vsub.s32 2, %v276
  %v278 = vrot.slane %v265, %v277
  %v279 = vlaneseq
  %v280 = vshrl.u32 %v279, 7
  %v281 = vsub.s32 3, %v280
  %v282 = vrot.slane %v265, %v281
  %287 = vmatprep.subr.mxu0 %v202
  %288 = vmatpush1.msra.mxu0 %v201
  %289 = vmatprep.subr.mxu0 %v206
  %290 = vmatpush1.msra.mxu0 %v205
  %291 = vmatprep.subr.mxu0 %v210
  %292 = vmatpush1.msra.mxu0 %v209
  %293 = vmatprep.subr.mxu0 %v214
  %294 = vmatpush1.msra.mxu0 %v213
  %295 = vmatprep.subr.mxu0 %v218
  %296 = vmatpush1.msra.mxu0 %v217
  %297 = vmatprep.subr.mxu0 %v222
  %298 = vmatpush1.msra.mxu0 %v221
  %299 = vmatprep.subr.mxu0 %v226
  %300 = vmatpush1.msra.mxu0 %v225
  %301 = vmatprep.subr.mxu0 %v230
  %302 = vmatpush1.msra.mxu0 %v229
  %303 = vmatprep.subr.mxu0 %v234
  %304 = vmatpush1.msra.mxu0 %v233
  %305 = vmatprep.subr.mxu0 %v238
  %306 = vmatpush1.msra.mxu0 %v237
  %307 = vmatprep.subr.mxu0 %v242
  %308 = vmatpush1.msra.mxu0 %v241
  %309 = vmatprep.subr.mxu0 %v246
  %310 = vmatpush1.msra.mxu0 %v245
  %311 = vmatprep.subr.mxu0 %v250
  %312 = vmatpush1.msra.mxu0 %v249
  %313 = vmatprep.subr.mxu0 %v254
  %314 = vmatpush1.msra.mxu0 %v253
  %315 = vmatprep.subr.mxu0 %v258
  %316 = vmatpush1.msra.mxu0 %v257
  %317 = vmatprep.subr.mxu0 %v262
  %318 = vmatpush1.msra.mxu0 %v261
  %319 = vmatprep.subr.mxu0 0.0
  %320 = vmatpush1.msra.mxu0 0.0
  %321 = vmatprep.subr.mxu0 0.0
  %322 = vmatpush1.msra.mxu0 0.0
  %323 = vmatprep.subr.mxu0 0.0
  %324 = vmatpush1.msra.mxu0 0.0
  %325 = vmatprep.subr.mxu0 0.0
  %326 = vmatpush1.msra.mxu0 0.0
  %327 = vmatprep.subr.mxu0 0.0
  %328 = vmatpush1.msra.mxu0 0.0
  %329 = vmatprep.subr.mxu0 0.0
  %330 = vmatpush1.msra.mxu0 0.0
  %331 = vmatprep.subr.mxu0 0.0
  %332 = vmatpush1.msra.mxu0 0.0
  %333 = vmatprep.subr.mxu0 0.0
  %334 = vmatpush1.msra.mxu0 0.0
  %335 = vmatprep.subr.mxu0 0.0
  %336 = vmatpush1.msra.mxu0 0.0
  %337 = vmatprep.subr.mxu0 0.0
  %338 = vmatpush1.msra.mxu0 0.0
  %339 = vmatprep.subr.mxu0 0.0
  %340 = vmatpush1.msra.mxu0 0.0
  %341 = vmatprep.subr.mxu0 0.0
  %342 = vmatpush1.msra.mxu0 0.0
  %343 = vmatprep.subr.mxu0 0.0
  %344 = vmatpush1.msra.mxu0 0.0
  %345 = vmatprep.subr.mxu0 0.0
  %346 = vmatpush1.msra.mxu0 0.0
  %347 = vmatprep.subr.mxu0 0.0
  %348 = vmatpush1.msra.mxu0 0.0
  %349 = vmatprep.subr.mxu0 0.0
  %350 = vmatpush1.msra.mxu0 0.0
  %351 = vmatprep.mubr.f32.mxu0 0.0
  %352 = vmatmul.mubr.f32.gmra.mrb[0].mxu0 %v199
  %v353 = vpop.f32.mrb[0].mxu0
  %v354 = vadd.f32 %v270, %v353
  %v355 = vpop.f32.mrb[0].mxu0
  %v356 = vadd.f32 %v274, %v355
  %357 = vmatprep.mubr.f32.mxu0 0.0
  %358 = vmatmul.mubr.f32.gmra.mrb[0].mxu0 %v200
  %v359 = vpop.f32.mrb[0].mxu0
  %v360 = vadd.f32 %v270, %v359
  %v361 = vpop.f32.mrb[0].mxu0
  %v362 = vadd.f32 %v274, %v361
  %363 = vdwg.mxu0
  %364 = vmatprep.subr.mxu0 %v204
  %365 = vmatpush1.msra.mxu0 %v203
  %366 = vmatprep.subr.mxu0 %v208
  %367 = vmatpush1.msra.mxu0 %v207
  %368 = vmatprep.subr.mxu0 %v212
  %369 = vmatpush1.msra.mxu0 %v211
  %370 = vmatprep.subr.mxu0 %v216
  %371 = vmatpush1.msra.mxu0 %v215
  %372 = vmatprep.subr.mxu0 %v220
  %373 = vmatpush1.msra.mxu0 %v219
  %374 = vmatprep.subr.mxu0 %v224
  %375 = vmatpush1.msra.mxu0 %v223
  %376 = vmatprep.subr.mxu0 %v228
  %377 = vmatpush1.msra.mxu0 %v227
  %378 = vmatprep.subr.mxu0 %v232
  %379 = vmatpush1.msra.mxu0 %v231
  %380 = vmatprep.subr.mxu0 %v236
  %381 = vmatpush1.msra.mxu0 %v235
  %382 = vmatprep.subr.mxu0 %v240
  %383 = vmatpush1.msra.mxu0 %v239
  %384 = vmatprep.subr.mxu0 %v244
  %385 = vmatpush1.msra.mxu0 %v243
  %386 = vmatprep.subr.mxu0 %v248
  %387 = vmatpush1.msra.mxu0 %v247
  %388 = vmatprep.subr.mxu0 %v252
  %389 = vmatpush1.msra.mxu0 %v251
  %390 = vmatprep.subr.mxu0 %v256
  %391 = vmatpush1.msra.mxu0 %v255
  %392 = vmatprep.subr.mxu0 %v260
  %393 = vmatpush1.msra.mxu0 %v259
  %394 = vmatprep.subr.mxu0 %v264
  %395 = vmatpush1.msra.mxu0 %v263
  %396 = vmatprep.subr.mxu0 0.0
  %397 = vmatpush1.msra.mxu0 0.0
  %398 = vmatprep.subr.mxu0 0.0
  %399 = vmatpush1.msra.mxu0 0.0
  %400 = vmatprep.subr.mxu0 0.0
  %401 = vmatpush1.msra.mxu0 0.0
  %402 = vmatprep.subr.mxu0 0.0
  %403 = vmatpush1.msra.mxu0 0.0
  %404 = vmatprep.subr.mxu0 0.0
  %405 = vmatpush1.msra.mxu0 0.0
  %406 = vmatprep.subr.mxu0 0.0
  %407 = vmatpush1.msra.mxu0 0.0
  %408 = vmatprep.subr.mxu0 0.0
  %409 = vmatpush1.msra.mxu0 0.0
  %410 = vmatprep.subr.mxu0 0.0
  %411 = vmatpush1.msra.mxu0 0.0
  %412 = vmatprep.subr.mxu0 0.0
  %413 = vmatpush1.msra.mxu0 0.0
  %414 = vmatprep.subr.mxu0 0.0
  %415 = vmatpush1.msra.mxu0 0.0
  %416 = vmatprep.subr.mxu0 0.0
  %417 = vmatpush1.msra.mxu0 0.0
  %418 = vmatprep.subr.mxu0 0.0
  %419 = vmatpush1.msra.mxu0 0.0
  %420 = vmatprep.subr.mxu0 0.0
  %421 = vmatpush1.msra.mxu0 0.0
  %422 = vmatprep.subr.mxu0 0.0
  %423 = vmatpush1.msra.mxu0 0.0
  %424 = vmatprep.subr.mxu0 0.0
  %425 = vmatpush1.msra.mxu0 0.0
  %426 = vmatprep.subr.mxu0 0.0
  %427 = vmatpush1.msra.mxu0 0.0
  %428 = vmatprep.mubr.f32.mxu0 0.0
  %429 = vmatmul.mubr.f32.gmra.mrb[0].mxu0 %v199
  %v430 = vpop.f32.mrb[0].mxu0
  %v431 = vadd.f32 %v278, %v430
  %v432 = vpop.f32.mrb[0].mxu0
  %v433 = vadd.f32 %v282, %v432
  %434 = vmatprep.mubr.f32.mxu0 0.0
  %435 = vmatmul.mubr.f32.gmra.mrb[0].mxu0 %v200
  %v436 = vpop.f32.mrb[0].mxu0
  %v437 = vadd.f32 %v278, %v436
  %v438 = vpop.f32.mrb[0].mxu0
  %v439 = vadd.f32 %v282, %v438
  %440 = vdwg.mxu0
  %v441 = vld [vmem:[%s7] sm:$0xff]
  %v442 = vld [vmem:[%s7 + $0x8] sm:$0xff]
  %v443 = vld [vmem:[%s7 + $0x10] sm:$0xff]
  %v444 = vld [vmem:[%s7 + $0x18] sm:$0xff]
  %v445 = vld [vmem:[%s7 + $0x20] sm:$0xff]
  %v446 = vld [vmem:[%s7 + $0x28] sm:$0xff]
  %v447 = vld [vmem:[%s7 + $0x30] sm:$0xff]
  %v448 = vld [vmem:[%s7 + $0x38] sm:$0xff]
  %v449 = vld [vmem:[%s7 + $0x40] sm:$0xff]
  %v450 = vld [vmem:[%s7 + $0x48] sm:$0xff]
  %v451 = vld [vmem:[%s7 + $0x50] sm:$0xff]
  %v452 = vld [vmem:[%s7 + $0x58] sm:$0xff]
  %v453 = vld [vmem:[%s7 + $0x60] sm:$0xff]
  %v454 = vld [vmem:[%s7 + $0x68] sm:$0xff]
  %v455 = vld [vmem:[%s7 + $0x70] sm:$0xff]
  %v456 = vld [vmem:[%s7 + $0x78] sm:$0xff]
  %v457 = vld [vmem:[%s7 + $0x80] sm:$0xff]
  %v458 = vld [vmem:[%s7 + $0x88] sm:$0xff]
  %v459 = vld [vmem:[%s7 + $0x90] sm:$0xff]
  %v460 = vld [vmem:[%s7 + $0x98] sm:$0xff]
  %v461 = vld [vmem:[%s7 + $0xa0] sm:$0xff]
  %v462 = vld [vmem:[%s7 + $0xa8] sm:$0xff]
  %v463 = vld [vmem:[%s7 + $0xb0] sm:$0xff]
  %v464 = vld [vmem:[%s7 + $0xb8] sm:$0xff]
  %v465 = vld [vmem:[%s7 + $0xc0] sm:$0xff]
  %v466 = vld [vmem:[%s7 + $0xc8] sm:$0xff]
  %v467 = vld [vmem:[%s7 + $0xd0] sm:$0xff]
  %v468 = vld [vmem:[%s7 + $0xd8] sm:$0xff]
  %v469 = vld [vmem:[%s7 + $0xe0] sm:$0xff]
  %v470 = vld [vmem:[%s7 + $0xe8] sm:$0xff]
  %v471 = vld [vmem:[%s7 + $0xf0] sm:$0xff]
  %v472 = vld [vmem:[%s7 + $0xf8] sm:$0xff]
  %v473 = vld [vmem:[%s7 + $0x100] sm:$0xff]
  %v474 = vld [vmem:[%s7 + $0x108] sm:$0xff]
  %v475 = vld [vmem:[%s7 + $0x110] sm:$0xff]
  %v476 = vld [vmem:[%s7 + $0x118] sm:$0xff]
  %v477 = vld [vmem:[%s7 + $0x120] sm:$0xff]
  %v478 = vld [vmem:[%s7 + $0x128] sm:$0xff]
  %v479 = vld [vmem:[%s7 + $0x130] sm:$0xff]
  %v480 = vld [vmem:[%s7 + $0x138] sm:$0xff]
  %v481 = vld [vmem:[%s7 + $0x140] sm:$0xff]
  %v482 = vld [vmem:[%s7 + $0x148] sm:$0xff]
  %v483 = vld [vmem:[%s7 + $0x150] sm:$0xff]
  %v484 = vld [vmem:[%s7 + $0x158] sm:$0xff]
  %v485 = vld [vmem:[%s7 + $0x160] sm:$0xff]
  %v486 = vld [vmem:[%s7 + $0x168] sm:$0xff]
  %v487 = vld [vmem:[%s7 + $0x170] sm:$0xff]
  %v488 = vld [vmem:[%s7 + $0x178] sm:$0xff]
  %v489 = vld [vmem:[%s7 + $0x180] sm:$0xff]
  %v490 = vld [vmem:[%s7 + $0x188] sm:$0xff]
  %v491 = vld [vmem:[%s7 + $0x190] sm:$0xff]
  %v492 = vld [vmem:[%s7 + $0x198] sm:$0xff]
  %v493 = vld [vmem:[%s7 + $0x1a0] sm:$0xff]
  %v494 = vld [vmem:[%s7 + $0x1a8] sm:$0xff]
  %v495 = vld [vmem:[%s7 + $0x1b0] sm:$0xff]
  %v496 = vld [vmem:[%s7 + $0x1b8] sm:$0xff]
  %v497 = vld [vmem:[%s7 + $0x1c0] sm:$0xff]
  %v498 = vld [vmem:[%s7 + $0x1c8] sm:$0xff]
  %v499 = vld [vmem:[%s7 + $0x1d0] sm:$0xff]
  %v500 = vld [vmem:[%s7 + $0x1d8] sm:$0xff]
  %v501 = vld [vmem:[%s7 + $0x1e0] sm:$0xff]
  %v502 = vld [vmem:[%s7 + $0x1e8] sm:$0xff]
  %v503 = vld [vmem:[%s7 + $0x1f0] sm:$0xff]
  %v504 = vld [vmem:[%s7 + $0x1f8] sm:$0xff]
  %v505 = vld [vmem:[%s8] sm:$0xf]
  %v507 = vlaneseq
  %v508 = vshrl.u32 %v507, 7
  %v509 = vsub.s32 0, %v508
  %v510 = vrot.slane %v505, %v509
  %v511 = vlaneseq
  %v512 = vshrl.u32 %v511, 7
  %v513 = vsub.s32 1, %v512
  %v514 = vrot.slane %v505, %v513
  %v515 = vlaneseq
  %v516 = vshrl.u32 %v515, 7
  %v517 = vsub.s32 2, %v516
  %v518 = vrot.slane %v505, %v517
  %v519 = vlaneseq
  %v520 = vshrl.u32 %v519, 7
  %v521 = vsub.s32 3, %v520
  %v522 = vrot.slane %v505, %v521
  %527 = vmatprep.subr.mxu0 %v442
  %528 = vmatpush1.msra.mxu0 %v441
  %529 = vmatprep.subr.mxu0 %v446
  %530 = vmatpush1.msra.mxu0 %v445
  %531 = vmatprep.subr.mxu0 %v450
  %532 = vmatpush1.msra.mxu0 %v449
  %533 = vmatprep.subr.mxu0 %v454
  %534 = vmatpush1.msra.mxu0 %v453
  %535 = vmatprep.subr.mxu0 %v458
  %536 = vmatpush1.msra.mxu0 %v457
  %537 = vmatprep.subr.mxu0 %v462
  %538 = vmatpush1.msra.mxu0 %v461
  %539 = vmatprep.subr.mxu0 %v466
  %540 = vmatpush1.msra.mxu0 %v465
  %541 = vmatprep.subr.mxu0 %v470
  %542 = vmatpush1.msra.mxu0 %v469
  %543 = vmatprep.subr.mxu0 %v474
  %544 = vmatpush1.msra.mxu0 %v473
  %545 = vmatprep.subr.mxu0 %v478
  %546 = vmatpush1.msra.mxu0 %v477
  %547 = vmatprep.subr.mxu0 %v482
  %548 = vmatpush1.msra.mxu0 %v481
  %549 = vmatprep.subr.mxu0 %v486
  %550 = vmatpush1.msra.mxu0 %v485
  %551 = vmatprep.subr.mxu0 %v490
  %552 = vmatpush1.msra.mxu0 %v489
  %553 = vmatprep.subr.mxu0 %v494
  %554 = vmatpush1.msra.mxu0 %v493
  %555 = vmatprep.subr.mxu0 %v498
  %556 = vmatpush1.msra.mxu0 %v497
  %557 = vmatprep.subr.mxu0 %v502
  %558 = vmatpush1.msra.mxu0 %v501
  %559 = vmatprep.subr.mxu0 0.0
  %560 = vmatpush1.msra.mxu0 0.0
  %561 = vmatprep.subr.mxu0 0.0
  %562 = vmatpush1.msra.mxu0 0.0
  %563 = vmatprep.subr.mxu0 0.0
  %564 = vmatpush1.msra.mxu0 0.0
  %565 = vmatprep.subr.mxu0 0.0
  %566 = vmatpush1.msra.mxu0 0.0
  %567 = vmatprep.subr.mxu0 0.0
  %568 = vmatpush1.msra.mxu0 0.0
  %569 = vmatprep.subr.mxu0 0.0
  %570 = vmatpush1.msra.mxu0 0.0
  %571 = vmatprep.subr.mxu0 0.0
  %572 = vmatpush1.msra.mxu0 0.0
  %573 = vmatprep.subr.mxu0 0.0
  %574 = vmatpush1.msra.mxu0 0.0
  %575 = vmatprep.subr.mxu0 0.0
  %576 = vmatpush1.msra.mxu0 0.0
  %577 = vmatprep.subr.mxu0 0.0
  %578 = vmatpush1.msra.mxu0 0.0
  %579 = vmatprep.subr.mxu0 0.0
  %580 = vmatpush1.msra.mxu0 0.0
  %581 = vmatprep.subr.mxu0 0.0
  %582 = vmatpush1.msra.mxu0 0.0
  %583 = vmatprep.subr.mxu0 0.0
  %584 = vmatpush1.msra.mxu0 0.0
  %585 = vmatprep.subr.mxu0 0.0
  %586 = vmatpush1.msra.mxu0 0.0
  %587 = vmatprep.subr.mxu0 0.0
  %588 = vmatpush1.msra.mxu0 0.0
  %589 = vmatprep.subr.mxu0 0.0
  %590 = vmatpush1.msra.mxu0 0.0
  %591 = vmatprep.mubr.f32.mxu0 0.0
  %592 = vmatmul.mubr.f32.gmra.mrb[0].mxu0 %v159
  %v593 = vpop.f32.mrb[0].mxu0
  %v594 = vadd.f32 %v510, %v593
  %v595 = vpop.f32.mrb[0].mxu0
  %v596 = vadd.f32 %v514, %v595
  %597 = vmatprep.mubr.f32.mxu0 0.0
  %598 = vmatmul.mubr.f32.gmra.mrb[0].mxu0 %v164
  %v599 = vpop.f32.mrb[0].mxu0
  %v600 = vadd.f32 %v510, %v599
  %v601 = vpop.f32.mrb[0].mxu0
  %v602 = vadd.f32 %v514, %v601
  %603 = vmatprep.mubr.f32.mxu0 0.0
  %604 = vmatmul.mubr.f32.gmra.mrb[0].mxu0 %v169
  %v605 = vpop.f32.mrb[0].mxu0
  %v606 = vadd.f32 %v510, %v605
  %v607 = vpop.f32.mrb[0].mxu0
  %v608 = vadd.f32 %v514, %v607
  %609 = vmatprep.mubr.f32.mxu0 0.0
  %610 = vmatmul.mubr.f32.gmra.mrb[0].mxu0 %v174
  %v611 = vpop.f32.mrb[0].mxu0
  %v612 = vadd.f32 %v510, %v611
  %v613 = vpop.f32.mrb[0].mxu0
  %v614 = vadd.f32 %v514, %v613
  %615 = vdwg.mxu0
  %616 = vmatprep.subr.mxu0 %v444
  %617 = vmatpush1.msra.mxu0 %v443
  %618 = vmatprep.subr.mxu0 %v448
  %619 = vmatpush1.msra.mxu0 %v447
  %620 = vmatprep.subr.mxu0 %v452
  %621 = vmatpush1.msra.mxu0 %v451
  %622 = vmatprep.subr.mxu0 %v456
  %623 = vmatpush1.msra.mxu0 %v455
  %624 = vmatprep.subr.mxu0 %v460
  %625 = vmatpush1.msra.mxu0 %v459
  %626 = vmatprep.subr.mxu0 %v464
  %627 = vmatpush1.msra.mxu0 %v463
  %628 = vmatprep.subr.mxu0 %v468
  %629 = vmatpush1.msra.mxu0 %v467
  %630 = vmatprep.subr.mxu0 %v472
  %631 = vmatpush1.msra.mxu0 %v471
  %632 = vmatprep.subr.mxu0 %v476
  %633 = vmatpush1.msra.mxu0 %v475
  %634 = vmatprep.subr.mxu0 %v480
  %635 = vmatpush1.msra.mxu0 %v479
  %636 = vmatprep.subr.mxu0 %v484
  %637 = vmatpush1.msra.mxu0 %v483
  %638 = vmatprep.subr.mxu0 %v488
  %639 = vmatpush1.msra.mxu0 %v487
  %640 = vmatprep.subr.mxu0 %v492
  %641 = vmatpush1.msra.mxu0 %v491
  %642 = vmatprep.subr.mxu0 %v496
  %643 = vmatpush1.msra.mxu0 %v495
  %644 = vmatprep.subr.mxu0 %v500
  %645 = vmatpush1.msra.mxu0 %v499
  %646 = vmatprep.subr.mxu0 %v504
  %647 = vmatpush1.msra.mxu0 %v503
  %648 = vmatprep.subr.mxu0 0.0
  %649 = vmatpush1.msra.mxu0 0.0
  %650 = vmatprep.subr.mxu0 0.0
  %651 = vmatpush1.msra.mxu0 0.0
  %652 = vmatprep.subr.mxu0 0.0
  %653 = vmatpush1.msra.mxu0 0.0
  %654 = vmatprep.subr.mxu0 0.0
  %655 = vmatpush1.msra.mxu0 0.0
  %656 = vmatprep.subr.mxu0 0.0
  %657 = vmatpush1.msra.mxu0 0.0
  %658 = vmatprep.subr.mxu0 0.0
  %659 = vmatpush1.msra.mxu0 0.0
  %660 = vmatprep.subr.mxu0 0.0
  %661 = vmatpush1.msra.mxu0 0.0
  %662 = vmatprep.subr.mxu0 0.0
  %663 = vmatpush1.msra.mxu0 0.0
  %664 = vmatprep.subr.mxu0 0.0
  %665 = vmatpush1.msra.mxu0 0.0
  %666 = vmatprep.subr.mxu0 0.0
  %667 = vmatpush1.msra.mxu0 0.0
  %668 = vmatprep.subr.mxu0 0.0
  %669 = vmatpush1.msra.mxu0 0.0
  %670 = vmatprep.subr.mxu0 0.0
  %671 = vmatpush1.msra.mxu0 0.0
  %672 = vmatprep.subr.mxu0 0.0
  %673 = vmatpush1.msra.mxu0 0.0
  %674 = vmatprep.subr.mxu0 0.0
  %675 = vmatpush1.msra.mxu0 0.0
  %676 = vmatprep.subr.mxu0 0.0
  %677 = vmatpush1.msra.mxu0 0.0
  %678 = vmatprep.subr.mxu0 0.0
  %679 = vmatpush1.msra.mxu0 0.0
  %680 = vmatprep.mubr.f32.mxu0 0.0
  %681 = vmatmul.mubr.f32.gmra.mrb[0].mxu0 %v159
  %v682 = vpop.f32.mrb[0].mxu0
  %v683 = vadd.f32 %v518, %v682
  %v684 = vpop.f32.mrb[0].mxu0
  %v685 = vadd.f32 %v522, %v684
  %686 = vmatprep.mubr.f32.mxu0 0.0
  %687 = vmatmul.mubr.f32.gmra.mrb[0].mxu0 %v164
  %v688 = vpop.f32.mrb[0].mxu0
  %v689 = vadd.f32 %v518, %v688
  %v690 = vpop.f32.mrb[0].mxu0
  %v691 = vadd.f32 %v522, %v690
  %692 = vmatprep.mubr.f32.mxu0 0.0
  %693 = vmatmul.mubr.f32.gmra.mrb[0].mxu0 %v169
  %v694 = vpop.f32.mrb[0].mxu0
  %v695 = vadd.f32 %v518, %v694
  %v696 = vpop.f32.mrb[0].mxu0
  %v697 = vadd.f32 %v522, %v696
  %698 = vmatprep.mubr.f32.mxu0 0.0
  %699 = vmatmul.mubr.f32.gmra.mrb[0].mxu0 %v174
  %v700 = vpop.f32.mrb[0].mxu0
  %v701 = vadd.f32 %v518, %v700
  %v702 = vpop.f32.mrb[0].mxu0
  %v703 = vadd.f32 %v522, %v702
  %704 = vdwg.mxu0
  %v705 = vld [vmem:[%s9] sm:$0xff]
  %v706 = vld [vmem:[%s9 + $0x8] sm:$0xff]
  %v707 = vld [vmem:[%s9 + $0x10] sm:$0xff]
  %v708 = vld [vmem:[%s9 + $0x18] sm:$0xff]
  %v709 = vld [vmem:[%s9 + $0x20] sm:$0xff]
  %v710 = vld [vmem:[%s9 + $0x28] sm:$0xff]
  %v711 = vld [vmem:[%s9 + $0x30] sm:$0xff]
  %v712 = vld [vmem:[%s9 + $0x38] sm:$0xff]
  %v713 = vld [vmem:[%s9 + $0x40] sm:$0xff]
  %v714 = vld [vmem:[%s9 + $0x48] sm:$0xff]
  %v715 = vld [vmem:[%s9 + $0x50] sm:$0xff]
  %v716 = vld [vmem:[%s9 + $0x58] sm:$0xff]
  %v717 = vld [vmem:[%s9 + $0x60] sm:$0xff]
  %v718 = vld [vmem:[%s9 + $0x68] sm:$0xff]
  %v719 = vld [vmem:[%s9 + $0x70] sm:$0xff]
  %v720 = vld [vmem:[%s9 + $0x78] sm:$0xff]
  %v721 = vld [vmem:[%s9 + $0x80] sm:$0xff]
  %v722 = vld [vmem:[%s9 + $0x88] sm:$0xff]
  %v723 = vld [vmem:[%s9 + $0x90] sm:$0xff]
  %v724 = vld [vmem:[%s9 + $0x98] sm:$0xff]
  %v725 = vld [vmem:[%s9 + $0xa0] sm:$0xff]
  %v726 = vld [vmem:[%s9 + $0xa8] sm:$0xff]
  %v727 = vld [vmem:[%s9 + $0xb0] sm:$0xff]
  %v728 = vld [vmem:[%s9 + $0xb8] sm:$0xff]
  %v729 = vld [vmem:[%s9 + $0xc0] sm:$0xff]
  %v730 = vld [vmem:[%s9 + $0xc8] sm:$0xff]
  %v731 = vld [vmem:[%s9 + $0xd0] sm:$0xff]
  %v732 = vld [vmem:[%s9 + $0xd8] sm:$0xff]
  %v733 = vld [vmem:[%s9 + $0xe0] sm:$0xff]
  %v734 = vld [vmem:[%s9 + $0xe8] sm:$0xff]
  %v735 = vld [vmem:[%s9 + $0xf0] sm:$0xff]
  %v736 = vld [vmem:[%s9 + $0xf8] sm:$0xff]
  %v737 = vld [vmem:[%s9 + $0x100] sm:$0xff]
  %v738 = vld [vmem:[%s9 + $0x108] sm:$0xff]
  %v739 = vld [vmem:[%s9 + $0x110] sm:$0xff]
  %v740 = vld [vmem:[%s9 + $0x118] sm:$0xff]
  %v741 = vld [vmem:[%s9 + $0x120] sm:$0xff]
  %v742 = vld [vmem:[%s9 + $0x128] sm:$0xff]
  %v743 = vld [vmem:[%s9 + $0x130] sm:$0xff]
  %v744 = vld [vmem:[%s9 + $0x138] sm:$0xff]
  %v745 = vld [vmem:[%s9 + $0x140] sm:$0xff]
  %v746 = vld [vmem:[%s9 + $0x148] sm:$0xff]
  %v747 = vld [vmem:[%s9 + $0x150] sm:$0xff]
  %v748 = vld [vmem:[%s9 + $0x158] sm:$0xff]
  %v749 = vld [vmem:[%s9 + $0x160] sm:$0xff]
  %v750 = vld [vmem:[%s9 + $0x168] sm:$0xff]
  %v751 = vld [vmem:[%s9 + $0x170] sm:$0xff]
  %v752 = vld [vmem:[%s9 + $0x178] sm:$0xff]
  %v753 = vld [vmem:[%s9 + $0x180] sm:$0xff]
  %v754 = vld [vmem:[%s9 + $0x188] sm:$0xff]
  %v755 = vld [vmem:[%s9 + $0x190] sm:$0xff]
  %v756 = vld [vmem:[%s9 + $0x198] sm:$0xff]
  %v757 = vld [vmem:[%s9 + $0x1a0] sm:$0xff]
  %v758 = vld [vmem:[%s9 + $0x1a8] sm:$0xff]
  %v759 = vld [vmem:[%s9 + $0x1b0] sm:$0xff]
  %v760 = vld [vmem:[%s9 + $0x1b8] sm:$0xff]
  %v761 = vld [vmem:[%s9 + $0x1c0] sm:$0xff]
  %v762 = vld [vmem:[%s9 + $0x1c8] sm:$0xff]
  %v763 = vld [vmem:[%s9 + $0x1d0] sm:$0xff]
  %v764 = vld [vmem:[%s9 + $0x1d8] sm:$0xff]
  %v765 = vld [vmem:[%s9 + $0x1e0] sm:$0xff]
  %v766 = vld [vmem:[%s9 + $0x1e8] sm:$0xff]
  %v767 = vld [vmem:[%s9 + $0x1f0] sm:$0xff]
  %v768 = vld [vmem:[%s9 + $0x1f8] sm:$0xff]
  %v769 = vld [vmem:[%s10] sm:$0xf]
  %v771 = vlaneseq
  %v772 = vshrl.u32 %v771, 7
  %v773 = vsub.s32 0, %v772
  %v774 = vrot.slane %v769, %v773
  %v775 = vlaneseq
  %v776 = vshrl.u32 %v775, 7
  %v777 = vsub.s32 1, %v776
  %v778 = vrot.slane %v769, %v777
  %v779 = vlaneseq
  %v780 = vshrl.u32 %v779, 7
  %v781 = vsub.s32 2, %v780
  %v782 = vrot.slane %v769, %v781
  %v783 = vlaneseq
  %v784 = vshrl.u32 %v783, 7
  %v785 = vsub.s32 3, %v784
  %v786 = vrot.slane %v769, %v785
  %791 = vmatprep.subr.mxu0 %v706
  %792 = vmatpush1.msra.mxu0 %v705
  %793 = vmatprep.subr.mxu0 %v710
  %794 = vmatpush1.msra.mxu0 %v709
  %795 = vmatprep.subr.mxu0 %v714
  %796 = vmatpush1.msra.mxu0 %v713
  %797 = vmatprep.subr.mxu0 %v718
  %798 = vmatpush1.msra.mxu0 %v717
  %799 = vmatprep.subr.mxu0 %v722
  %800 = vmatpush1.msra.mxu0 %v721
  %801 = vmatprep.subr.mxu0 %v726
  %802 = vmatpush1.msra.mxu0 %v725
  %803 = vmatprep.subr.mxu0 %v730
  %804 = vmatpush1.msra.mxu0 %v729
  %805 = vmatprep.subr.mxu0 %v734
  %806 = vmatpush1.msra.mxu0 %v733
  %807 = vmatprep.subr.mxu0 %v738
  %808 = vmatpush1.msra.mxu0 %v737
  %809 = vmatprep.subr.mxu0 %v742
  %810 = vmatpush1.msra.mxu0 %v741
  %811 = vmatprep.subr.mxu0 %v746
  %812 = vmatpush1.msra.mxu0 %v745
  %813 = vmatprep.subr.mxu0 %v750
  %814 = vmatpush1.msra.mxu0 %v749
  %815 = vmatprep.subr.mxu0 %v754
  %816 = vmatpush1.msra.mxu0 %v753
  %817 = vmatprep.subr.mxu0 %v758
  %818 = vmatpush1.msra.mxu0 %v757
  %819 = vmatprep.subr.mxu0 %v762
  %820 = vmatpush1.msra.mxu0 %v761
  %821 = vmatprep.subr.mxu0 %v766
  %822 = vmatpush1.msra.mxu0 %v765
  %823 = vmatprep.subr.mxu0 0.0
  %824 = vmatpush1.msra.mxu0 0.0
  %825 = vmatprep.subr.mxu0 0.0
  %826 = vmatpush1.msra.mxu0 0.0
  %827 = vmatprep.subr.mxu0 0.0
  %828 = vmatpush1.msra.mxu0 0.0
  %829 = vmatprep.subr.mxu0 0.0
  %830 = vmatpush1.msra.mxu0 0.0
  %831 = vmatprep.subr.mxu0 0.0
  %832 = vmatpush1.msra.mxu0 0.0
  %833 = vmatprep.subr.mxu0 0.0
  %834 = vmatpush1.msra.mxu0 0.0
  %835 = vmatprep.subr.mxu0 0.0
  %836 = vmatpush1.msra.mxu0 0.0
  %837 = vmatprep.subr.mxu0 0.0
  %838 = vmatpush1.msra.mxu0 0.0
  %839 = vmatprep.subr.mxu0 0.0
  %840 = vmatpush1.msra.mxu0 0.0
  %841 = vmatprep.subr.mxu0 0.0
  %842 = vmatpush1.msra.mxu0 0.0
  %843 = vmatprep.subr.mxu0 0.0
  %844 = vmatpush1.msra.mxu0 0.0
  %845 = vmatprep.subr.mxu0 0.0
  %846 = vmatpush1.msra.mxu0 0.0
  %847 = vmatprep.subr.mxu0 0.0
  %848 = vmatpush1.msra.mxu0 0.0
  %849 = vmatprep.subr.mxu0 0.0
  %850 = vmatpush1.msra.mxu0 0.0
  %851 = vmatprep.subr.mxu0 0.0
  %852 = vmatpush1.msra.mxu0 0.0
  %853 = vmatprep.subr.mxu0 0.0
  %854 = vmatpush1.msra.mxu0 0.0
  %855 = vmatprep.mubr.f32.mxu0 0.0
  %856 = vmatmul.mubr.f32.gmra.mrb[0].mxu0 %v159
  %v857 = vpop.f32.mrb[0].mxu0
  %v858 = vadd.f32 %v774, %v857
  %v859 = vpop.f32.mrb[0].mxu0
  %v860 = vadd.f32 %v778, %v859
  %861 = vmatprep.mubr.f32.mxu0 0.0
  %862 = vmatmul.mubr.f32.gmra.mrb[0].mxu0 %v164
  %v863 = vpop.f32.mrb[0].mxu0
  %v864 = vadd.f32 %v774, %v863
  %v865 = vpop.f32.mrb[0].mxu0
  %v866 = vadd.f32 %v778, %v865
  %867 = vmatprep.mubr.f32.mxu0 0.0
  %868 = vmatmul.mubr.f32.gmra.mrb[0].mxu0 %v169
  %v869 = vpop.f32.mrb[0].mxu0
  %v870 = vadd.f32 %v774, %v869
  %v871 = vpop.f32.mrb[0].mxu0
  %v872 = vadd.f32 %v778, %v871
  %873 = vmatprep.mubr.f32.mxu0 0.0
  %874 = vmatmul.mubr.f32.gmra.mrb[0].mxu0 %v174
  %v875 = vpop.f32.mrb[0].mxu0
  %v876 = vadd.f32 %v774, %v875
  %v877 = vpop.f32.mrb[0].mxu0
  %v878 = vadd.f32 %v778, %v877
  %879 = vdwg.mxu0
  %880 = vmatprep.subr.mxu0 %v708
  %881 = vmatpush1.msra.mxu0 %v707
  %882 = vmatprep.subr.mxu0 %v712
  %883 = vmatpush1.msra.mxu0 %v711
  %884 = vmatprep.subr.mxu0 %v716
  %885 = vmatpush1.msra.mxu0 %v715
  %886 = vmatprep.subr.mxu0 %v720
  %887 = vmatpush1.msra.mxu0 %v719
  %888 = vmatprep.subr.mxu0 %v724
  %889 = vmatpush1.msra.mxu0 %v723
  %890 = vmatprep.subr.mxu0 %v728
  %891 = vmatpush1.msra.mxu0 %v727
  %892 = vmatprep.subr.mxu0 %v732
  %893 = vmatpush1.msra.mxu0 %v731
  %894 = vmatprep.subr.mxu0 %v736
  %895 = vmatpush1.msra.mxu0 %v735
  %896 = vmatprep.subr.mxu0 %v740
  %897 = vmatpush1.msra.mxu0 %v739
  %898 = vmatprep.subr.mxu0 %v744
  %899 = vmatpush1.msra.mxu0 %v743
  %900 = vmatprep.subr.mxu0 %v748
  %901 = vmatpush1.msra.mxu0 %v747
  %902 = vmatprep.subr.mxu0 %v752
  %903 = vmatpush1.msra.mxu0 %v751
  %904 = vmatprep.subr.mxu0 %v756
  %905 = vmatpush1.msra.mxu0 %v755
  %906 = vmatprep.subr.mxu0 %v760
  %907 = vmatpush1.msra.mxu0 %v759
  %908 = vmatprep.subr.mxu0 %v764
  %909 = vmatpush1.msra.mxu0 %v763
  %910 = vmatprep.subr.mxu0 %v768
  %911 = vmatpush1.msra.mxu0 %v767
  %912 = vmatprep.subr.mxu0 0.0
  %913 = vmatpush1.msra.mxu0 0.0
  %914 = vmatprep.subr.mxu0 0.0
  %915 = vmatpush1.msra.mxu0 0.0
  %916 = vmatprep.subr.mxu0 0.0
  %917 = vmatpush1.msra.mxu0 0.0
  %918 = vmatprep.subr.mxu0 0.0
  %919 = vmatpush1.msra.mxu0 0.0
  %920 = vmatprep.subr.mxu0 0.0
  %921 = vmatpush1.msra.mxu0 0.0
  %922 = vmatprep.subr.mxu0 0.0
  %923 = vmatpush1.msra.mxu0 0.0
  %924 = vmatprep.subr.mxu0 0.0
  %925 = vmatpush1.msra.mxu0 0.0
  %926 = vmatprep.subr.mxu0 0.0
  %927 = vmatpush1.msra.mxu0 0.0
  %928 = vmatprep.subr.mxu0 0.0
  %929 = vmatpush1.msra.mxu0 0.0
  %930 = vmatprep.subr.mxu0 0.0
  %931 = vmatpush1.msra.mxu0 0.0
  %932 = vmatprep.subr.mxu0 0.0
  %933 = vmatpush1.msra.mxu0 0.0
  %934 = vmatprep.subr.mxu0 0.0
  %935 = vmatpush1.msra.mxu0 0.0
  %936 = vmatprep.subr.mxu0 0.0
  %937 = vmatpush1.msra.mxu0 0.0
  %938 = vmatprep.subr.mxu0 0.0
  %939 = vmatpush1.msra.mxu0 0.0
  %940 = vmatprep.subr.mxu0 0.0
  %941 = vmatpush1.msra.mxu0 0.0
  %942 = vmatprep.subr.mxu0 0.0
  %943 = vmatpush1.msra.mxu0 0.0
  %944 = vmatprep.mubr.f32.mxu0 0.0
  %945 = vmatmul.mubr.f32.gmra.mrb[0].mxu0 %v159
  %v946 = vpop.f32.mrb[0].mxu0
  %v947 = vadd.f32 %v782, %v946
  %v948 = vpop.f32.mrb[0].mxu0
  %v949 = vadd.f32 %v786, %v948
  %950 = vmatprep.mubr.f32.mxu0 0.0
  %951 = vmatmul.mubr.f32.gmra.mrb[0].mxu0 %v164
  %v952 = vpop.f32.mrb[0].mxu0
  %v953 = vadd.f32 %v782, %v952
  %v954 = vpop.f32.mrb[0].mxu0
  %v955 = vadd.f32 %v786, %v954
  %956 = vmatprep.mubr.f32.mxu0 0.0
  %957 = vmatmul.mubr.f32.gmra.mrb[0].mxu0 %v169
  %v958 = vpop.f32.mrb[0].mxu0
  %v959 = vadd.f32 %v782, %v958
  %v960 = vpop.f32.mrb[0].mxu0
  %v961 = vadd.f32 %v786, %v960
  %962 = vmatprep.mubr.f32.mxu0 0.0
  %963 = vmatmul.mubr.f32.gmra.mrb[0].mxu0 %v174
  %v964 = vpop.f32.mrb[0].mxu0
  %v965 = vadd.f32 %v782, %v964
  %v966 = vpop.f32.mrb[0].mxu0
  %v967 = vadd.f32 %v786, %v966
  %968 = vdwg.mxu0
  %969 = vmatprep.subr.mxu0 0.0
  %970 = vmatpush1.xpose.msra.mxu0 %v594
  %971 = vmatprep.subr.mxu0 0.0
  %972 = vmatpush1.xpose.msra.mxu0 %v600
  %973 = vmatprep.subr.mxu0 0.0
  %974 = vmatpush1.xpose.msra.mxu0 0.0
  %975 = vmatprep.subr.mxu0 0.0
  %976 = vmatpush1.xpose.msra.mxu0 0.0
  %977 = vmatprep.subr.mxu0 0.0
  %978 = vmatpush1.xpose.msra.mxu0 0.0
  %979 = vmatprep.subr.mxu0 0.0
  %980 = vmatpush1.xpose.msra.mxu0 0.0
  %981 = vmatprep.subr.mxu0 0.0
  %982 = vmatpush1.xpose.msra.mxu0 0.0
  %983 = vmatprep.subr.mxu0 0.0
  %984 = vmatpush1.xpose.msra.mxu0 0.0
  %985 = vmatprep.subr.mxu0 0.0
  %986 = vmatpush1.xpose.msra.mxu0 0.0
  %987 = vmatprep.subr.mxu0 0.0
  %988 = vmatpush1.xpose.msra.mxu0 0.0
  %989 = vmatprep.subr.mxu0 0.0
  %990 = vmatpush1.xpose.msra.mxu0 0.0
  %991 = vmatprep.subr.mxu0 0.0
  %992 = vmatpush1.xpose.msra.mxu0 0.0
  %993 = vmatprep.subr.mxu0 0.0
  %994 = vmatpush1.xpose.msra.mxu0 0.0
  %995 = vmatprep.subr.mxu0 0.0
  %996 = vmatpush1.xpose.msra.mxu0 0.0
  %997 = vmatprep.subr.mxu0 0.0
  %998 = vmatpush1.xpose.msra.mxu0 0.0
  %999 = vmatprep.subr.mxu0 0.0
  %1000 = vmatpush1.xpose.msra.mxu0 0.0
  %1001 = vmatprep.subr.mxu0 0.0
  %1002 = vmatpush1.xpose.msra.mxu0 0.0
  %1003 = vmatprep.subr.mxu0 0.0
  %1004 = vmatpush1.xpose.msra.mxu0 0.0
  %1005 = vmatprep.subr.mxu0 0.0
  %1006 = vmatpush1.xpose.msra.mxu0 0.0
  %1007 = vmatprep.subr.mxu0 0.0
  %1008 = vmatpush1.xpose.msra.mxu0 0.0
  %1009 = vmatprep.subr.mxu0 0.0
  %1010 = vmatpush1.xpose.msra.mxu0 0.0
  %1011 = vmatprep.subr.mxu0 0.0
  %1012 = vmatpush1.xpose.msra.mxu0 0.0
  %1013 = vmatprep.subr.mxu0 0.0
  %1014 = vmatpush1.xpose.msra.mxu0 0.0
  %1015 = vmatprep.subr.mxu0 0.0
  %1016 = vmatpush1.xpose.msra.mxu0 0.0
  %1017 = vmatprep.subr.mxu0 0.0
  %1018 = vmatpush1.xpose.msra.mxu0 0.0
  %1019 = vmatprep.subr.mxu0 0.0
  %1020 = vmatpush1.xpose.msra.mxu0 0.0
  %1021 = vmatprep.subr.mxu0 0.0
  %1022 = vmatpush1.xpose.msra.mxu0 0.0
  %1023 = vmatprep.subr.mxu0 0.0
  %1024 = vmatpush1.xpose.msra.mxu0 0.0
  %1025 = vmatprep.subr.mxu0 0.0
  %1026 = vmatpush1.xpose.msra.mxu0 0.0
  %1027 = vmatprep.subr.mxu0 0.0
  %1028 = vmatpush1.xpose.msra.mxu0 0.0
  %1029 = vmatprep.subr.mxu0 0.0
  %1030 = vmatpush1.xpose.msra.mxu0 0.0
  %1031 = vmatprep.subr.mxu0 0.0
  %1032 = vmatpush1.xpose.msra.mxu0 0.0
  %1033 = vmatprep.mubr.f32.mxu0 0.0
  %1034 = vmatmul.mubr.f32.gmra.mrb[0].mxu0 %v354
  %v1035 = vpop.f32.mrb[0].mxu0
  %v1036 = vadd.f32 0.0, %v1035
  %v1037 = vpop.f32.mrb[0].mxu0
  %1038 = vdwg.mxu0
  %1039 = vmatprep.subr.mxu0 0.0
  %1040 = vmatpush1.xpose.msra.mxu0 %v606
  %1041 = vmatprep.subr.mxu0 0.0
  %1042 = vmatpush1.xpose.msra.mxu0 %v612
  %1043 = vmatprep.subr.mxu0 0.0
  %1044 = vmatpush1.xpose.msra.mxu0 0.0
  %1045 = vmatprep.subr.mxu0 0.0
  %1046 = vmatpush1.xpose.msra.mxu0 0.0
  %1047 = vmatprep.subr.mxu0 0.0
  %1048 = vmatpush1.xpose.msra.mxu0 0.0
  %1049 = vmatprep.subr.mxu0 0.0
  %1050 = vmatpush1.xpose.msra.mxu0 0.0
  %1051 = vmatprep.subr.mxu0 0.0
  %1052 = vmatpush1.xpose.msra.mxu0 0.0
  %1053 = vmatprep.subr.mxu0 0.0
  %1054 = vmatpush1.xpose.msra.mxu0 0.0
  %1055 = vmatprep.subr.mxu0 0.0
  %1056 = vmatpush1.xpose.msra.mxu0 0.0
  %1057 = vmatprep.subr.mxu0 0.0
  %1058 = vmatpush1.xpose.msra.mxu0 0.0
  %1059 = vmatprep.subr.mxu0 0.0
  %1060 = vmatpush1.xpose.msra.mxu0 0.0
  %1061 = vmatprep.subr.mxu0 0.0
  %1062 = vmatpush1.xpose.msra.mxu0 0.0
  %1063 = vmatprep.subr.mxu0 0.0
  %1064 = vmatpush1.xpose.msra.mxu0 0.0
  %1065 = vmatprep.subr.mxu0 0.0
  %1066 = vmatpush1.xpose.msra.mxu0 0.0
  %1067 = vmatprep.subr.mxu0 0.0
  %1068 = vmatpush1.xpose.msra.mxu0 0.0
  %1069 = vmatprep.subr.mxu0 0.0
  %1070 = vmatpush1.xpose.msra.mxu0 0.0
  %1071 = vmatprep.subr.mxu0 0.0
  %1072 = vmatpush1.xpose.msra.mxu0 0.0
  %1073 = vmatprep.subr.mxu0 0.0
  %1074 = vmatpush1.xpose.msra.mxu0 0.0
  %1075 = vmatprep.subr.mxu0 0.0
  %1076 = vmatpush1.xpose.msra.mxu0 0.0
  %1077 = vmatprep.subr.mxu0 0.0
  %1078 = vmatpush1.xpose.msra.mxu0 0.0
  %1079 = vmatprep.subr.mxu0 0.0
  %1080 = vmatpush1.xpose.msra.mxu0 0.0
  %1081 = vmatprep.subr.mxu0 0.0
  %1082 = vmatpush1.xpose.msra.mxu0 0.0
  %1083 = vmatprep.subr.mxu0 0.0
  %1084 = vmatpush1.xpose.msra.mxu0 0.0
  %1085 = vmatprep.subr.mxu0 0.0
  %1086 = vmatpush1.xpose.msra.mxu0 0.0
  %1087 = vmatprep.subr.mxu0 0.0
  %1088 = vmatpush1.xpose.msra.mxu0 0.0
  %1089 = vmatprep.subr.mxu0 0.0
  %1090 = vmatpush1.xpose.msra.mxu0 0.0
  %1091 = vmatprep.subr.mxu0 0.0
  %1092 = vmatpush1.xpose.msra.mxu0 0.0
  %1093 = vmatprep.subr.mxu0 0.0
  %1094 = vmatpush1.xpose.msra.mxu0 0.0
  %1095 = vmatprep.subr.mxu0 0.0
  %1096 = vmatpush1.xpose.msra.mxu0 0.0
  %1097 = vmatprep.subr.mxu0 0.0
  %1098 = vmatpush1.xpose.msra.mxu0 0.0
  %1099 = vmatprep.subr.mxu0 0.0
  %1100 = vmatpush1.xpose.msra.mxu0 0.0
  %1101 = vmatprep.subr.mxu0 0.0
  %1102 = vmatpush1.xpose.msra.mxu0 0.0
  %1103 = vmatprep.mubr.f32.mxu0 0.0
  %1104 = vmatmul.mubr.f32.gmra.mrb[0].mxu0 %v360
  %v1105 = vpop.f32.mrb[0].mxu0
  %v1106 = vadd.f32 0.0, %v1105
  %v1107 = vpop.f32.mrb[0].mxu0
  %1108 = vdwg.mxu0
  %v1109 = vmul.f32 %v1036, 0.35355338
  %v1110 = vmul.f32 %v1106, 0.35355338
  %vm1111 = vcmask 130048
  %v1112 = vsel %vm1111, %v1109, -inf
  %1113 = vmax.xlane.f32.xlu0 %v1112
  %v1114 = vpop.xlane.xlu0 %1113
  %v1115 = vsel %vm1111, %v1110, -inf
  %1116 = vmax.xlane.f32.xlu0 %v1115
  %v1117 = vpop.xlane.xlu0 %1116
  %v1118 = vsub.f32 %v1109, %v1114
  %v1119 = vsub.f32 %v1110, %v1117
  %v1120 = vmul.f32 %v1118, 1.442695
  %v1121 = vpow.pop %v1120
  %v1122 = vmul.f32 %v1119, 1.442695
  %v1123 = vpow.pop %v1122
  %v1124 = vsel %vm1111, %v1121, 0.0
  %1125 = vadd.xlane.f32.xlu0 %v1124
  %v1126 = vpop.xlane.xlu0 %1125
  %v1127 = vsel %vm1111, %v1123, 0.0
  %1128 = vadd.xlane.f32.xlu0 %v1127
  %v1129 = vpop.xlane.xlu0 %1128
  %v1130 = vrcp.pop %v1126
  %v1131 = vrcp.pop %v1129
  %v1132 = vmul.f32 %v1121, %v1130
  %v1133 = vmul.f32 %v1123, %v1131
  %v1135 = vsel %vm1111, %v1132, 0
  %1137 = vmatprep.subr.mxu0 0.0
  %1138 = vmatpush1.msra.mxu0 %v858
  %1139 = vmatprep.subr.mxu0 0.0
  %1140 = vmatpush1.msra.mxu0 %v864
  %1141 = vmatprep.subr.mxu0 0.0
  %1142 = vmatpush1.msra.mxu0 0.0
  %1143 = vmatprep.subr.mxu0 0.0
  %1144 = vmatpush1.msra.mxu0 0.0
  %1145 = vmatprep.subr.mxu0 0.0
  %1146 = vmatpush1.msra.mxu0 0.0
  %1147 = vmatprep.subr.mxu0 0.0
  %1148 = vmatpush1.msra.mxu0 0.0
  %1149 = vmatprep.subr.mxu0 0.0
  %1150 = vmatpush1.msra.mxu0 0.0
  %1151 = vmatprep.subr.mxu0 0.0
  %1152 = vmatpush1.msra.mxu0 0.0
  %1153 = vmatprep.subr.mxu0 0.0
  %1154 = vmatpush1.msra.mxu0 0.0
  %1155 = vmatprep.subr.mxu0 0.0
  %1156 = vmatpush1.msra.mxu0 0.0
  %1157 = vmatprep.subr.mxu0 0.0
  %1158 = vmatpush1.msra.mxu0 0.0
  %1159 = vmatprep.subr.mxu0 0.0
  %1160 = vmatpush1.msra.mxu0 0.0
  %1161 = vmatprep.subr.mxu0 0.0
  %1162 = vmatpush1.msra.mxu0 0.0
  %1163 = vmatprep.subr.mxu0 0.0
  %1164 = vmatpush1.msra.mxu0 0.0
  %1165 = vmatprep.subr.mxu0 0.0
  %1166 = vmatpush1.msra.mxu0 0.0
  %1167 = vmatprep.subr.mxu0 0.0
  %1168 = vmatpush1.msra.mxu0 0.0
  %1169 = vmatprep.subr.mxu0 0.0
  %1170 = vmatpush1.msra.mxu0 0.0
  %1171 = vmatprep.subr.mxu0 0.0
  %1172 = vmatpush1.msra.mxu0 0.0
  %1173 = vmatprep.subr.mxu0 0.0
  %1174 = vmatpush1.msra.mxu0 0.0
  %1175 = vmatprep.subr.mxu0 0.0
  %1176 = vmatpush1.msra.mxu0 0.0
  %1177 = vmatprep.subr.mxu0 0.0
  %1178 = vmatpush1.msra.mxu0 0.0
  %1179 = vmatprep.subr.mxu0 0.0
  %1180 = vmatpush1.msra.mxu0 0.0
  %1181 = vmatprep.subr.mxu0 0.0
  %1182 = vmatpush1.msra.mxu0 0.0
  %1183 = vmatprep.subr.mxu0 0.0
  %1184 = vmatpush1.msra.mxu0 0.0
  %1185 = vmatprep.subr.mxu0 0.0
  %1186 = vmatpush1.msra.mxu0 0.0
  %1187 = vmatprep.subr.mxu0 0.0
  %1188 = vmatpush1.msra.mxu0 0.0
  %1189 = vmatprep.subr.mxu0 0.0
  %1190 = vmatpush1.msra.mxu0 0.0
  %1191 = vmatprep.subr.mxu0 0.0
  %1192 = vmatpush1.msra.mxu0 0.0
  %1193 = vmatprep.subr.mxu0 0.0
  %1194 = vmatpush1.msra.mxu0 0.0
  %1195 = vmatprep.subr.mxu0 0.0
  %1196 = vmatpush1.msra.mxu0 0.0
  %1197 = vmatprep.subr.mxu0 0.0
  %1198 = vmatpush1.msra.mxu0 0.0
  %1199 = vmatprep.subr.mxu0 0.0
  %1200 = vmatpush1.msra.mxu0 0.0
  %1201 = vmatprep.mubr.f32.mxu0 0.0
  %1202 = vmatmul.mubr.f32.gmra.mrb[0].mxu0 %v1135
  %v1203 = vpop.f32.mrb[0].mxu0
  %v1204 = vadd.f32 0.0, %v1203
  %v1205 = vpop.f32.mrb[0].mxu0
  %1206 = vdwg.mxu0
  %v1208 = vsel %vm1111, %v1133, 0
  %1210 = vmatprep.subr.mxu0 0.0
  %1211 = vmatpush1.msra.mxu0 %v870
  %1212 = vmatprep.subr.mxu0 0.0
  %1213 = vmatpush1.msra.mxu0 %v876
  %1214 = vmatprep.subr.mxu0 0.0
  %1215 = vmatpush1.msra.mxu0 0.0
  %1216 = vmatprep.subr.mxu0 0.0
  %1217 = vmatpush1.msra.mxu0 0.0
  %1218 = vmatprep.subr.mxu0 0.0
  %1219 = vmatpush1.msra.mxu0 0.0
  %1220 = vmatprep.subr.mxu0 0.0
  %1221 = vmatpush1.msra.mxu0 0.0
  %1222 = vmatprep.subr.mxu0 0.0
  %1223 = vmatpush1.msra.mxu0 0.0
  %1224 = vmatprep.subr.mxu0 0.0
  %1225 = vmatpush1.msra.mxu0 0.0
  %1226 = vmatprep.subr.mxu0 0.0
  %1227 = vmatpush1.msra.mxu0 0.0
  %1228 = vmatprep.subr.mxu0 0.0
  %1229 = vmatpush1.msra.mxu0 0.0
  %1230 = vmatprep.subr.mxu0 0.0
  %1231 = vmatpush1.msra.mxu0 0.0
  %1232 = vmatprep.subr.mxu0 0.0
  %1233 = vmatpush1.msra.mxu0 0.0
  %1234 = vmatprep.subr.mxu0 0.0
  %1235 = vmatpush1.msra.mxu0 0.0
  %1236 = vmatprep.subr.mxu0 0.0
  %1237 = vmatpush1.msra.mxu0 0.0
  %1238 = vmatprep.subr.mxu0 0.0
  %1239 = vmatpush1.msra.mxu0 0.0
  %1240 = vmatprep.subr.mxu0 0.0
  %1241 = vmatpush1.msra.mxu0 0.0
  %1242 = vmatprep.subr.mxu0 0.0
  %1243 = vmatpush1.msra.mxu0 0.0
  %1244 = vmatprep.subr.mxu0 0.0
  %1245 = vmatpush1.msra.mxu0 0.0
  %1246 = vmatprep.subr.mxu0 0.0
  %1247 = vmatpush1.msra.mxu0 0.0
  %1248 = vmatprep.subr.mxu0 0.0
  %1249 = vmatpush1.msra.mxu0 0.0
  %1250 = vmatprep.subr.mxu0 0.0
  %1251 = vmatpush1.msra.mxu0 0.0
  %1252 = vmatprep.subr.mxu0 0.0
  %1253 = vmatpush1.msra.mxu0 0.0
  %1254 = vmatprep.subr.mxu0 0.0
  %1255 = vmatpush1.msra.mxu0 0.0
  %1256 = vmatprep.subr.mxu0 0.0
  %1257 = vmatpush1.msra.mxu0 0.0
  %1258 = vmatprep.subr.mxu0 0.0
  %1259 = vmatpush1.msra.mxu0 0.0
  %1260 = vmatprep.subr.mxu0 0.0
  %1261 = vmatpush1.msra.mxu0 0.0
  %1262 = vmatprep.subr.mxu0 0.0
  %1263 = vmatpush1.msra.mxu0 0.0
  %1264 = vmatprep.subr.mxu0 0.0
  %1265 = vmatpush1.msra.mxu0 0.0
  %1266 = vmatprep.subr.mxu0 0.0
  %1267 = vmatpush1.msra.mxu0 0.0
  %1268 = vmatprep.subr.mxu0 0.0
  %1269 = vmatpush1.msra.mxu0 0.0
  %1270 = vmatprep.subr.mxu0 0.0
  %1271 = vmatpush1.msra.mxu0 0.0
  %1272 = vmatprep.subr.mxu0 0.0
  %1273 = vmatpush1.msra.mxu0 0.0
  %1274 = vmatprep.mubr.f32.mxu0 0.0
  %1275 = vmatmul.mubr.f32.gmra.mrb[0].mxu0 %v1208
  %v1276 = vpop.f32.mrb[0].mxu0
  %v1277 = vadd.f32 0.0, %v1276
  %v1278 = vpop.f32.mrb[0].mxu0
  %1279 = vdwg.mxu0
  %v1280 = vld [vmem:[%s11] sm:$0xff]
  %v1281 = vld [vmem:[%s11 + $0x8] sm:$0xff]
  %v1282 = vld [vmem:[%s11 + $0x10] sm:$0xff]
  %v1283 = vld [vmem:[%s11 + $0x18] sm:$0xff]
  %v1284 = vld [vmem:[%s11 + $0x20] sm:$0xff]
  %v1285 = vld [vmem:[%s11 + $0x28] sm:$0xff]
  %v1286 = vld [vmem:[%s11 + $0x30] sm:$0xff]
  %v1287 = vld [vmem:[%s11 + $0x38] sm:$0xff]
  %v1288 = vld [vmem:[%s11 + $0x40] sm:$0xff]
  %v1289 = vld [vmem:[%s11 + $0x48] sm:$0xff]
  %v1290 = vld [vmem:[%s11 + $0x50] sm:$0xff]
  %v1291 = vld [vmem:[%s11 + $0x58] sm:$0xff]
  %v1292 = vld [vmem:[%s11 + $0x60] sm:$0xff]
  %v1293 = vld [vmem:[%s11 + $0x68] sm:$0xff]
  %v1294 = vld [vmem:[%s11 + $0x70] sm:$0xff]
  %v1295 = vld [vmem:[%s11 + $0x78] sm:$0xff]
  %1296 = vmatprep.subr.mxu0 0.0
  %1297 = vmatpush1.xpose.msra.mxu0 %v596
  %1298 = vmatprep.subr.mxu0 0.0
  %1299 = vmatpush1.xpose.msra.mxu0 %v602
  %1300 = vmatprep.subr.mxu0 0.0
  %1301 = vmatpush1.xpose.msra.mxu0 0.0
  %1302 = vmatprep.subr.mxu0 0.0
  %1303 = vmatpush1.xpose.msra.mxu0 0.0
  %1304 = vmatprep.subr.mxu0 0.0
  %1305 = vmatpush1.xpose.msra.mxu0 0.0
  %1306 = vmatprep.subr.mxu0 0.0
  %1307 = vmatpush1.xpose.msra.mxu0 0.0
  %1308 = vmatprep.subr.mxu0 0.0
  %1309 = vmatpush1.xpose.msra.mxu0 0.0
  %1310 = vmatprep.subr.mxu0 0.0
  %1311 = vmatpush1.xpose.msra.mxu0 0.0
  %1312 = vmatprep.subr.mxu0 0.0
  %1313 = vmatpush1.xpose.msra.mxu0 0.0
  %1314 = vmatprep.subr.mxu0 0.0
  %1315 = vmatpush1.xpose.msra.mxu0 0.0
  %1316 = vmatprep.subr.mxu0 0.0
  %1317 = vmatpush1.xpose.msra.mxu0 0.0
  %1318 = vmatprep.subr.mxu0 0.0
  %1319 = vmatpush1.xpose.msra.mxu0 0.0
  %1320 = vmatprep.subr.mxu0 0.0
  %1321 = vmatpush1.xpose.msra.mxu0 0.0
  %1322 = vmatprep.subr.mxu0 0.0
  %1323 = vmatpush1.xpose.msra.mxu0 0.0
  %1324 = vmatprep.subr.mxu0 0.0
  %1325 = vmatpush1.xpose.msra.mxu0 0.0
  %1326 = vmatprep.subr.mxu0 0.0
  %1327 = vmatpush1.xpose.msra.mxu0 0.0
  %1328 = vmatprep.subr.mxu0 0.0
  %1329 = vmatpush1.xpose.msra.mxu0 0.0
  %1330 = vmatprep.subr.mxu0 0.0
  %1331 = vmatpush1.xpose.msra.mxu0 0.0
  %1332 = vmatprep.subr.mxu0 0.0
  %1333 = vmatpush1.xpose.msra.mxu0 0.0
  %1334 = vmatprep.subr.mxu0 0.0
  %1335 = vmatpush1.xpose.msra.mxu0 0.0
  %1336 = vmatprep.subr.mxu0 0.0
  %1337 = vmatpush1.xpose.msra.mxu0 0.0
  %1338 = vmatprep.subr.mxu0 0.0
  %1339 = vmatpush1.xpose.msra.mxu0 0.0
  %1340 = vmatprep.subr.mxu0 0.0
  %1341 = vmatpush1.xpose.msra.mxu0 0.0
  %1342 = vmatprep.subr.mxu0 0.0
  %1343 = vmatpush1.xpose.msra.mxu0 0.0
  %1344 = vmatprep.subr.mxu0 0.0
  %1345 = vmatpush1.xpose.msra.mxu0 0.0
  %1346 = vmatprep.subr.mxu0 0.0
  %1347 = vmatpush1.xpose.msra.mxu0 0.0
  %1348 = vmatprep.subr.mxu0 0.0
  %1349 = vmatpush1.xpose.msra.mxu0 0.0
  %1350 = vmatprep.subr.mxu0 0.0
  %1351 = vmatpush1.xpose.msra.mxu0 0.0
  %1352 = vmatprep.subr.mxu0 0.0
  %1353 = vmatpush1.xpose.msra.mxu0 0.0
  %1354 = vmatprep.subr.mxu0 0.0
  %1355 = vmatpush1.xpose.msra.mxu0 0.0
  %1356 = vmatprep.subr.mxu0 0.0
  %1357 = vmatpush1.xpose.msra.mxu0 0.0
  %1358 = vmatprep.subr.mxu0 0.0
  %1359 = vmatpush1.xpose.msra.mxu0 0.0
  %1360 = vmatprep.mubr.f32.mxu0 0.0
  %1361 = vmatmul.mubr.f32.gmra.mrb[0].mxu0 %v356
  %v1362 = vpop.f32.mrb[0].mxu0
  %v1363 = vadd.f32 0.0, %v1362
  %v1364 = vpop.f32.mrb[0].mxu0
  %1365 = vdwg.mxu0
  %1366 = vmatprep.subr.mxu0 0.0
  %1367 = vmatpush1.xpose.msra.mxu0 %v608
  %1368 = vmatprep.subr.mxu0 0.0
  %1369 = vmatpush1.xpose.msra.mxu0 %v614
  %1370 = vmatprep.subr.mxu0 0.0
  %1371 = vmatpush1.xpose.msra.mxu0 0.0
  %1372 = vmatprep.subr.mxu0 0.0
  %1373 = vmatpush1.xpose.msra.mxu0 0.0
  %1374 = vmatprep.subr.mxu0 0.0
  %1375 = vmatpush1.xpose.msra.mxu0 0.0
  %1376 = vmatprep.subr.mxu0 0.0
  %1377 = vmatpush1.xpose.msra.mxu0 0.0
  %1378 = vmatprep.subr.mxu0 0.0
  %1379 = vmatpush1.xpose.msra.mxu0 0.0
  %1380 = vmatprep.subr.mxu0 0.0
  %1381 = vmatpush1.xpose.msra.mxu0 0.0
  %1382 = vmatprep.subr.mxu0 0.0
  %1383 = vmatpush1.xpose.msra.mxu0 0.0
  %1384 = vmatprep.subr.mxu0 0.0
  %1385 = vmatpush1.xpose.msra.mxu0 0.0
  %1386 = vmatprep.subr.mxu0 0.0
  %1387 = vmatpush1.xpose.msra.mxu0 0.0
  %1388 = vmatprep.subr.mxu0 0.0
  %1389 = vmatpush1.xpose.msra.mxu0 0.0
  %1390 = vmatprep.subr.mxu0 0.0
  %1391 = vmatpush1.xpose.msra.mxu0 0.0
  %1392 = vmatprep.subr.mxu0 0.0
  %1393 = vmatpush1.xpose.msra.mxu0 0.0
  %1394 = vmatprep.subr.mxu0 0.0
  %1395 = vmatpush1.xpose.msra.mxu0 0.0
  %1396 = vmatprep.subr.mxu0 0.0
  %1397 = vmatpush1.xpose.msra.mxu0 0.0
  %1398 = vmatprep.subr.mxu0 0.0
  %1399 = vmatpush1.xpose.msra.mxu0 0.0
  %1400 = vmatprep.subr.mxu0 0.0
  %1401 = vmatpush1.xpose.msra.mxu0 0.0
  %1402 = vmatprep.subr.mxu0 0.0
  %1403 = vmatpush1.xpose.msra.mxu0 0.0
  %1404 = vmatprep.subr.mxu0 0.0
  %1405 = vmatpush1.xpose.msra.mxu0 0.0
  %1406 = vmatprep.subr.mxu0 0.0
  %1407 = vmatpush1.xpose.msra.mxu0 0.0
  %1408 = vmatprep.subr.mxu0 0.0
  %1409 = vmatpush1.xpose.msra.mxu0 0.0
  %1410 = vmatprep.subr.mxu0 0.0
  %1411 = vmatpush1.xpose.msra.mxu0 0.0
  %1412 = vmatprep.subr.mxu0 0.0
  %1413 = vmatpush1.xpose.msra.mxu0 0.0
  %1414 = vmatprep.subr.mxu0 0.0
  %1415 = vmatpush1.xpose.msra.mxu0 0.0
  %1416 = vmatprep.subr.mxu0 0.0
  %1417 = vmatpush1.xpose.msra.mxu0 0.0
  %1418 = vmatprep.subr.mxu0 0.0
  %1419 = vmatpush1.xpose.msra.mxu0 0.0
  %1420 = vmatprep.subr.mxu0 0.0
  %1421 = vmatpush1.xpose.msra.mxu0 0.0
  %1422 = vmatprep.subr.mxu0 0.0
  %1423 = vmatpush1.xpose.msra.mxu0 0.0
  %1424 = vmatprep.subr.mxu0 0.0
  %1425 = vmatpush1.xpose.msra.mxu0 0.0
  %1426 = vmatprep.subr.mxu0 0.0
  %1427 = vmatpush1.xpose.msra.mxu0 0.0
  %1428 = vmatprep.subr.mxu0 0.0
  %1429 = vmatpush1.xpose.msra.mxu0 0.0
  %1430 = vmatprep.mubr.f32.mxu0 0.0
  %1431 = vmatmul.mubr.f32.gmra.mrb[0].mxu0 %v362
  %v1432 = vpop.f32.mrb[0].mxu0
  %v1433 = vadd.f32 0.0, %v1432
  %v1434 = vpop.f32.mrb[0].mxu0
  %1435 = vdwg.mxu0
  %v1436 = vmul.f32 %v1363, 0.35355338
  %v1437 = vmul.f32 %v1433, 0.35355338
  %v1438 = vsel %vm1111, %v1436, -inf
  %1439 = vmax.xlane.f32.xlu0 %v1438
  %v1440 = vpop.xlane.xlu0 %1439
  %v1441 = vsel %vm1111, %v1437, -inf
  %1442 = vmax.xlane.f32.xlu0 %v1441
  %v1443 = vpop.xlane.xlu0 %1442
  %v1444 = vsub.f32 %v1436, %v1440
  %v1445 = vsub.f32 %v1437, %v1443
  %v1446 = vmul.f32 %v1444, 1.442695
  %v1447 = vpow.pop %v1446
  %v1448 = vmul.f32 %v1445, 1.442695
  %v1449 = vpow.pop %v1448
  %v1450 = vsel %vm1111, %v1447, 0.0
  %1451 = vadd.xlane.f32.xlu0 %v1450
  %v1452 = vpop.xlane.xlu0 %1451
  %v1453 = vsel %vm1111, %v1449, 0.0
  %1454 = vadd.xlane.f32.xlu0 %v1453
  %v1455 = vpop.xlane.xlu0 %1454
  %v1456 = vrcp.pop %v1452
  %v1457 = vrcp.pop %v1455
  %v1458 = vmul.f32 %v1447, %v1456
  %v1459 = vmul.f32 %v1449, %v1457
  %v1461 = vsel %vm1111, %v1458, 0
  %1463 = vmatprep.subr.mxu0 0.0
  %1464 = vmatpush1.msra.mxu0 %v860
  %1465 = vmatprep.subr.mxu0 0.0
  %1466 = vmatpush1.msra.mxu0 %v866
  %1467 = vmatprep.subr.mxu0 0.0
  %1468 = vmatpush1.msra.mxu0 0.0
  %1469 = vmatprep.subr.mxu0 0.0
  %1470 = vmatpush1.msra.mxu0 0.0
  %1471 = vmatprep.subr.mxu0 0.0
  %1472 = vmatpush1.msra.mxu0 0.0
  %1473 = vmatprep.subr.mxu0 0.0
  %1474 = vmatpush1.msra.mxu0 0.0
  %1475 = vmatprep.subr.mxu0 0.0
  %1476 = vmatpush1.msra.mxu0 0.0
  %1477 = vmatprep.subr.mxu0 0.0
  %1478 = vmatpush1.msra.mxu0 0.0
  %1479 = vmatprep.subr.mxu0 0.0
  %1480 = vmatpush1.msra.mxu0 0.0
  %1481 = vmatprep.subr.mxu0 0.0
  %1482 = vmatpush1.msra.mxu0 0.0
  %1483 = vmatprep.subr.mxu0 0.0
  %1484 = vmatpush1.msra.mxu0 0.0
  %1485 = vmatprep.subr.mxu0 0.0
  %1486 = vmatpush1.msra.mxu0 0.0
  %1487 = vmatprep.subr.mxu0 0.0
  %1488 = vmatpush1.msra.mxu0 0.0
  %1489 = vmatprep.subr.mxu0 0.0
  %1490 = vmatpush1.msra.mxu0 0.0
  %1491 = vmatprep.subr.mxu0 0.0
  %1492 = vmatpush1.msra.mxu0 0.0
  %1493 = vmatprep.subr.mxu0 0.0
  %1494 = vmatpush1.msra.mxu0 0.0
  %1495 = vmatprep.subr.mxu0 0.0
  %1496 = vmatpush1.msra.mxu0 0.0
  %1497 = vmatprep.subr.mxu0 0.0
  %1498 = vmatpush1.msra.mxu0 0.0
  %1499 = vmatprep.subr.mxu0 0.0
  %1500 = vmatpush1.msra.mxu0 0.0
  %1501 = vmatprep.subr.mxu0 0.0
  %1502 = vmatpush1.msra.mxu0 0.0
  %1503 = vmatprep.subr.mxu0 0.0
  %1504 = vmatpush1.msra.mxu0 0.0
  %1505 = vmatprep.subr.mxu0 0.0
  %1506 = vmatpush1.msra.mxu0 0.0
  %1507 = vmatprep.subr.mxu0 0.0
  %1508 = vmatpush1.msra.mxu0 0.0
  %1509 = vmatprep.subr.mxu0 0.0
  %1510 = vmatpush1.msra.mxu0 0.0
  %1511 = vmatprep.subr.mxu0 0.0
  %1512 = vmatpush1.msra.mxu0 0.0
  %1513 = vmatprep.subr.mxu0 0.0
  %1514 = vmatpush1.msra.mxu0 0.0
  %1515 = vmatprep.subr.mxu0 0.0
  %1516 = vmatpush1.msra.mxu0 0.0
  %1517 = vmatprep.subr.mxu0 0.0
  %1518 = vmatpush1.msra.mxu0 0.0
  %1519 = vmatprep.subr.mxu0 0.0
  %1520 = vmatpush1.msra.mxu0 0.0
  %1521 = vmatprep.subr.mxu0 0.0
  %1522 = vmatpush1.msra.mxu0 0.0
  %1523 = vmatprep.subr.mxu0 0.0
  %1524 = vmatpush1.msra.mxu0 0.0
  %1525 = vmatprep.subr.mxu0 0.0
  %1526 = vmatpush1.msra.mxu0 0.0
  %1527 = vmatprep.mubr.f32.mxu0 0.0
  %1528 = vmatmul.mubr.f32.gmra.mrb[0].mxu0 %v1461
  %v1529 = vpop.f32.mrb[0].mxu0
  %v1530 = vadd.f32 0.0, %v1529
  %v1531 = vpop.f32.mrb[0].mxu0
  %1532 = vdwg.mxu0
  %v1534 = vsel %vm1111, %v1459, 0
  %1536 = vmatprep.subr.mxu0 0.0
  %1537 = vmatpush1.msra.mxu0 %v872
  %1538 = vmatprep.subr.mxu0 0.0
  %1539 = vmatpush1.msra.mxu0 %v878
  %1540 = vmatprep.subr.mxu0 0.0
  %1541 = vmatpush1.msra.mxu0 0.0
  %1542 = vmatprep.subr.mxu0 0.0
  %1543 = vmatpush1.msra.mxu0 0.0
  %1544 = vmatprep.subr.mxu0 0.0
  %1545 = vmatpush1.msra.mxu0 0.0
  %1546 = vmatprep.subr.mxu0 0.0
  %1547 = vmatpush1.msra.mxu0 0.0
  %1548 = vmatprep.subr.mxu0 0.0
  %1549 = vmatpush1.msra.mxu0 0.0
  %1550 = vmatprep.subr.mxu0 0.0
  %1551 = vmatpush1.msra.mxu0 0.0
  %1552 = vmatprep.subr.mxu0 0.0
  %1553 = vmatpush1.msra.mxu0 0.0
  %1554 = vmatprep.subr.mxu0 0.0
  %1555 = vmatpush1.msra.mxu0 0.0
  %1556 = vmatprep.subr.mxu0 0.0
  %1557 = vmatpush1.msra.mxu0 0.0
  %1558 = vmatprep.subr.mxu0 0.0
  %1559 = vmatpush1.msra.mxu0 0.0
  %1560 = vmatprep.subr.mxu0 0.0
  %1561 = vmatpush1.msra.mxu0 0.0
  %1562 = vmatprep.subr.mxu0 0.0
  %1563 = vmatpush1.msra.mxu0 0.0
  %1564 = vmatprep.subr.mxu0 0.0
  %1565 = vmatpush1.msra.mxu0 0.0
  %1566 = vmatprep.subr.mxu0 0.0
  %1567 = vmatpush1.msra.mxu0 0.0
  %1568 = vmatprep.subr.mxu0 0.0
  %1569 = vmatpush1.msra.mxu0 0.0
  %1570 = vmatprep.subr.mxu0 0.0
  %1571 = vmatpush1.msra.mxu0 0.0
  %1572 = vmatprep.subr.mxu0 0.0
  %1573 = vmatpush1.msra.mxu0 0.0
  %1574 = vmatprep.subr.mxu0 0.0
  %1575 = vmatpush1.msra.mxu0 0.0
  %1576 = vmatprep.subr.mxu0 0.0
  %1577 = vmatpush1.msra.mxu0 0.0
  %1578 = vmatprep.subr.mxu0 0.0
  %1579 = vmatpush1.msra.mxu0 0.0
  %1580 = vmatprep.subr.mxu0 0.0
  %1581 = vmatpush1.msra.mxu0 0.0
  %1582 = vmatprep.subr.mxu0 0.0
  %1583 = vmatpush1.msra.mxu0 0.0
  %1584 = vmatprep.subr.mxu0 0.0
  %1585 = vmatpush1.msra.mxu0 0.0
  %1586 = vmatprep.subr.mxu0 0.0
  %1587 = vmatpush1.msra.mxu0 0.0
  %1588 = vmatprep.subr.mxu0 0.0
  %1589 = vmatpush1.msra.mxu0 0.0
  %1590 = vmatprep.subr.mxu0 0.0
  %1591 = vmatpush1.msra.mxu0 0.0
  %1592 = vmatprep.subr.mxu0 0.0
  %1593 = vmatpush1.msra.mxu0 0.0
  %1594 = vmatprep.subr.mxu0 0.0
  %1595 = vmatpush1.msra.mxu0 0.0
  %1596 = vmatprep.subr.mxu0 0.0
  %1597 = vmatpush1.msra.mxu0 0.0
  %1598 = vmatprep.subr.mxu0 0.0
  %1599 = vmatpush1.msra.mxu0 0.0
  %1600 = vmatprep.mubr.f32.mxu0 0.0
  %1601 = vmatmul.mubr.f32.gmra.mrb[0].mxu0 %v1534
  %v1602 = vpop.f32.mrb[0].mxu0
  %v1603 = vadd.f32 0.0, %v1602
  %v1604 = vpop.f32.mrb[0].mxu0
  %1605 = vdwg.mxu0
  %v1606 = vld [vmem:[%s11 + $0x80] sm:$0xff]
  %v1607 = vld [vmem:[%s11 + $0x88] sm:$0xff]
  %v1608 = vld [vmem:[%s11 + $0x90] sm:$0xff]
  %v1609 = vld [vmem:[%s11 + $0x98] sm:$0xff]
  %v1610 = vld [vmem:[%s11 + $0xa0] sm:$0xff]
  %v1611 = vld [vmem:[%s11 + $0xa8] sm:$0xff]
  %v1612 = vld [vmem:[%s11 + $0xb0] sm:$0xff]
  %v1613 = vld [vmem:[%s11 + $0xb8] sm:$0xff]
  %v1614 = vld [vmem:[%s11 + $0xc0] sm:$0xff]
  %v1615 = vld [vmem:[%s11 + $0xc8] sm:$0xff]
  %v1616 = vld [vmem:[%s11 + $0xd0] sm:$0xff]
  %v1617 = vld [vmem:[%s11 + $0xd8] sm:$0xff]
  %v1618 = vld [vmem:[%s11 + $0xe0] sm:$0xff]
  %v1619 = vld [vmem:[%s11 + $0xe8] sm:$0xff]
  %v1620 = vld [vmem:[%s11 + $0xf0] sm:$0xff]
  %v1621 = vld [vmem:[%s11 + $0xf8] sm:$0xff]
  %1622 = vmatprep.subr.mxu0 0.0
  %1623 = vmatpush1.msra.mxu0 %v1606
  %1624 = vmatprep.subr.mxu0 0.0
  %1625 = vmatpush1.msra.mxu0 %v1607
  %1626 = vmatprep.subr.mxu0 0.0
  %1627 = vmatpush1.msra.mxu0 %v1608
  %1628 = vmatprep.subr.mxu0 0.0
  %1629 = vmatpush1.msra.mxu0 %v1609
  %1630 = vmatprep.subr.mxu0 0.0
  %1631 = vmatpush1.msra.mxu0 %v1610
  %1632 = vmatprep.subr.mxu0 0.0
  %1633 = vmatpush1.msra.mxu0 %v1611
  %1634 = vmatprep.subr.mxu0 0.0
  %1635 = vmatpush1.msra.mxu0 %v1612
  %1636 = vmatprep.subr.mxu0 0.0
  %1637 = vmatpush1.msra.mxu0 %v1613
  %1638 = vmatprep.subr.mxu0 0.0
  %1639 = vmatpush1.msra.mxu0 %v1614
  %1640 = vmatprep.subr.mxu0 0.0
  %1641 = vmatpush1.msra.mxu0 %v1615
  %1642 = vmatprep.subr.mxu0 0.0
  %1643 = vmatpush1.msra.mxu0 %v1616
  %1644 = vmatprep.subr.mxu0 0.0
  %1645 = vmatpush1.msra.mxu0 %v1617
  %1646 = vmatprep.subr.mxu0 0.0
  %1647 = vmatpush1.msra.mxu0 %v1618
  %1648 = vmatprep.subr.mxu0 0.0
  %1649 = vmatpush1.msra.mxu0 %v1619
  %1650 = vmatprep.subr.mxu0 0.0
  %1651 = vmatpush1.msra.mxu0 %v1620
  %1652 = vmatprep.subr.mxu0 0.0
  %1653 = vmatpush1.msra.mxu0 %v1621
  %1654 = vmatprep.subr.mxu0 0.0
  %1655 = vmatpush1.msra.mxu0 0.0
  %1656 = vmatprep.subr.mxu0 0.0
  %1657 = vmatpush1.msra.mxu0 0.0
  %1658 = vmatprep.subr.mxu0 0.0
  %1659 = vmatpush1.msra.mxu0 0.0
  %1660 = vmatprep.subr.mxu0 0.0
  %1661 = vmatpush1.msra.mxu0 0.0
  %1662 = vmatprep.subr.mxu0 0.0
  %1663 = vmatpush1.msra.mxu0 0.0
  %1664 = vmatprep.subr.mxu0 0.0
  %1665 = vmatpush1.msra.mxu0 0.0
  %1666 = vmatprep.subr.mxu0 0.0
  %1667 = vmatpush1.msra.mxu0 0.0
  %1668 = vmatprep.subr.mxu0 0.0
  %1669 = vmatpush1.msra.mxu0 0.0
  %1670 = vmatprep.subr.mxu0 0.0
  %1671 = vmatpush1.msra.mxu0 0.0
  %1672 = vmatprep.subr.mxu0 0.0
  %1673 = vmatpush1.msra.mxu0 0.0
  %1674 = vmatprep.subr.mxu0 0.0
  %1675 = vmatpush1.msra.mxu0 0.0
  %1676 = vmatprep.subr.mxu0 0.0
  %1677 = vmatpush1.msra.mxu0 0.0
  %1678 = vmatprep.subr.mxu0 0.0
  %1679 = vmatpush1.msra.mxu0 0.0
  %1680 = vmatprep.subr.mxu0 0.0
  %1681 = vmatpush1.msra.mxu0 0.0
  %1682 = vmatprep.subr.mxu0 0.0
  %1683 = vmatpush1.msra.mxu0 0.0
  %1684 = vmatprep.subr.mxu0 0.0
  %1685 = vmatpush1.msra.mxu0 0.0
  %1686 = vmatprep.mubr.f32.mxu0 0.0
  %1687 = vmatmul.mubr.f32.gmra.mrb[0].mxu0 %v1530
  %v1688 = vpop.f32.mrb[0].mxu0
  %v1689 = vadd.f32 0.0, %v1688
  %v1690 = vpop.f32.mrb[0].mxu0
  %1691 = vmatprep.mubr.f32.mxu0 0.0
  %1692 = vmatmul.mubr.f32.gmra.mrb[0].mxu0 %v1603
  %v1693 = vpop.f32.mrb[0].mxu0
  %v1694 = vadd.f32 0.0, %v1693
  %v1695 = vpop.f32.mrb[0].mxu0
  %1696 = vdwg.mxu0
  %1697 = vmatprep.subr.mxu0 0.0
  %1698 = vmatpush1.msra.mxu0 %v1280
  %1699 = vmatprep.subr.mxu0 0.0
  %1700 = vmatpush1.msra.mxu0 %v1281
  %1701 = vmatprep.subr.mxu0 0.0
  %1702 = vmatpush1.msra.mxu0 %v1282
  %1703 = vmatprep.subr.mxu0 0.0
  %1704 = vmatpush1.msra.mxu0 %v1283
  %1705 = vmatprep.subr.mxu0 0.0
  %1706 = vmatpush1.msra.mxu0 %v1284
  %1707 = vmatprep.subr.mxu0 0.0
  %1708 = vmatpush1.msra.mxu0 %v1285
  %1709 = vmatprep.subr.mxu0 0.0
  %1710 = vmatpush1.msra.mxu0 %v1286
  %1711 = vmatprep.subr.mxu0 0.0
  %1712 = vmatpush1.msra.mxu0 %v1287
  %1713 = vmatprep.subr.mxu0 0.0
  %1714 = vmatpush1.msra.mxu0 %v1288
  %1715 = vmatprep.subr.mxu0 0.0
  %1716 = vmatpush1.msra.mxu0 %v1289
  %1717 = vmatprep.subr.mxu0 0.0
  %1718 = vmatpush1.msra.mxu0 %v1290
  %1719 = vmatprep.subr.mxu0 0.0
  %1720 = vmatpush1.msra.mxu0 %v1291
  %1721 = vmatprep.subr.mxu0 0.0
  %1722 = vmatpush1.msra.mxu0 %v1292
  %1723 = vmatprep.subr.mxu0 0.0
  %1724 = vmatpush1.msra.mxu0 %v1293
  %1725 = vmatprep.subr.mxu0 0.0
  %1726 = vmatpush1.msra.mxu0 %v1294
  %1727 = vmatprep.subr.mxu0 0.0
  %1728 = vmatpush1.msra.mxu0 %v1295
  %1729 = vmatprep.subr.mxu0 0.0
  %1730 = vmatpush1.msra.mxu0 0.0
  %1731 = vmatprep.subr.mxu0 0.0
  %1732 = vmatpush1.msra.mxu0 0.0
  %1733 = vmatprep.subr.mxu0 0.0
  %1734 = vmatpush1.msra.mxu0 0.0
  %1735 = vmatprep.subr.mxu0 0.0
  %1736 = vmatpush1.msra.mxu0 0.0
  %1737 = vmatprep.subr.mxu0 0.0
  %1738 = vmatpush1.msra.mxu0 0.0
  %1739 = vmatprep.subr.mxu0 0.0
  %1740 = vmatpush1.msra.mxu0 0.0
  %1741 = vmatprep.subr.mxu0 0.0
  %1742 = vmatpush1.msra.mxu0 0.0
  %1743 = vmatprep.subr.mxu0 0.0
  %1744 = vmatpush1.msra.mxu0 0.0
  %1745 = vmatprep.subr.mxu0 0.0
  %1746 = vmatpush1.msra.mxu0 0.0
  %1747 = vmatprep.subr.mxu0 0.0
  %1748 = vmatpush1.msra.mxu0 0.0
  %1749 = vmatprep.subr.mxu0 0.0
  %1750 = vmatpush1.msra.mxu0 0.0
  %1751 = vmatprep.subr.mxu0 0.0
  %1752 = vmatpush1.msra.mxu0 0.0
  %1753 = vmatprep.subr.mxu0 0.0
  %1754 = vmatpush1.msra.mxu0 0.0
  %1755 = vmatprep.subr.mxu0 0.0
  %1756 = vmatpush1.msra.mxu0 0.0
  %1757 = vmatprep.subr.mxu0 0.0
  %1758 = vmatpush1.msra.mxu0 0.0
  %1759 = vmatprep.subr.mxu0 0.0
  %1760 = vmatpush1.msra.mxu0 0.0
  %1761 = vmatprep.mubr.f32.mxu0 0.0
  %1762 = vmatmul.mubr.f32.gmra.mrb[0].mxu0 %v1204
  %v1763 = vpop.f32.mrb[0].mxu0
  %v1764 = vadd.f32 %v1689, %v1763
  %v1765 = vpop.f32.mrb[0].mxu0
  %1766 = vmatprep.mubr.f32.mxu0 0.0
  %1767 = vmatmul.mubr.f32.gmra.mrb[0].mxu0 %v1277
  %v1768 = vpop.f32.mrb[0].mxu0
  %v1769 = vadd.f32 %v1694, %v1768
  %v1770 = vpop.f32.mrb[0].mxu0
  %1771 = vdwg.mxu0
  %1772 = vmatprep.subr.mxu0 0.0
  %1773 = vmatpush1.xpose.msra.mxu0 %v683
  %1774 = vmatprep.subr.mxu0 0.0
  %1775 = vmatpush1.xpose.msra.mxu0 %v689
  %1776 = vmatprep.subr.mxu0 0.0
  %1777 = vmatpush1.xpose.msra.mxu0 0.0
  %1778 = vmatprep.subr.mxu0 0.0
  %1779 = vmatpush1.xpose.msra.mxu0 0.0
  %1780 = vmatprep.subr.mxu0 0.0
  %1781 = vmatpush1.xpose.msra.mxu0 0.0
  %1782 = vmatprep.subr.mxu0 0.0
  %1783 = vmatpush1.xpose.msra.mxu0 0.0
  %1784 = vmatprep.subr.mxu0 0.0
  %1785 = vmatpush1.xpose.msra.mxu0 0.0
  %1786 = vmatprep.subr.mxu0 0.0
  %1787 = vmatpush1.xpose.msra.mxu0 0.0
  %1788 = vmatprep.subr.mxu0 0.0
  %1789 = vmatpush1.xpose.msra.mxu0 0.0
  %1790 = vmatprep.subr.mxu0 0.0
  %1791 = vmatpush1.xpose.msra.mxu0 0.0
  %1792 = vmatprep.subr.mxu0 0.0
  %1793 = vmatpush1.xpose.msra.mxu0 0.0
  %1794 = vmatprep.subr.mxu0 0.0
  %1795 = vmatpush1.xpose.msra.mxu0 0.0
  %1796 = vmatprep.subr.mxu0 0.0
  %1797 = vmatpush1.xpose.msra.mxu0 0.0
  %1798 = vmatprep.subr.mxu0 0.0
  %1799 = vmatpush1.xpose.msra.mxu0 0.0
  %1800 = vmatprep.subr.mxu0 0.0
  %1801 = vmatpush1.xpose.msra.mxu0 0.0
  %1802 = vmatprep.subr.mxu0 0.0
  %1803 = vmatpush1.xpose.msra.mxu0 0.0
  %1804 = vmatprep.subr.mxu0 0.0
  %1805 = vmatpush1.xpose.msra.mxu0 0.0
  %1806 = vmatprep.subr.mxu0 0.0
  %1807 = vmatpush1.xpose.msra.mxu0 0.0
  %1808 = vmatprep.subr.mxu0 0.0
  %1809 = vmatpush1.xpose.msra.mxu0 0.0
  %1810 = vmatprep.subr.mxu0 0.0
  %1811 = vmatpush1.xpose.msra.mxu0 0.0
  %1812 = vmatprep.subr.mxu0 0.0
  %1813 = vmatpush1.xpose.msra.mxu0 0.0
  %1814 = vmatprep.subr.mxu0 0.0
  %1815 = vmatpush1.xpose.msra.mxu0 0.0
  %1816 = vmatprep.subr.mxu0 0.0
  %1817 = vmatpush1.xpose.msra.mxu0 0.0
  %1818 = vmatprep.subr.mxu0 0.0
  %1819 = vmatpush1.xpose.msra.mxu0 0.0
  %1820 = vmatprep.subr.mxu0 0.0
  %1821 = vmatpush1.xpose.msra.mxu0 0.0
  %1822 = vmatprep.subr.mxu0 0.0
  %1823 = vmatpush1.xpose.msra.mxu0 0.0
  %1824 = vmatprep.subr.mxu0 0.0
  %1825 = vmatpush1.xpose.msra.mxu0 0.0
  %1826 = vmatprep.subr.mxu0 0.0
  %1827 = vmatpush1.xpose.msra.mxu0 0.0
  %1828 = vmatprep.subr.mxu0 0.0
  %1829 = vmatpush1.xpose.msra.mxu0 0.0
  %1830 = vmatprep.subr.mxu0 0.0
  %1831 = vmatpush1.xpose.msra.mxu0 0.0
  %1832 = vmatprep.subr.mxu0 0.0
  %1833 = vmatpush1.xpose.msra.mxu0 0.0
  %1834 = vmatprep.subr.mxu0 0.0
  %1835 = vmatpush1.xpose.msra.mxu0 0.0
  %1836 = vmatprep.mubr.f32.mxu0 0.0
  %1837 = vmatmul.mubr.f32.gmra.mrb[0].mxu0 %v431
  %v1838 = vpop.f32.mrb[0].mxu0
  %v1839 = vadd.f32 0.0, %v1838
  %v1840 = vpop.f32.mrb[0].mxu0
  %1841 = vdwg.mxu0
  %1842 = vmatprep.subr.mxu0 0.0
  %1843 = vmatpush1.xpose.msra.mxu0 %v695
  %1844 = vmatprep.subr.mxu0 0.0
  %1845 = vmatpush1.xpose.msra.mxu0 %v701
  %1846 = vmatprep.subr.mxu0 0.0
  %1847 = vmatpush1.xpose.msra.mxu0 0.0
  %1848 = vmatprep.subr.mxu0 0.0
  %1849 = vmatpush1.xpose.msra.mxu0 0.0
  %1850 = vmatprep.subr.mxu0 0.0
  %1851 = vmatpush1.xpose.msra.mxu0 0.0
  %1852 = vmatprep.subr.mxu0 0.0
  %1853 = vmatpush1.xpose.msra.mxu0 0.0
  %1854 = vmatprep.subr.mxu0 0.0
  %1855 = vmatpush1.xpose.msra.mxu0 0.0
  %1856 = vmatprep.subr.mxu0 0.0
  %1857 = vmatpush1.xpose.msra.mxu0 0.0
  %1858 = vmatprep.subr.mxu0 0.0
  %1859 = vmatpush1.xpose.msra.mxu0 0.0
  %1860 = vmatprep.subr.mxu0 0.0
  %1861 = vmatpush1.xpose.msra.mxu0 0.0
  %1862 = vmatprep.subr.mxu0 0.0
  %1863 = vmatpush1.xpose.msra.mxu0 0.0
  %1864 = vmatprep.subr.mxu0 0.0
  %1865 = vmatpush1.xpose.msra.mxu0 0.0
  %1866 = vmatprep.subr.mxu0 0.0
  %1867 = vmatpush1.xpose.msra.mxu0 0.0
  %1868 = vmatprep.subr.mxu0 0.0
  %1869 = vmatpush1.xpose.msra.mxu0 0.0
  %1870 = vmatprep.subr.mxu0 0.0
  %1871 = vmatpush1.xpose.msra.mxu0 0.0
  %1872 = vmatprep.subr.mxu0 0.0
  %1873 = vmatpush1.xpose.msra.mxu0 0.0
  %1874 = vmatprep.subr.mxu0 0.0
  %1875 = vmatpush1.xpose.msra.mxu0 0.0
  %1876 = vmatprep.subr.mxu0 0.0
  %1877 = vmatpush1.xpose.msra.mxu0 0.0
  %1878 = vmatprep.subr.mxu0 0.0
  %1879 = vmatpush1.xpose.msra.mxu0 0.0
  %1880 = vmatprep.subr.mxu0 0.0
  %1881 = vmatpush1.xpose.msra.mxu0 0.0
  %1882 = vmatprep.subr.mxu0 0.0
  %1883 = vmatpush1.xpose.msra.mxu0 0.0
  %1884 = vmatprep.subr.mxu0 0.0
  %1885 = vmatpush1.xpose.msra.mxu0 0.0
  %1886 = vmatprep.subr.mxu0 0.0
  %1887 = vmatpush1.xpose.msra.mxu0 0.0
  %1888 = vmatprep.subr.mxu0 0.0
  %1889 = vmatpush1.xpose.msra.mxu0 0.0
  %1890 = vmatprep.subr.mxu0 0.0
  %1891 = vmatpush1.xpose.msra.mxu0 0.0
  %1892 = vmatprep.subr.mxu0 0.0
  %1893 = vmatpush1.xpose.msra.mxu0 0.0
  %1894 = vmatprep.subr.mxu0 0.0
  %1895 = vmatpush1.xpose.msra.mxu0 0.0
  %1896 = vmatprep.subr.mxu0 0.0
  %1897 = vmatpush1.xpose.msra.mxu0 0.0
  %1898 = vmatprep.subr.mxu0 0.0
  %1899 = vmatpush1.xpose.msra.mxu0 0.0
  %1900 = vmatprep.subr.mxu0 0.0
  %1901 = vmatpush1.xpose.msra.mxu0 0.0
  %1902 = vmatprep.subr.mxu0 0.0
  %1903 = vmatpush1.xpose.msra.mxu0 0.0
  %1904 = vmatprep.subr.mxu0 0.0
  %1905 = vmatpush1.xpose.msra.mxu0 0.0
  %1906 = vmatprep.mubr.f32.mxu0 0.0
  %1907 = vmatmul.mubr.f32.gmra.mrb[0].mxu0 %v437
  %v1908 = vpop.f32.mrb[0].mxu0
  %v1909 = vadd.f32 0.0, %v1908
  %v1910 = vpop.f32.mrb[0].mxu0
  %1911 = vdwg.mxu0
  %v1912 = vmul.f32 %v1839, 0.35355338
  %v1913 = vmul.f32 %v1909, 0.35355338
  %v1914 = vsel %vm1111, %v1912, -inf
  %1915 = vmax.xlane.f32.xlu0 %v1914
  %v1916 = vpop.xlane.xlu0 %1915
  %v1917 = vsel %vm1111, %v1913, -inf
  %1918 = vmax.xlane.f32.xlu0 %v1917
  %v1919 = vpop.xlane.xlu0 %1918
  %v1920 = vsub.f32 %v1912, %v1916
  %v1921 = vsub.f32 %v1913, %v1919
  %v1922 = vmul.f32 %v1920, 1.442695
  %v1923 = vpow.pop %v1922
  %v1924 = vmul.f32 %v1921, 1.442695
  %v1925 = vpow.pop %v1924
  %v1926 = vsel %vm1111, %v1923, 0.0
  %1927 = vadd.xlane.f32.xlu0 %v1926
  %v1928 = vpop.xlane.xlu0 %1927
  %v1929 = vsel %vm1111, %v1925, 0.0
  %1930 = vadd.xlane.f32.xlu0 %v1929
  %v1931 = vpop.xlane.xlu0 %1930
  %v1932 = vrcp.pop %v1928
  %v1933 = vrcp.pop %v1931
  %v1934 = vmul.f32 %v1923, %v1932
  %v1935 = vmul.f32 %v1925, %v1933
  %v1937 = vsel %vm1111, %v1934, 0
  %1939 = vmatprep.subr.mxu0 0.0
  %1940 = vmatpush1.msra.mxu0 %v947
  %1941 = vmatprep.subr.mxu0 0.0
  %1942 = vmatpush1.msra.mxu0 %v953
  %1943 = vmatprep.subr.mxu0 0.0
  %1944 = vmatpush1.msra.mxu0 0.0
  %1945 = vmatprep.subr.mxu0 0.0
  %1946 = vmatpush1.msra.mxu0 0.0
  %1947 = vmatprep.subr.mxu0 0.0
  %1948 = vmatpush1.msra.mxu0 0.0
  %1949 = vmatprep.subr.mxu0 0.0
  %1950 = vmatpush1.msra.mxu0 0.0
  %1951 = vmatprep.subr.mxu0 0.0
  %1952 = vmatpush1.msra.mxu0 0.0
  %1953 = vmatprep.subr.mxu0 0.0
  %1954 = vmatpush1.msra.mxu0 0.0
  %1955 = vmatprep.subr.mxu0 0.0
  %1956 = vmatpush1.msra.mxu0 0.0
  %1957 = vmatprep.subr.mxu0 0.0
  %1958 = vmatpush1.msra.mxu0 0.0
  %1959 = vmatprep.subr.mxu0 0.0
  %1960 = vmatpush1.msra.mxu0 0.0
  %1961 = vmatprep.subr.mxu0 0.0
  %1962 = vmatpush1.msra.mxu0 0.0
  %1963 = vmatprep.subr.mxu0 0.0
  %1964 = vmatpush1.msra.mxu0 0.0
  %1965 = vmatprep.subr.mxu0 0.0
  %1966 = vmatpush1.msra.mxu0 0.0
  %1967 = vmatprep.subr.mxu0 0.0
  %1968 = vmatpush1.msra.mxu0 0.0
  %1969 = vmatprep.subr.mxu0 0.0
  %1970 = vmatpush1.msra.mxu0 0.0
  %1971 = vmatprep.subr.mxu0 0.0
  %1972 = vmatpush1.msra.mxu0 0.0
  %1973 = vmatprep.subr.mxu0 0.0
  %1974 = vmatpush1.msra.mxu0 0.0
  %1975 = vmatprep.subr.mxu0 0.0
  %1976 = vmatpush1.msra.mxu0 0.0
  %1977 = vmatprep.subr.mxu0 0.0
  %1978 = vmatpush1.msra.mxu0 0.0
  %1979 = vmatprep.subr.mxu0 0.0
  %1980 = vmatpush1.msra.mxu0 0.0
  %1981 = vmatprep.subr.mxu0 0.0
  %1982 = vmatpush1.msra.mxu0 0.0
  %1983 = vmatprep.subr.mxu0 0.0
  %1984 = vmatpush1.msra.mxu0 0.0
  %1985 = vmatprep.subr.mxu0 0.0
  %1986 = vmatpush1.msra.mxu0 0.0
  %1987 = vmatprep.subr.mxu0 0.0
  %1988 = vmatpush1.msra.mxu0 0.0
  %1989 = vmatprep.subr.mxu0 0.0
  %1990 = vmatpush1.msra.mxu0 0.0
  %1991 = vmatprep.subr.mxu0 0.0
  %1992 = vmatpush1.msra.mxu0 0.0
  %1993 = vmatprep.subr.mxu0 0.0
  %1994 = vmatpush1.msra.mxu0 0.0
  %1995 = vmatprep.subr.mxu0 0.0
  %1996 = vmatpush1.msra.mxu0 0.0
  %1997 = vmatprep.subr.mxu0 0.0
  %1998 = vmatpush1.msra.mxu0 0.0
  %1999 = vmatprep.subr.mxu0 0.0
  %2000 = vmatpush1.msra.mxu0 0.0
  %2001 = vmatprep.subr.mxu0 0.0
  %2002 = vmatpush1.msra.mxu0 0.0
  %2003 = vmatprep.mubr.f32.mxu0 0.0
  %2004 = vmatmul.mubr.f32.gmra.mrb[0].mxu0 %v1937
  %v2005 = vpop.f32.mrb[0].mxu0
  %v2006 = vadd.f32 0.0, %v2005
  %v2007 = vpop.f32.mrb[0].mxu0
  %2008 = vdwg.mxu0
  %v2010 = vsel %vm1111, %v1935, 0
  %2012 = vmatprep.subr.mxu0 0.0
  %2013 = vmatpush1.msra.mxu0 %v959
  %2014 = vmatprep.subr.mxu0 0.0
  %2015 = vmatpush1.msra.mxu0 %v965
  %2016 = vmatprep.subr.mxu0 0.0
  %2017 = vmatpush1.msra.mxu0 0.0
  %2018 = vmatprep.subr.mxu0 0.0
  %2019 = vmatpush1.msra.mxu0 0.0
  %2020 = vmatprep.subr.mxu0 0.0
  %2021 = vmatpush1.msra.mxu0 0.0
  %2022 = vmatprep.subr.mxu0 0.0
  %2023 = vmatpush1.msra.mxu0 0.0
  %2024 = vmatprep.subr.mxu0 0.0
  %2025 = vmatpush1.msra.mxu0 0.0
  %2026 = vmatprep.subr.mxu0 0.0
  %2027 = vmatpush1.msra.mxu0 0.0
  %2028 = vmatprep.subr.mxu0 0.0
  %2029 = vmatpush1.msra.mxu0 0.0
  %2030 = vmatprep.subr.mxu0 0.0
  %2031 = vmatpush1.msra.mxu0 0.0
  %2032 = vmatprep.subr.mxu0 0.0
  %2033 = vmatpush1.msra.mxu0 0.0
  %2034 = vmatprep.subr.mxu0 0.0
  %2035 = vmatpush1.msra.mxu0 0.0
  %2036 = vmatprep.subr.mxu0 0.0
  %2037 = vmatpush1.msra.mxu0 0.0
  %2038 = vmatprep.subr.mxu0 0.0
  %2039 = vmatpush1.msra.mxu0 0.0
  %2040 = vmatprep.subr.mxu0 0.0
  %2041 = vmatpush1.msra.mxu0 0.0
  %2042 = vmatprep.subr.mxu0 0.0
  %2043 = vmatpush1.msra.mxu0 0.0
  %2044 = vmatprep.subr.mxu0 0.0
  %2045 = vmatpush1.msra.mxu0 0.0
  %2046 = vmatprep.subr.mxu0 0.0
  %2047 = vmatpush1.msra.mxu0 0.0
  %2048 = vmatprep.subr.mxu0 0.0
  %2049 = vmatpush1.msra.mxu0 0.0
  %2050 = vmatprep.subr.mxu0 0.0
  %2051 = vmatpush1.msra.mxu0 0.0
  %2052 = vmatprep.subr.mxu0 0.0
  %2053 = vmatpush1.msra.mxu0 0.0
  %2054 = vmatprep.subr.mxu0 0.0
  %2055 = vmatpush1.msra.mxu0 0.0
  %2056 = vmatprep.subr.mxu0 0.0
  %2057 = vmatpush1.msra.mxu0 0.0
  %2058 = vmatprep.subr.mxu0 0.0
  %2059 = vmatpush1.msra.mxu0 0.0
  %2060 = vmatprep.subr.mxu0 0.0
  %2061 = vmatpush1.msra.mxu0 0.0
  %2062 = vmatprep.subr.mxu0 0.0
  %2063 = vmatpush1.msra.mxu0 0.0
  %2064 = vmatprep.subr.mxu0 0.0
  %2065 = vmatpush1.msra.mxu0 0.0
  %2066 = vmatprep.subr.mxu0 0.0
  %2067 = vmatpush1.msra.mxu0 0.0
  %2068 = vmatprep.subr.mxu0 0.0
  %2069 = vmatpush1.msra.mxu0 0.0
  %2070 = vmatprep.subr.mxu0 0.0
  %2071 = vmatpush1.msra.mxu0 0.0
  %2072 = vmatprep.subr.mxu0 0.0
  %2073 = vmatpush1.msra.mxu0 0.0
  %2074 = vmatprep.subr.mxu0 0.0
  %2075 = vmatpush1.msra.mxu0 0.0
  %2076 = vmatprep.mubr.f32.mxu0 0.0
  %2077 = vmatmul.mubr.f32.gmra.mrb[0].mxu0 %v2010
  %v2078 = vpop.f32.mrb[0].mxu0
  %v2079 = vadd.f32 0.0, %v2078
  %v2080 = vpop.f32.mrb[0].mxu0
  %2081 = vdwg.mxu0
  %v2082 = vld [vmem:[%s11 + $0x100] sm:$0xff]
  %v2083 = vld [vmem:[%s11 + $0x108] sm:$0xff]
  %v2084 = vld [vmem:[%s11 + $0x110] sm:$0xff]
  %v2085 = vld [vmem:[%s11 + $0x118] sm:$0xff]
  %v2086 = vld [vmem:[%s11 + $0x120] sm:$0xff]
  %v2087 = vld [vmem:[%s11 + $0x128] sm:$0xff]
  %v2088 = vld [vmem:[%s11 + $0x130] sm:$0xff]
  %v2089 = vld [vmem:[%s11 + $0x138] sm:$0xff]
  %v2090 = vld [vmem:[%s11 + $0x140] sm:$0xff]
  %v2091 = vld [vmem:[%s11 + $0x148] sm:$0xff]
  %v2092 = vld [vmem:[%s11 + $0x150] sm:$0xff]
  %v2093 = vld [vmem:[%s11 + $0x158] sm:$0xff]
  %v2094 = vld [vmem:[%s11 + $0x160] sm:$0xff]
  %v2095 = vld [vmem:[%s11 + $0x168] sm:$0xff]
  %v2096 = vld [vmem:[%s11 + $0x170] sm:$0xff]
  %v2097 = vld [vmem:[%s11 + $0x178] sm:$0xff]
  %2098 = vmatprep.subr.mxu0 0.0
  %2099 = vmatpush1.msra.mxu0 %v2082
  %2100 = vmatprep.subr.mxu0 0.0
  %2101 = vmatpush1.msra.mxu0 %v2083
  %2102 = vmatprep.subr.mxu0 0.0
  %2103 = vmatpush1.msra.mxu0 %v2084
  %2104 = vmatprep.subr.mxu0 0.0
  %2105 = vmatpush1.msra.mxu0 %v2085
  %2106 = vmatprep.subr.mxu0 0.0
  %2107 = vmatpush1.msra.mxu0 %v2086
  %2108 = vmatprep.subr.mxu0 0.0
  %2109 = vmatpush1.msra.mxu0 %v2087
  %2110 = vmatprep.subr.mxu0 0.0
  %2111 = vmatpush1.msra.mxu0 %v2088
  %2112 = vmatprep.subr.mxu0 0.0
  %2113 = vmatpush1.msra.mxu0 %v2089
  %2114 = vmatprep.subr.mxu0 0.0
  %2115 = vmatpush1.msra.mxu0 %v2090
  %2116 = vmatprep.subr.mxu0 0.0
  %2117 = vmatpush1.msra.mxu0 %v2091
  %2118 = vmatprep.subr.mxu0 0.0
  %2119 = vmatpush1.msra.mxu0 %v2092
  %2120 = vmatprep.subr.mxu0 0.0
  %2121 = vmatpush1.msra.mxu0 %v2093
  %2122 = vmatprep.subr.mxu0 0.0
  %2123 = vmatpush1.msra.mxu0 %v2094
  %2124 = vmatprep.subr.mxu0 0.0
  %2125 = vmatpush1.msra.mxu0 %v2095
  %2126 = vmatprep.subr.mxu0 0.0
  %2127 = vmatpush1.msra.mxu0 %v2096
  %2128 = vmatprep.subr.mxu0 0.0
  %2129 = vmatpush1.msra.mxu0 %v2097
  %2130 = vmatprep.subr.mxu0 0.0
  %2131 = vmatpush1.msra.mxu0 0.0
  %2132 = vmatprep.subr.mxu0 0.0
  %2133 = vmatpush1.msra.mxu0 0.0
  %2134 = vmatprep.subr.mxu0 0.0
  %2135 = vmatpush1.msra.mxu0 0.0
  %2136 = vmatprep.subr.mxu0 0.0
  %2137 = vmatpush1.msra.mxu0 0.0
  %2138 = vmatprep.subr.mxu0 0.0
  %2139 = vmatpush1.msra.mxu0 0.0
  %2140 = vmatprep.subr.mxu0 0.0
  %2141 = vmatpush1.msra.mxu0 0.0
  %2142 = vmatprep.subr.mxu0 0.0
  %2143 = vmatpush1.msra.mxu0 0.0
  %2144 = vmatprep.subr.mxu0 0.0
  %2145 = vmatpush1.msra.mxu0 0.0
  %2146 = vmatprep.subr.mxu0 0.0
  %2147 = vmatpush1.msra.mxu0 0.0
  %2148 = vmatprep.subr.mxu0 0.0
  %2149 = vmatpush1.msra.mxu0 0.0
  %2150 = vmatprep.subr.mxu0 0.0
  %2151 = vmatpush1.msra.mxu0 0.0
  %2152 = vmatprep.subr.mxu0 0.0
  %2153 = vmatpush1.msra.mxu0 0.0
  %2154 = vmatprep.subr.mxu0 0.0
  %2155 = vmatpush1.msra.mxu0 0.0
  %2156 = vmatprep.subr.mxu0 0.0
  %2157 = vmatpush1.msra.mxu0 0.0
  %2158 = vmatprep.subr.mxu0 0.0
  %2159 = vmatpush1.msra.mxu0 0.0
  %2160 = vmatprep.subr.mxu0 0.0
  %2161 = vmatpush1.msra.mxu0 0.0
  %2162 = vmatprep.mubr.f32.mxu0 0.0
  %2163 = vmatmul.mubr.f32.gmra.mrb[0].mxu0 %v2006
  %v2164 = vpop.f32.mrb[0].mxu0
  %v2165 = vadd.f32 0.0, %v2164
  %v2166 = vpop.f32.mrb[0].mxu0
  %2167 = vmatprep.mubr.f32.mxu0 0.0
  %2168 = vmatmul.mubr.f32.gmra.mrb[0].mxu0 %v2079
  %v2169 = vpop.f32.mrb[0].mxu0
  %v2170 = vadd.f32 0.0, %v2169
  %v2171 = vpop.f32.mrb[0].mxu0
  %2172 = vdwg.mxu0
  %v2173 = vadd.f32 %v1764, %v2165
  %v2174 = vadd.f32 %v1769, %v2170
  %2175 = vmatprep.subr.mxu0 0.0
  %2176 = vmatpush1.xpose.msra.mxu0 %v685
  %2177 = vmatprep.subr.mxu0 0.0
  %2178 = vmatpush1.xpose.msra.mxu0 %v691
  %2179 = vmatprep.subr.mxu0 0.0
  %2180 = vmatpush1.xpose.msra.mxu0 0.0
  %2181 = vmatprep.subr.mxu0 0.0
  %2182 = vmatpush1.xpose.msra.mxu0 0.0
  %2183 = vmatprep.subr.mxu0 0.0
  %2184 = vmatpush1.xpose.msra.mxu0 0.0
  %2185 = vmatprep.subr.mxu0 0.0
  %2186 = vmatpush1.xpose.msra.mxu0 0.0
  %2187 = vmatprep.subr.mxu0 0.0
  %2188 = vmatpush1.xpose.msra.mxu0 0.0
  %2189 = vmatprep.subr.mxu0 0.0
  %2190 = vmatpush1.xpose.msra.mxu0 0.0
  %2191 = vmatprep.subr.mxu0 0.0
  %2192 = vmatpush1.xpose.msra.mxu0 0.0
  %2193 = vmatprep.subr.mxu0 0.0
  %2194 = vmatpush1.xpose.msra.mxu0 0.0
  %2195 = vmatprep.subr.mxu0 0.0
  %2196 = vmatpush1.xpose.msra.mxu0 0.0
  %2197 = vmatprep.subr.mxu0 0.0
  %2198 = vmatpush1.xpose.msra.mxu0 0.0
  %2199 = vmatprep.subr.mxu0 0.0
  %2200 = vmatpush1.xpose.msra.mxu0 0.0
  %2201 = vmatprep.subr.mxu0 0.0
  %2202 = vmatpush1.xpose.msra.mxu0 0.0
  %2203 = vmatprep.subr.mxu0 0.0
  %2204 = vmatpush1.xpose.msra.mxu0 0.0
  %2205 = vmatprep.subr.mxu0 0.0
  %2206 = vmatpush1.xpose.msra.mxu0 0.0
  %2207 = vmatprep.subr.mxu0 0.0
  %2208 = vmatpush1.xpose.msra.mxu0 0.0
  %2209 = vmatprep.subr.mxu0 0.0
  %2210 = vmatpush1.xpose.msra.mxu0 0.0
  %2211 = vmatprep.subr.mxu0 0.0
  %2212 = vmatpush1.xpose.msra.mxu0 0.0
  %2213 = vmatprep.subr.mxu0 0.0
  %2214 = vmatpush1.xpose.msra.mxu0 0.0
  %2215 = vmatprep.subr.mxu0 0.0
  %2216 = vmatpush1.xpose.msra.mxu0 0.0
  %2217 = vmatprep.subr.mxu0 0.0
  %2218 = vmatpush1.xpose.msra.mxu0 0.0
  %2219 = vmatprep.subr.mxu0 0.0
  %2220 = vmatpush1.xpose.msra.mxu0 0.0
  %2221 = vmatprep.subr.mxu0 0.0
  %2222 = vmatpush1.xpose.msra.mxu0 0.0
  %2223 = vmatprep.subr.mxu0 0.0
  %2224 = vmatpush1.xpose.msra.mxu0 0.0
  %2225 = vmatprep.subr.mxu0 0.0
  %2226 = vmatpush1.xpose.msra.mxu0 0.0
  %2227 = vmatprep.subr.mxu0 0.0
  %2228 = vmatpush1.xpose.msra.mxu0 0.0
  %2229 = vmatprep.subr.mxu0 0.0
  %2230 = vmatpush1.xpose.msra.mxu0 0.0
  %2231 = vmatprep.subr.mxu0 0.0
  %2232 = vmatpush1.xpose.msra.mxu0 0.0
  %2233 = vmatprep.subr.mxu0 0.0
  %2234 = vmatpush1.xpose.msra.mxu0 0.0
  %2235 = vmatprep.subr.mxu0 0.0
  %2236 = vmatpush1.xpose.msra.mxu0 0.0
  %2237 = vmatprep.subr.mxu0 0.0
  %2238 = vmatpush1.xpose.msra.mxu0 0.0
  %2239 = vmatprep.mubr.f32.mxu0 0.0
  %2240 = vmatmul.mubr.f32.gmra.mrb[0].mxu0 %v433
  %v2241 = vpop.f32.mrb[0].mxu0
  %v2242 = vadd.f32 0.0, %v2241
  %v2243 = vpop.f32.mrb[0].mxu0
  %2244 = vdwg.mxu0
  %2245 = vmatprep.subr.mxu0 0.0
  %2246 = vmatpush1.xpose.msra.mxu0 %v697
  %2247 = vmatprep.subr.mxu0 0.0
  %2248 = vmatpush1.xpose.msra.mxu0 %v703
  %2249 = vmatprep.subr.mxu0 0.0
  %2250 = vmatpush1.xpose.msra.mxu0 0.0
  %2251 = vmatprep.subr.mxu0 0.0
  %2252 = vmatpush1.xpose.msra.mxu0 0.0
  %2253 = vmatprep.subr.mxu0 0.0
  %2254 = vmatpush1.xpose.msra.mxu0 0.0
  %2255 = vmatprep.subr.mxu0 0.0
  %2256 = vmatpush1.xpose.msra.mxu0 0.0
  %2257 = vmatprep.subr.mxu0 0.0
  %2258 = vmatpush1.xpose.msra.mxu0 0.0
  %2259 = vmatprep.subr.mxu0 0.0
  %2260 = vmatpush1.xpose.msra.mxu0 0.0
  %2261 = vmatprep.subr.mxu0 0.0
  %2262 = vmatpush1.xpose.msra.mxu0 0.0
  %2263 = vmatprep.subr.mxu0 0.0
  %2264 = vmatpush1.xpose.msra.mxu0 0.0
  %2265 = vmatprep.subr.mxu0 0.0
  %2266 = vmatpush1.xpose.msra.mxu0 0.0
  %2267 = vmatprep.subr.mxu0 0.0
  %2268 = vmatpush1.xpose.msra.mxu0 0.0
  %2269 = vmatprep.subr.mxu0 0.0
  %2270 = vmatpush1.xpose.msra.mxu0 0.0
  %2271 = vmatprep.subr.mxu0 0.0
  %2272 = vmatpush1.xpose.msra.mxu0 0.0
  %2273 = vmatprep.subr.mxu0 0.0
  %2274 = vmatpush1.xpose.msra.mxu0 0.0
  %2275 = vmatprep.subr.mxu0 0.0
  %2276 = vmatpush1.xpose.msra.mxu0 0.0
  %2277 = vmatprep.subr.mxu0 0.0
  %2278 = vmatpush1.xpose.msra.mxu0 0.0
  %2279 = vmatprep.subr.mxu0 0.0
  %2280 = vmatpush1.xpose.msra.mxu0 0.0
  %2281 = vmatprep.subr.mxu0 0.0
  %2282 = vmatpush1.xpose.msra.mxu0 0.0
  %2283 = vmatprep.subr.mxu0 0.0
  %2284 = vmatpush1.xpose.msra.mxu0 0.0
  %2285 = vmatprep.subr.mxu0 0.0
  %2286 = vmatpush1.xpose.msra.mxu0 0.0
  %2287 = vmatprep.subr.mxu0 0.0
  %2288 = vmatpush1.xpose.msra.mxu0 0.0
  %2289 = vmatprep.subr.mxu0 0.0
  %2290 = vmatpush1.xpose.msra.mxu0 0.0
  %2291 = vmatprep.subr.mxu0 0.0
  %2292 = vmatpush1.xpose.msra.mxu0 0.0
  %2293 = vmatprep.subr.mxu0 0.0
  %2294 = vmatpush1.xpose.msra.mxu0 0.0
  %2295 = vmatprep.subr.mxu0 0.0
  %2296 = vmatpush1.xpose.msra.mxu0 0.0
  %2297 = vmatprep.subr.mxu0 0.0
  %2298 = vmatpush1.xpose.msra.mxu0 0.0
  %2299 = vmatprep.subr.mxu0 0.0
  %2300 = vmatpush1.xpose.msra.mxu0 0.0
  %2301 = vmatprep.subr.mxu0 0.0
  %2302 = vmatpush1.xpose.msra.mxu0 0.0
  %2303 = vmatprep.subr.mxu0 0.0
  %2304 = vmatpush1.xpose.msra.mxu0 0.0
  %2305 = vmatprep.subr.mxu0 0.0
  %2306 = vmatpush1.xpose.msra.mxu0 0.0
  %2307 = vmatprep.subr.mxu0 0.0
  %2308 = vmatpush1.xpose.msra.mxu0 0.0
  %2309 = vmatprep.mubr.f32.mxu0 0.0
  %2310 = vmatmul.mubr.f32.gmra.mrb[0].mxu0 %v439
  %v2311 = vpop.f32.mrb[0].mxu0
  %v2312 = vadd.f32 0.0, %v2311
  %v2313 = vpop.f32.mrb[0].mxu0
  %2314 = vdwg.mxu0
  %v2315 = vmul.f32 %v2242, 0.35355338
  %v2316 = vmul.f32 %v2312, 0.35355338
  %v2317 = vsel %vm1111, %v2315, -inf
  %2318 = vmax.xlane.f32.xlu0 %v2317
  %v2319 = vpop.xlane.xlu0 %2318
  %v2320 = vsel %vm1111, %v2316, -inf
  %2321 = vmax.xlane.f32.xlu0 %v2320
  %v2322 = vpop.xlane.xlu0 %2321
  %v2323 = vsub.f32 %v2315, %v2319
  %v2324 = vsub.f32 %v2316, %v2322
  %v2325 = vmul.f32 %v2323, 1.442695
  %v2326 = vpow.pop %v2325
  %v2327 = vmul.f32 %v2324, 1.442695
  %v2328 = vpow.pop %v2327
  %v2329 = vsel %vm1111, %v2326, 0.0
  %2330 = vadd.xlane.f32.xlu0 %v2329
  %v2331 = vpop.xlane.xlu0 %2330
  %v2332 = vsel %vm1111, %v2328, 0.0
  %2333 = vadd.xlane.f32.xlu0 %v2332
  %v2334 = vpop.xlane.xlu0 %2333
  %v2335 = vrcp.pop %v2331
  %v2336 = vrcp.pop %v2334
  %v2337 = vmul.f32 %v2326, %v2335
  %v2338 = vmul.f32 %v2328, %v2336
  %v2340 = vsel %vm1111, %v2337, 0
  %2342 = vmatprep.subr.mxu0 0.0
  %2343 = vmatpush1.msra.mxu0 %v949
  %2344 = vmatprep.subr.mxu0 0.0
  %2345 = vmatpush1.msra.mxu0 %v955
  %2346 = vmatprep.subr.mxu0 0.0
  %2347 = vmatpush1.msra.mxu0 0.0
  %2348 = vmatprep.subr.mxu0 0.0
  %2349 = vmatpush1.msra.mxu0 0.0
  %2350 = vmatprep.subr.mxu0 0.0
  %2351 = vmatpush1.msra.mxu0 0.0
  %2352 = vmatprep.subr.mxu0 0.0
  %2353 = vmatpush1.msra.mxu0 0.0
  %2354 = vmatprep.subr.mxu0 0.0
  %2355 = vmatpush1.msra.mxu0 0.0
  %2356 = vmatprep.subr.mxu0 0.0
  %2357 = vmatpush1.msra.mxu0 0.0
  %2358 = vmatprep.subr.mxu0 0.0
  %2359 = vmatpush1.msra.mxu0 0.0
  %2360 = vmatprep.subr.mxu0 0.0
  %2361 = vmatpush1.msra.mxu0 0.0
  %2362 = vmatprep.subr.mxu0 0.0
  %2363 = vmatpush1.msra.mxu0 0.0
  %2364 = vmatprep.subr.mxu0 0.0
  %2365 = vmatpush1.msra.mxu0 0.0
  %2366 = vmatprep.subr.mxu0 0.0
  %2367 = vmatpush1.msra.mxu0 0.0
  %2368 = vmatprep.subr.mxu0 0.0
  %2369 = vmatpush1.msra.mxu0 0.0
  %2370 = vmatprep.subr.mxu0 0.0
  %2371 = vmatpush1.msra.mxu0 0.0
  %2372 = vmatprep.subr.mxu0 0.0
  %2373 = vmatpush1.msra.mxu0 0.0
  %2374 = vmatprep.subr.mxu0 0.0
  %2375 = vmatpush1.msra.mxu0 0.0
  %2376 = vmatprep.subr.mxu0 0.0
  %2377 = vmatpush1.msra.mxu0 0.0
  %2378 = vmatprep.subr.mxu0 0.0
  %2379 = vmatpush1.msra.mxu0 0.0
  %2380 = vmatprep.subr.mxu0 0.0
  %2381 = vmatpush1.msra.mxu0 0.0
  %2382 = vmatprep.subr.mxu0 0.0
  %2383 = vmatpush1.msra.mxu0 0.0
  %2384 = vmatprep.subr.mxu0 0.0
  %2385 = vmatpush1.msra.mxu0 0.0
  %2386 = vmatprep.subr.mxu0 0.0
  %2387 = vmatpush1.msra.mxu0 0.0
  %2388 = vmatprep.subr.mxu0 0.0
  %2389 = vmatpush1.msra.mxu0 0.0
  %2390 = vmatprep.subr.mxu0 0.0
  %2391 = vmatpush1.msra.mxu0 0.0
  %2392 = vmatprep.subr.mxu0 0.0
  %2393 = vmatpush1.msra.mxu0 0.0
  %2394 = vmatprep.subr.mxu0 0.0
  %2395 = vmatpush1.msra.mxu0 0.0
  %2396 = vmatprep.subr.mxu0 0.0
  %2397 = vmatpush1.msra.mxu0 0.0
  %2398 = vmatprep.subr.mxu0 0.0
  %2399 = vmatpush1.msra.mxu0 0.0
  %2400 = vmatprep.subr.mxu0 0.0
  %2401 = vmatpush1.msra.mxu0 0.0
  %2402 = vmatprep.subr.mxu0 0.0
  %2403 = vmatpush1.msra.mxu0 0.0
  %2404 = vmatprep.subr.mxu0 0.0
  %2405 = vmatpush1.msra.mxu0 0.0
  %2406 = vmatprep.mubr.f32.mxu0 0.0
  %2407 = vmatmul.mubr.f32.gmra.mrb[0].mxu0 %v2340
  %v2408 = vpop.f32.mrb[0].mxu0
  %v2409 = vadd.f32 0.0, %v2408
  %v2410 = vpop.f32.mrb[0].mxu0
  %2411 = vdwg.mxu0
  %v2413 = vsel %vm1111, %v2338, 0
  %2415 = vmatprep.subr.mxu0 0.0
  %2416 = vmatpush1.msra.mxu0 %v961
  %2417 = vmatprep.subr.mxu0 0.0
  %2418 = vmatpush1.msra.mxu0 %v967
  %2419 = vmatprep.subr.mxu0 0.0
  %2420 = vmatpush1.msra.mxu0 0.0
  %2421 = vmatprep.subr.mxu0 0.0
  %2422 = vmatpush1.msra.mxu0 0.0
  %2423 = vmatprep.subr.mxu0 0.0
  %2424 = vmatpush1.msra.mxu0 0.0
  %2425 = vmatprep.subr.mxu0 0.0
  %2426 = vmatpush1.msra.mxu0 0.0
  %2427 = vmatprep.subr.mxu0 0.0
  %2428 = vmatpush1.msra.mxu0 0.0
  %2429 = vmatprep.subr.mxu0 0.0
  %2430 = vmatpush1.msra.mxu0 0.0
  %2431 = vmatprep.subr.mxu0 0.0
  %2432 = vmatpush1.msra.mxu0 0.0
  %2433 = vmatprep.subr.mxu0 0.0
  %2434 = vmatpush1.msra.mxu0 0.0
  %2435 = vmatprep.subr.mxu0 0.0
  %2436 = vmatpush1.msra.mxu0 0.0
  %2437 = vmatprep.subr.mxu0 0.0
  %2438 = vmatpush1.msra.mxu0 0.0
  %2439 = vmatprep.subr.mxu0 0.0
  %2440 = vmatpush1.msra.mxu0 0.0
  %2441 = vmatprep.subr.mxu0 0.0
  %2442 = vmatpush1.msra.mxu0 0.0
  %2443 = vmatprep.subr.mxu0 0.0
  %2444 = vmatpush1.msra.mxu0 0.0
  %2445 = vmatprep.subr.mxu0 0.0
  %2446 = vmatpush1.msra.mxu0 0.0
  %2447 = vmatprep.subr.mxu0 0.0
  %2448 = vmatpush1.msra.mxu0 0.0
  %2449 = vmatprep.subr.mxu0 0.0
  %2450 = vmatpush1.msra.mxu0 0.0
  %2451 = vmatprep.subr.mxu0 0.0
  %2452 = vmatpush1.msra.mxu0 0.0
  %2453 = vmatprep.subr.mxu0 0.0
  %2454 = vmatpush1.msra.mxu0 0.0
  %2455 = vmatprep.subr.mxu0 0.0
  %2456 = vmatpush1.msra.mxu0 0.0
  %2457 = vmatprep.subr.mxu0 0.0
  %2458 = vmatpush1.msra.mxu0 0.0
  %2459 = vmatprep.subr.mxu0 0.0
  %2460 = vmatpush1.msra.mxu0 0.0
  %2461 = vmatprep.subr.mxu0 0.0
  %2462 = vmatpush1.msra.mxu0 0.0
  %2463 = vmatprep.subr.mxu0 0.0
  %2464 = vmatpush1.msra.mxu0 0.0
  %2465 = vmatprep.subr.mxu0 0.0
  %2466 = vmatpush1.msra.mxu0 0.0
  %2467 = vmatprep.subr.mxu0 0.0
  %2468 = vmatpush1.msra.mxu0 0.0
  %2469 = vmatprep.subr.mxu0 0.0
  %2470 = vmatpush1.msra.mxu0 0.0
  %2471 = vmatprep.subr.mxu0 0.0
  %2472 = vmatpush1.msra.mxu0 0.0
  %2473 = vmatprep.subr.mxu0 0.0
  %2474 = vmatpush1.msra.mxu0 0.0
  %2475 = vmatprep.subr.mxu0 0.0
  %2476 = vmatpush1.msra.mxu0 0.0
  %2477 = vmatprep.subr.mxu0 0.0
  %2478 = vmatpush1.msra.mxu0 0.0
  %2479 = vmatprep.mubr.f32.mxu0 0.0
  %2480 = vmatmul.mubr.f32.gmra.mrb[0].mxu0 %v2413
  %v2481 = vpop.f32.mrb[0].mxu0
  %v2482 = vadd.f32 0.0, %v2481
  %v2483 = vpop.f32.mrb[0].mxu0
  %2484 = vdwg.mxu0
  %v2485 = vld [vmem:[%s11 + $0x180] sm:$0xff]
  %v2486 = vld [vmem:[%s11 + $0x188] sm:$0xff]
  %v2487 = vld [vmem:[%s11 + $0x190] sm:$0xff]
  %v2488 = vld [vmem:[%s11 + $0x198] sm:$0xff]
  %v2489 = vld [vmem:[%s11 + $0x1a0] sm:$0xff]
  %v2490 = vld [vmem:[%s11 + $0x1a8] sm:$0xff]
  %v2491 = vld [vmem:[%s11 + $0x1b0] sm:$0xff]
  %v2492 = vld [vmem:[%s11 + $0x1b8] sm:$0xff]
  %v2493 = vld [vmem:[%s11 + $0x1c0] sm:$0xff]
  %v2494 = vld [vmem:[%s11 + $0x1c8] sm:$0xff]
  %v2495 = vld [vmem:[%s11 + $0x1d0] sm:$0xff]
  %v2496 = vld [vmem:[%s11 + $0x1d8] sm:$0xff]
  %v2497 = vld [vmem:[%s11 + $0x1e0] sm:$0xff]
  %v2498 = vld [vmem:[%s11 + $0x1e8] sm:$0xff]
  %v2499 = vld [vmem:[%s11 + $0x1f0] sm:$0xff]
  %v2500 = vld [vmem:[%s11 + $0x1f8] sm:$0xff]
  %2501 = vmatprep.subr.mxu0 0.0
  %2502 = vmatpush1.msra.mxu0 %v2485
  %2503 = vmatprep.subr.mxu0 0.0
  %2504 = vmatpush1.msra.mxu0 %v2486
  %2505 = vmatprep.subr.mxu0 0.0
  %2506 = vmatpush1.msra.mxu0 %v2487
  %2507 = vmatprep.subr.mxu0 0.0
  %2508 = vmatpush1.msra.mxu0 %v2488
  %2509 = vmatprep.subr.mxu0 0.0
  %2510 = vmatpush1.msra.mxu0 %v2489
  %2511 = vmatprep.subr.mxu0 0.0
  %2512 = vmatpush1.msra.mxu0 %v2490
  %2513 = vmatprep.subr.mxu0 0.0
  %2514 = vmatpush1.msra.mxu0 %v2491
  %2515 = vmatprep.subr.mxu0 0.0
  %2516 = vmatpush1.msra.mxu0 %v2492
  %2517 = vmatprep.subr.mxu0 0.0
  %2518 = vmatpush1.msra.mxu0 %v2493
  %2519 = vmatprep.subr.mxu0 0.0
  %2520 = vmatpush1.msra.mxu0 %v2494
  %2521 = vmatprep.subr.mxu0 0.0
  %2522 = vmatpush1.msra.mxu0 %v2495
  %2523 = vmatprep.subr.mxu0 0.0
  %2524 = vmatpush1.msra.mxu0 %v2496
  %2525 = vmatprep.subr.mxu0 0.0
  %2526 = vmatpush1.msra.mxu0 %v2497
  %2527 = vmatprep.subr.mxu0 0.0
  %2528 = vmatpush1.msra.mxu0 %v2498
  %2529 = vmatprep.subr.mxu0 0.0
  %2530 = vmatpush1.msra.mxu0 %v2499
  %2531 = vmatprep.subr.mxu0 0.0
  %2532 = vmatpush1.msra.mxu0 %v2500
  %2533 = vmatprep.subr.mxu0 0.0
  %2534 = vmatpush1.msra.mxu0 0.0
  %2535 = vmatprep.subr.mxu0 0.0
  %2536 = vmatpush1.msra.mxu0 0.0
  %2537 = vmatprep.subr.mxu0 0.0
  %2538 = vmatpush1.msra.mxu0 0.0
  %2539 = vmatprep.subr.mxu0 0.0
  %2540 = vmatpush1.msra.mxu0 0.0
  %2541 = vmatprep.subr.mxu0 0.0
  %2542 = vmatpush1.msra.mxu0 0.0
  %2543 = vmatprep.subr.mxu0 0.0
  %2544 = vmatpush1.msra.mxu0 0.0
  %2545 = vmatprep.subr.mxu0 0.0
  %2546 = vmatpush1.msra.mxu0 0.0
  %2547 = vmatprep.subr.mxu0 0.0
  %2548 = vmatpush1.msra.mxu0 0.0
  %2549 = vmatprep.subr.mxu0 0.0
  %2550 = vmatpush1.msra.mxu0 0.0
  %2551 = vmatprep.subr.mxu0 0.0
  %2552 = vmatpush1.msra.mxu0 0.0
  %2553 = vmatprep.subr.mxu0 0.0
  %2554 = vmatpush1.msra.mxu0 0.0
  %2555 = vmatprep.subr.mxu0 0.0
  %2556 = vmatpush1.msra.mxu0 0.0
  %2557 = vmatprep.subr.mxu0 0.0
  %2558 = vmatpush1.msra.mxu0 0.0
  %2559 = vmatprep.subr.mxu0 0.0
  %2560 = vmatpush1.msra.mxu0 0.0
  %2561 = vmatprep.subr.mxu0 0.0
  %2562 = vmatpush1.msra.mxu0 0.0
  %2563 = vmatprep.subr.mxu0 0.0
  %2564 = vmatpush1.msra.mxu0 0.0
  %2565 = vmatprep.mubr.f32.mxu0 0.0
  %2566 = vmatmul.mubr.f32.gmra.mrb[0].mxu0 %v2409
  %v2567 = vpop.f32.mrb[0].mxu0
  %v2568 = vadd.f32 0.0, %v2567
  %v2569 = vpop.f32.mrb[0].mxu0
  %2570 = vmatprep.mubr.f32.mxu0 0.0
  %2571 = vmatmul.mubr.f32.gmra.mrb[0].mxu0 %v2482
  %v2572 = vpop.f32.mrb[0].mxu0
  %v2573 = vadd.f32 0.0, %v2572
  %v2574 = vpop.f32.mrb[0].mxu0
  %2575 = vdwg.mxu0
  %v2576 = vadd.f32 %v2173, %v2568
  %v2577 = vadd.f32 %v2174, %v2573
  %v2578 = vrot.slane %v2576, 4
  %v2579 = vadd.f32 %v2576, %v2578
  %v2580 = vrot.slane %v2579, 2
  %v2581 = vadd.f32 %v2579, %v2580
  %v2582 = vrot.slane %v2581, 1
  %v2583 = vadd.f32 %v2581, %v2582
  %v2584 = vrot.slane %v2577, 4
  %v2585 = vadd.f32 %v2577, %v2584
  %v2586 = vrot.slane %v2585, 2
  %v2587 = vadd.f32 %v2585, %v2586
  %v2588 = vrot.slane %v2587, 1
  %v2589 = vadd.f32 %v2587, %v2588
  %v2590 = vmul.f32 %v2583, 0.125
  %v2591 = vmul.f32 %v2589, 0.125
  %v2592 = vld [vmem:[%s12] sm:$0x1]
  %v2594 = vlaneseq
  %v2595 = vshrl.u32 %v2594, 7
  %v2596 = vsub.s32 0, %v2595
  %v2597 = vrot.slane %v2592, %v2596
  %v2599 = vadd.f32 %v2590, %v2597
  %v2600 = vadd.f32 %v2591, %v2597
  %v2603 = vrot.slane %v2600, 7
  %v2604 = vsel %vm195, %v2603, %v2599
  %2606 = vst [vmem:[%s21] sm:$0x3] %v2604
  %v2607 = vld [vmem:[%s2] sm:$0x3]
  %v2608 = vld [vmem:[%s13] sm:$0xff]
  %v2609 = vld [vmem:[%s13 + $0x8] sm:$0xff]
  %v2610 = vld [vmem:[%s13 + $0x10] sm:$0xff]
  %v2611 = vld [vmem:[%s13 + $0x18] sm:$0xff]
  %v2612 = vld [vmem:[%s13 + $0x20] sm:$0xff]
  %v2613 = vld [vmem:[%s13 + $0x28] sm:$0xff]
  %v2614 = vld [vmem:[%s13 + $0x30] sm:$0xff]
  %v2615 = vld [vmem:[%s13 + $0x38] sm:$0xff]
  %v2616 = vld [vmem:[%s13 + $0x40] sm:$0xff]
  %v2617 = vld [vmem:[%s13 + $0x48] sm:$0xff]
  %v2618 = vld [vmem:[%s13 + $0x50] sm:$0xff]
  %v2619 = vld [vmem:[%s13 + $0x58] sm:$0xff]
  %v2620 = vld [vmem:[%s13 + $0x60] sm:$0xff]
  %v2621 = vld [vmem:[%s13 + $0x68] sm:$0xff]
  %v2622 = vld [vmem:[%s13 + $0x70] sm:$0xff]
  %v2623 = vld [vmem:[%s13 + $0x78] sm:$0xff]
  %v2624 = vld [vmem:[%s14] sm:$0xff]
  %v2625 = vld [vmem:[%s14 + $0x8] sm:$0xff]
  %v2626 = vld [vmem:[%s14 + $0x10] sm:$0xff]
  %v2627 = vld [vmem:[%s14 + $0x18] sm:$0xff]
  %v2628 = vld [vmem:[%s14 + $0x20] sm:$0xff]
  %v2629 = vld [vmem:[%s14 + $0x28] sm:$0xff]
  %v2630 = vld [vmem:[%s14 + $0x30] sm:$0xff]
  %v2631 = vld [vmem:[%s14 + $0x38] sm:$0xff]
  %v2632 = vld [vmem:[%s14 + $0x40] sm:$0xff]
  %v2633 = vld [vmem:[%s14 + $0x48] sm:$0xff]
  %v2634 = vld [vmem:[%s14 + $0x50] sm:$0xff]
  %v2635 = vld [vmem:[%s14 + $0x58] sm:$0xff]
  %v2636 = vld [vmem:[%s14 + $0x60] sm:$0xff]
  %v2637 = vld [vmem:[%s14 + $0x68] sm:$0xff]
  %v2638 = vld [vmem:[%s14 + $0x70] sm:$0xff]
  %v2639 = vld [vmem:[%s14 + $0x78] sm:$0xff]
  %2640 = vmatprep.subr.mxu0 0.0
  %2641 = vmatpush1.msra.mxu0 %v2624
  %2642 = vmatprep.subr.mxu0 0.0
  %2643 = vmatpush1.msra.mxu0 %v2625
  %2644 = vmatprep.subr.mxu0 0.0
  %2645 = vmatpush1.msra.mxu0 %v2626
  %2646 = vmatprep.subr.mxu0 0.0
  %2647 = vmatpush1.msra.mxu0 %v2627
  %2648 = vmatprep.subr.mxu0 0.0
  %2649 = vmatpush1.msra.mxu0 %v2628
  %2650 = vmatprep.subr.mxu0 0.0
  %2651 = vmatpush1.msra.mxu0 %v2629
  %2652 = vmatprep.subr.mxu0 0.0
  %2653 = vmatpush1.msra.mxu0 %v2630
  %2654 = vmatprep.subr.mxu0 0.0
  %2655 = vmatpush1.msra.mxu0 %v2631
  %2656 = vmatprep.subr.mxu0 0.0
  %2657 = vmatpush1.msra.mxu0 %v2632
  %2658 = vmatprep.subr.mxu0 0.0
  %2659 = vmatpush1.msra.mxu0 %v2633
  %2660 = vmatprep.subr.mxu0 0.0
  %2661 = vmatpush1.msra.mxu0 %v2634
  %2662 = vmatprep.subr.mxu0 0.0
  %2663 = vmatpush1.msra.mxu0 %v2635
  %2664 = vmatprep.subr.mxu0 0.0
  %2665 = vmatpush1.msra.mxu0 %v2636
  %2666 = vmatprep.subr.mxu0 0.0
  %2667 = vmatpush1.msra.mxu0 %v2637
  %2668 = vmatprep.subr.mxu0 0.0
  %2669 = vmatpush1.msra.mxu0 %v2638
  %2670 = vmatprep.subr.mxu0 0.0
  %2671 = vmatpush1.msra.mxu0 %v2639
  %2672 = vmatprep.subr.mxu0 0.0
  %2673 = vmatpush1.msra.mxu0 0.0
  %2674 = vmatprep.subr.mxu0 0.0
  %2675 = vmatpush1.msra.mxu0 0.0
  %2676 = vmatprep.subr.mxu0 0.0
  %2677 = vmatpush1.msra.mxu0 0.0
  %2678 = vmatprep.subr.mxu0 0.0
  %2679 = vmatpush1.msra.mxu0 0.0
  %2680 = vmatprep.subr.mxu0 0.0
  %2681 = vmatpush1.msra.mxu0 0.0
  %2682 = vmatprep.subr.mxu0 0.0
  %2683 = vmatpush1.msra.mxu0 0.0
  %2684 = vmatprep.subr.mxu0 0.0
  %2685 = vmatpush1.msra.mxu0 0.0
  %2686 = vmatprep.subr.mxu0 0.0
  %2687 = vmatpush1.msra.mxu0 0.0
  %2688 = vmatprep.subr.mxu0 0.0
  %2689 = vmatpush1.msra.mxu0 0.0
  %2690 = vmatprep.subr.mxu0 0.0
  %2691 = vmatpush1.msra.mxu0 0.0
  %2692 = vmatprep.subr.mxu0 0.0
  %2693 = vmatpush1.msra.mxu0 0.0
  %2694 = vmatprep.subr.mxu0 0.0
  %2695 = vmatpush1.msra.mxu0 0.0
  %2696 = vmatprep.subr.mxu0 0.0
  %2697 = vmatpush1.msra.mxu0 0.0
  %2698 = vmatprep.subr.mxu0 0.0
  %2699 = vmatpush1.msra.mxu0 0.0
  %2700 = vmatprep.subr.mxu0 0.0
  %2701 = vmatpush1.msra.mxu0 0.0
  %2702 = vmatprep.subr.mxu0 0.0
  %2703 = vmatpush1.msra.mxu0 0.0
  %2704 = vmatprep.mubr.f32.mxu0 0.0
  %2705 = vmatmul.mubr.f32.gmra.mrb[0].mxu0 %v196
  %v2706 = vpop.f32.mrb[0].mxu0
  %v2707 = vadd.f32 0.0, %v2706
  %v2708 = vpop.f32.mrb[0].mxu0
  %2709 = vdwg.mxu0
  %2710 = vmatprep.subr.mxu0 0.0
  %2711 = vmatpush1.msra.mxu0 %v2608
  %2712 = vmatprep.subr.mxu0 0.0
  %2713 = vmatpush1.msra.mxu0 %v2609
  %2714 = vmatprep.subr.mxu0 0.0
  %2715 = vmatpush1.msra.mxu0 %v2610
  %2716 = vmatprep.subr.mxu0 0.0
  %2717 = vmatpush1.msra.mxu0 %v2611
  %2718 = vmatprep.subr.mxu0 0.0
  %2719 = vmatpush1.msra.mxu0 %v2612
  %2720 = vmatprep.subr.mxu0 0.0
  %2721 = vmatpush1.msra.mxu0 %v2613
  %2722 = vmatprep.subr.mxu0 0.0
  %2723 = vmatpush1.msra.mxu0 %v2614
  %2724 = vmatprep.subr.mxu0 0.0
  %2725 = vmatpush1.msra.mxu0 %v2615
  %2726 = vmatprep.subr.mxu0 0.0
  %2727 = vmatpush1.msra.mxu0 %v2616
  %2728 = vmatprep.subr.mxu0 0.0
  %2729 = vmatpush1.msra.mxu0 %v2617
  %2730 = vmatprep.subr.mxu0 0.0
  %2731 = vmatpush1.msra.mxu0 %v2618
  %2732 = vmatprep.subr.mxu0 0.0
  %2733 = vmatpush1.msra.mxu0 %v2619
  %2734 = vmatprep.subr.mxu0 0.0
  %2735 = vmatpush1.msra.mxu0 %v2620
  %2736 = vmatprep.subr.mxu0 0.0
  %2737 = vmatpush1.msra.mxu0 %v2621
  %2738 = vmatprep.subr.mxu0 0.0
  %2739 = vmatpush1.msra.mxu0 %v2622
  %2740 = vmatprep.subr.mxu0 0.0
  %2741 = vmatpush1.msra.mxu0 %v2623
  %2742 = vmatprep.subr.mxu0 0.0
  %2743 = vmatpush1.msra.mxu0 0.0
  %2744 = vmatprep.subr.mxu0 0.0
  %2745 = vmatpush1.msra.mxu0 0.0
  %2746 = vmatprep.subr.mxu0 0.0
  %2747 = vmatpush1.msra.mxu0 0.0
  %2748 = vmatprep.subr.mxu0 0.0
  %2749 = vmatpush1.msra.mxu0 0.0
  %2750 = vmatprep.subr.mxu0 0.0
  %2751 = vmatpush1.msra.mxu0 0.0
  %2752 = vmatprep.subr.mxu0 0.0
  %2753 = vmatpush1.msra.mxu0 0.0
  %2754 = vmatprep.subr.mxu0 0.0
  %2755 = vmatpush1.msra.mxu0 0.0
  %2756 = vmatprep.subr.mxu0 0.0
  %2757 = vmatpush1.msra.mxu0 0.0
  %2758 = vmatprep.subr.mxu0 0.0
  %2759 = vmatpush1.msra.mxu0 0.0
  %2760 = vmatprep.subr.mxu0 0.0
  %2761 = vmatpush1.msra.mxu0 0.0
  %2762 = vmatprep.subr.mxu0 0.0
  %2763 = vmatpush1.msra.mxu0 0.0
  %2764 = vmatprep.subr.mxu0 0.0
  %2765 = vmatpush1.msra.mxu0 0.0
  %2766 = vmatprep.subr.mxu0 0.0
  %2767 = vmatpush1.msra.mxu0 0.0
  %2768 = vmatprep.subr.mxu0 0.0
  %2769 = vmatpush1.msra.mxu0 0.0
  %2770 = vmatprep.subr.mxu0 0.0
  %2771 = vmatpush1.msra.mxu0 0.0
  %2772 = vmatprep.subr.mxu0 0.0
  %2773 = vmatpush1.msra.mxu0 0.0
  %2774 = vmatprep.mubr.f32.mxu0 0.0
  %2775 = vmatmul.mubr.f32.gmra.mrb[0].mxu0 %v2607
  %v2776 = vpop.f32.mrb[0].mxu0
  %v2777 = vadd.f32 %v2707, %v2776
  %v2778 = vpop.f32.mrb[0].mxu0
  %2779 = vdwg.mxu0
  %v2780 = vld [vmem:[%s15] sm:$0xff]
  %v2781 = vld [vmem:[%s15 + $0x8] sm:$0xff]
  %v2782 = vld [vmem:[%s15 + $0x10] sm:$0xff]
  %v2783 = vld [vmem:[%s15 + $0x18] sm:$0xff]
  %v2784 = vld [vmem:[%s15 + $0x20] sm:$0xff]
  %v2785 = vld [vmem:[%s15 + $0x28] sm:$0xff]
  %v2786 = vld [vmem:[%s15 + $0x30] sm:$0xff]
  %v2787 = vld [vmem:[%s15 + $0x38] sm:$0xff]
  %v2788 = vld [vmem:[%s15 + $0x40] sm:$0xff]
  %v2789 = vld [vmem:[%s15 + $0x48] sm:$0xff]
  %v2790 = vld [vmem:[%s15 + $0x50] sm:$0xff]
  %v2791 = vld [vmem:[%s15 + $0x58] sm:$0xff]
  %v2792 = vld [vmem:[%s15 + $0x60] sm:$0xff]
  %v2793 = vld [vmem:[%s15 + $0x68] sm:$0xff]
  %v2794 = vld [vmem:[%s15 + $0x70] sm:$0xff]
  %v2795 = vld [vmem:[%s15 + $0x78] sm:$0xff]
  %2796 = vmatprep.subr.mxu0 0.0
  %2797 = vmatpush1.msra.mxu0 %v2780
  %2798 = vmatprep.subr.mxu0 0.0
  %2799 = vmatpush1.msra.mxu0 %v2781
  %2800 = vmatprep.subr.mxu0 0.0
  %2801 = vmatpush1.msra.mxu0 %v2782
  %2802 = vmatprep.subr.mxu0 0.0
  %2803 = vmatpush1.msra.mxu0 %v2783
  %2804 = vmatprep.subr.mxu0 0.0
  %2805 = vmatpush1.msra.mxu0 %v2784
  %2806 = vmatprep.subr.mxu0 0.0
  %2807 = vmatpush1.msra.mxu0 %v2785
  %2808 = vmatprep.subr.mxu0 0.0
  %2809 = vmatpush1.msra.mxu0 %v2786
  %2810 = vmatprep.subr.mxu0 0.0
  %2811 = vmatpush1.msra.mxu0 %v2787
  %2812 = vmatprep.subr.mxu0 0.0
  %2813 = vmatpush1.msra.mxu0 %v2788
  %2814 = vmatprep.subr.mxu0 0.0
  %2815 = vmatpush1.msra.mxu0 %v2789
  %2816 = vmatprep.subr.mxu0 0.0
  %2817 = vmatpush1.msra.mxu0 %v2790
  %2818 = vmatprep.subr.mxu0 0.0
  %2819 = vmatpush1.msra.mxu0 %v2791
  %2820 = vmatprep.subr.mxu0 0.0
  %2821 = vmatpush1.msra.mxu0 %v2792
  %2822 = vmatprep.subr.mxu0 0.0
  %2823 = vmatpush1.msra.mxu0 %v2793
  %2824 = vmatprep.subr.mxu0 0.0
  %2825 = vmatpush1.msra.mxu0 %v2794
  %2826 = vmatprep.subr.mxu0 0.0
  %2827 = vmatpush1.msra.mxu0 %v2795
  %2828 = vmatprep.subr.mxu0 0.0
  %2829 = vmatpush1.msra.mxu0 0.0
  %2830 = vmatprep.subr.mxu0 0.0
  %2831 = vmatpush1.msra.mxu0 0.0
  %2832 = vmatprep.subr.mxu0 0.0
  %2833 = vmatpush1.msra.mxu0 0.0
  %2834 = vmatprep.subr.mxu0 0.0
  %2835 = vmatpush1.msra.mxu0 0.0
  %2836 = vmatprep.subr.mxu0 0.0
  %2837 = vmatpush1.msra.mxu0 0.0
  %2838 = vmatprep.subr.mxu0 0.0
  %2839 = vmatpush1.msra.mxu0 0.0
  %2840 = vmatprep.subr.mxu0 0.0
  %2841 = vmatpush1.msra.mxu0 0.0
  %2842 = vmatprep.subr.mxu0 0.0
  %2843 = vmatpush1.msra.mxu0 0.0
  %2844 = vmatprep.subr.mxu0 0.0
  %2845 = vmatpush1.msra.mxu0 0.0
  %2846 = vmatprep.subr.mxu0 0.0
  %2847 = vmatpush1.msra.mxu0 0.0
  %2848 = vmatprep.subr.mxu0 0.0
  %2849 = vmatpush1.msra.mxu0 0.0
  %2850 = vmatprep.subr.mxu0 0.0
  %2851 = vmatpush1.msra.mxu0 0.0
  %2852 = vmatprep.subr.mxu0 0.0
  %2853 = vmatpush1.msra.mxu0 0.0
  %2854 = vmatprep.subr.mxu0 0.0
  %2855 = vmatpush1.msra.mxu0 0.0
  %2856 = vmatprep.subr.mxu0 0.0
  %2857 = vmatpush1.msra.mxu0 0.0
  %2858 = vmatprep.subr.mxu0 0.0
  %2859 = vmatpush1.msra.mxu0 0.0
  %2860 = vmatprep.mubr.f32.mxu0 0.0
  %2861 = vmatmul.mubr.f32.gmra.mrb[0].mxu0 %v2604
  %v2862 = vpop.f32.mrb[0].mxu0
  %v2863 = vadd.f32 0.0, %v2862
  %v2864 = vpop.f32.mrb[0].mxu0
  %2865 = vdwg.mxu0
  %v2866 = vadd.f32 %v2777, %v2863
  %v2867 = vld [vmem:[%s16] sm:$0x1]
  %v2869 = vlaneseq
  %v2870 = vshrl.u32 %v2869, 7
  %v2871 = vsub.s32 0, %v2870
  %v2872 = vrot.slane %v2867, %v2871
  %v2874 = vadd.f32 %v2866, %v2872
  %v2875 = vmax.f32 %v2874, 0.0
  %v2876 = vld [vmem:[%s17] sm:$0xff]
  %v2877 = vld [vmem:[%s17 + $0x8] sm:$0xff]
  %v2878 = vld [vmem:[%s17 + $0x10] sm:$0xff]
  %v2879 = vld [vmem:[%s17 + $0x18] sm:$0xff]
  %v2880 = vld [vmem:[%s17 + $0x20] sm:$0xff]
  %v2881 = vld [vmem:[%s17 + $0x28] sm:$0xff]
  %v2882 = vld [vmem:[%s17 + $0x30] sm:$0xff]
  %v2883 = vld [vmem:[%s17 + $0x38] sm:$0xff]
  %v2884 = vld [vmem:[%s17 + $0x40] sm:$0xff]
  %v2885 = vld [vmem:[%s17 + $0x48] sm:$0xff]
  %v2886 = vld [vmem:[%s17 + $0x50] sm:$0xff]
  %v2887 = vld [vmem:[%s17 + $0x58] sm:$0xff]
  %v2888 = vld [vmem:[%s17 + $0x60] sm:$0xff]
  %v2889 = vld [vmem:[%s17 + $0x68] sm:$0xff]
  %v2890 = vld [vmem:[%s17 + $0x70] sm:$0xff]
  %v2891 = vld [vmem:[%s17 + $0x78] sm:$0xff]
  %v2892 = vld [vmem:[%s18] sm:$0x1]
  %v2894 = vlaneseq
  %v2895 = vshrl.u32 %v2894, 7
  %v2896 = vsub.s32 0, %v2895
  %v2897 = vrot.slane %v2892, %v2896
  %2899 = vmatprep.subr.mxu0 0.0
  %2900 = vmatpush1.msra.mxu0 %v2876
  %2901 = vmatprep.subr.mxu0 0.0
  %2902 = vmatpush1.msra.mxu0 %v2877
  %2903 = vmatprep.subr.mxu0 0.0
  %2904 = vmatpush1.msra.mxu0 %v2878
  %2905 = vmatprep.subr.mxu0 0.0
  %2906 = vmatpush1.msra.mxu0 %v2879
  %2907 = vmatprep.subr.mxu0 0.0
  %2908 = vmatpush1.msra.mxu0 %v2880
  %2909 = vmatprep.subr.mxu0 0.0
  %2910 = vmatpush1.msra.mxu0 %v2881
  %2911 = vmatprep.subr.mxu0 0.0
  %2912 = vmatpush1.msra.mxu0 %v2882
  %2913 = vmatprep.subr.mxu0 0.0
  %2914 = vmatpush1.msra.mxu0 %v2883
  %2915 = vmatprep.subr.mxu0 0.0
  %2916 = vmatpush1.msra.mxu0 %v2884
  %2917 = vmatprep.subr.mxu0 0.0
  %2918 = vmatpush1.msra.mxu0 %v2885
  %2919 = vmatprep.subr.mxu0 0.0
  %2920 = vmatpush1.msra.mxu0 %v2886
  %2921 = vmatprep.subr.mxu0 0.0
  %2922 = vmatpush1.msra.mxu0 %v2887
  %2923 = vmatprep.subr.mxu0 0.0
  %2924 = vmatpush1.msra.mxu0 %v2888
  %2925 = vmatprep.subr.mxu0 0.0
  %2926 = vmatpush1.msra.mxu0 %v2889
  %2927 = vmatprep.subr.mxu0 0.0
  %2928 = vmatpush1.msra.mxu0 %v2890
  %2929 = vmatprep.subr.mxu0 0.0
  %2930 = vmatpush1.msra.mxu0 %v2891
  %2931 = vmatprep.subr.mxu0 0.0
  %2932 = vmatpush1.msra.mxu0 0.0
  %2933 = vmatprep.subr.mxu0 0.0
  %2934 = vmatpush1.msra.mxu0 0.0
  %2935 = vmatprep.subr.mxu0 0.0
  %2936 = vmatpush1.msra.mxu0 0.0
  %2937 = vmatprep.subr.mxu0 0.0
  %2938 = vmatpush1.msra.mxu0 0.0
  %2939 = vmatprep.subr.mxu0 0.0
  %2940 = vmatpush1.msra.mxu0 0.0
  %2941 = vmatprep.subr.mxu0 0.0
  %2942 = vmatpush1.msra.mxu0 0.0
  %2943 = vmatprep.subr.mxu0 0.0
  %2944 = vmatpush1.msra.mxu0 0.0
  %2945 = vmatprep.subr.mxu0 0.0
  %2946 = vmatpush1.msra.mxu0 0.0
  %2947 = vmatprep.subr.mxu0 0.0
  %2948 = vmatpush1.msra.mxu0 0.0
  %2949 = vmatprep.subr.mxu0 0.0
  %2950 = vmatpush1.msra.mxu0 0.0
  %2951 = vmatprep.subr.mxu0 0.0
  %2952 = vmatpush1.msra.mxu0 0.0
  %2953 = vmatprep.subr.mxu0 0.0
  %2954 = vmatpush1.msra.mxu0 0.0
  %2955 = vmatprep.subr.mxu0 0.0
  %2956 = vmatpush1.msra.mxu0 0.0
  %2957 = vmatprep.subr.mxu0 0.0
  %2958 = vmatpush1.msra.mxu0 0.0
  %2959 = vmatprep.subr.mxu0 0.0
  %2960 = vmatpush1.msra.mxu0 0.0
  %2961 = vmatprep.subr.mxu0 0.0
  %2962 = vmatpush1.msra.mxu0 0.0
  %2963 = vmatprep.mubr.f32.mxu0 0.0
  %2964 = vmatmul.mubr.f32.gmra.mrb[0].mxu0 %v2875
  %v2965 = vpop.f32.mrb[0].mxu0
  %v2966 = vadd.f32 %v2897, %v2965
  %v2967 = vpop.f32.mrb[0].mxu0
  %2968 = vdwg.mxu0
  %2969 = vst [vmem:[%s19] sm:$0x3] %v2966
  // Predicated region
  $region78: #{ggap_cpi_ablation_forward.1} parent=0 // pred_check
    _
  $region79: #{ggap_cpi_ablation_forward.1} parent=0 // pred_check_branch
    %2971 = sbr.rel (0) target = $region81
  $region80: #{ggap_cpi_ablation_forward.1} parent=0 // pred_region
    _
  $region81: #{ggap_cpi_ablation_forward.1} parent=0 // pred_fallthru
    _
  // Predicated region
  $region82: #{ggap_cpi_ablation_forward.1} parent=0 // pred_check
    _
  $region83: #{ggap_cpi_ablation_forward.1} parent=0 // pred_check_branch
    %2973 = sbr.rel (0) target = $region85
  $region84: #{ggap_cpi_ablation_forward.1} parent=0 // pred_region
    _
  $region85: #{ggap_cpi_ablation_forward.1} parent=0 // pred_fallthru
    _
  // Predicated region
  $region86: #{ggap_cpi_ablation_forward.1} parent=0 // pred_check
    _
  $region87: #{ggap_cpi_ablation_forward.1} parent=0 // pred_check_branch
    %2975 = sbr.rel (0) target = $region89
  $region88: #{ggap_cpi_ablation_forward.1} parent=0 // pred_region
    _
  $region89: #{ggap_cpi_ablation_forward.1} parent=0 // pred_fallthru
    _
  // Predicated region
  $region90: #{ggap_cpi_ablation_forward.1} parent=0 // pred_check
    _
  $region91: #{ggap_cpi_ablation_forward.1} parent=0 // pred_check_branch
    %2977 = sbr.rel (0) target = $region93
  $region92: #{ggap_cpi_ablation_forward.1} parent=0 // pred_region
    _
  $region93: #{ggap_cpi_ablation_forward.1} parent=0 // pred_fallthru
    _
  // Predicated region
  $region94: #{ggap_cpi_ablation_forward.1} parent=0 // pred_check
    _
  $region95: #{ggap_cpi_ablation_forward.1} parent=0 // pred_check_branch
    %2979 = sbr.rel (0) target = $region97
  $region96: #{ggap_cpi_ablation_forward.1} parent=0 // pred_region
    _
  $region97: #{ggap_cpi_ablation_forward.1} parent=0 // pred_fallthru
    _
  // Predicated region
  $region98: #{ggap_cpi_ablation_forward.1} parent=0 // pred_check
    _
  $region99: #{ggap_cpi_ablation_forward.1} parent=0 // pred_check_branch
    %2981 = sbr.rel (0) target = $region101
  $region100: #{ggap_cpi_ablation_forward.1} parent=0 // pred_region
    _
  $region101: #{ggap_cpi_ablation_forward.1} parent=0 // pred_fallthru
    _

</llo_original>
